<compile_context>
chip_gen: v6e
topology: v6e:2x2x1
jax: 0.10.0
libtpu: 0.0.40
codegen_flags: <defaults>
</compile_context>

<pallas_src>
import functools

import jax
import jax.numpy as jnp
from jax.experimental import pallas as pl
from jax.experimental.pallas import tpu as pltpu


def _round_up(x, m):
    return (x + m - 1) // m * m


# ----------------------------------------------------------------------------
# Pallas kernel: out(Cp, TM) = W(Cp, K) @ col(K, TM) + b(Cp, 1), fused activation.
# ----------------------------------------------------------------------------
def _matmul_bias_act_kernel(w_ref, col_ref, b_ref, o_ref, *, act):
    acc = jnp.dot(w_ref[...], col_ref[...], preferred_element_type=jnp.float32)
    acc = acc + b_ref[...]                      # (Cp, TM) + (Cp, 1)
    if act == "leaky_relu":
        acc = jnp.where(acc >= 0.0, acc, 0.2 * acc)
    elif act == "sigmoid":
        acc = jax.nn.sigmoid(acc)
    o_ref[...] = acc.astype(o_ref.dtype)


def pallas_conv_matmul(wt, col, b, act, out_dtype):
    """wt: (Cp, K) bf16, col: (K, M) bf16, b: (Cp, 1) f32 -> (Cp, M) out_dtype."""
    Cp, K = wt.shape
    Kc, M = col.shape
    assert K == Kc

    # Tile the lane-dense M axis; pad M up to a lane-aligned multiple of the tile.
    TM = 512
    Mp = _round_up(M, 128)
    if Mp <= TM:
        TM = Mp
    else:
        Mp = _round_up(M, TM)
    if Mp != M:
        col = jnp.pad(col, ((0, 0), (0, Mp - M)))

    grid = (Mp // TM,)
    out_itemsize = jnp.dtype(out_dtype).itemsize
    cost = pl.CostEstimate(
        flops=2 * Cp * K * Mp,
        transcendentals=(Cp * Mp if act == "sigmoid" else 0),
        bytes_accessed=Cp * K * 2 + K * Mp * 2 + Cp * 4 + Cp * Mp * out_itemsize,
    )

    out = pl.pallas_call(
        functools.partial(_matmul_bias_act_kernel, act=act),
        out_shape=jax.ShapeDtypeStruct((Cp, Mp), out_dtype),
        grid=grid,
        in_specs=[
            pl.BlockSpec((Cp, K), lambda i: (0, 0)),   # weight: VMEM-resident across grid
            pl.BlockSpec((K, TM), lambda i: (0, i)),   # col tile: pipelined over M
            pl.BlockSpec((Cp, 1), lambda i: (0, 0)),   # bias: resident
        ],
        out_specs=pl.BlockSpec((Cp, TM), lambda i: (0, i)),
        compiler_params=pltpu.CompilerParams(
            dimension_semantics=("parallel",),          # M-tiles shard across TCs (v7x)
            vmem_limit_bytes=32 * 1024 * 1024,
        ),
        cost_estimate=cost,
    )(wt, col, b)

    if Mp != M:
        out = out[:, :M]
    return out


# ----------------------------------------------------------------------------
# Conv3d as channel-first im2col + Pallas flipped matmul.
# ----------------------------------------------------------------------------
def conv3d_layer_cf(x, layer, out_dtype):
    """x: (Cin_pad, B, T, H, W) bf16 -> (Cout_pad, B, To, Ho, Wo) out_dtype."""
    wt, b = layer["wt"], layer["b"]
    kT, kH, kW = layer["ksize"]
    sT, sH, sW = layer["stride"]
    pT, pH, pW = layer["padding"]
    Cin_pad, B, T, H, W = x.shape

    xp = jnp.pad(x, ((0, 0), (0, 0), (pT, pT), (pH, pH), (pW, pW)))
    Tp, Hp, Wp = T + 2 * pT, H + 2 * pH, W + 2 * pW
    To = (Tp - kT) // sT + 1
    Ho = (Hp - kH) // sH + 1
    Wo = (Wp - kW) // sW + 1

    taps = []
    for dt in range(kT):
        for dh in range(kH):
            for dw in range(kW):
                taps.append(
                    xp[:, :,
                       dt:dt + (To - 1) * sT + 1:sT,
                       dh:dh + (Ho - 1) * sH + 1:sH,
                       dw:dw + (Wo - 1) * sW + 1:sW]
                )
    # (taps, Cin_pad, B, To, Ho, Wo) -> (K, M): K = taps*Cin_pad (multiple of 8),
    # M = B*To*Ho*Wo is the lane-dense axis.
    col = jnp.stack(taps, axis=0)
    K = kT * kH * kW * Cin_pad
    M = B * To * Ho * Wo
    col = col.reshape(K, M)

    out = pallas_conv_matmul(wt, col, b, layer["act"], out_dtype)
    return out.reshape(wt.shape[0], B, To, Ho, Wo)


# ----------------------------------------------------------------------------
# Parameter construction (deterministic, synthetic).
# ----------------------------------------------------------------------------
def _spectral_sigma(wmat, iters=30):
    """Largest singular value via deterministic power iteration."""
    v = jnp.ones((wmat.shape[1],), jnp.float32)
    v = v / jnp.linalg.norm(v)
    for _ in range(iters):
        u = wmat @ v
        u = u / (jnp.linalg.norm(u) + 1e-12)
        v = wmat.T @ u
        v = v / (jnp.linalg.norm(v) + 1e-12)
    return u @ (wmat @ v)


def make_params(key, nf=8, nc_in=5):
    # (Cin, Cout, padding, spectral_norm, activation); kernel (3,5,5), stride (1,2,2)
    cfgs = [
        (nc_in,  nf,     (1, 1, 1), True,  "leaky_relu"),   # conv1: padding=1 -> (1,1,1)
        (nf,     2 * nf, (1, 2, 2), True,  "leaky_relu"),
        (2 * nf, 4 * nf, (1, 2, 2), True,  "leaky_relu"),
        (4 * nf, 4 * nf, (1, 2, 2), True,  "leaky_relu"),
        (4 * nf, 4 * nf, (1, 2, 2), True,  "leaky_relu"),
        (4 * nf, 4 * nf, (1, 2, 2), False, "sigmoid"),       # conv6: no norm/act, sigmoid fused
    ]
    params = []
    cin_pad_prev = _round_up(nc_in, 8)
    for cin, cout, pad, use_sn, act in cfgs:
        key, wk, bk = jax.random.split(key, 3)
        w = 0.05 * jax.random.normal(wk, (3, 5, 5, cin, cout), jnp.float32)
        b = 0.01 * jax.random.normal(bk, (cout,), jnp.float32)
        if use_sn:
            sigma = _spectral_sigma(w.reshape(-1, cout))
            w = w / sigma

        # Pad channels to multiples of 8 ONCE here (sublane-granule); transpose so the
        # kernel sees W^T (Cout_pad, K); cast to bf16 for the MXU.
        cin_pad = cin_pad_prev
        cout_pad = _round_up(cout, 8)
        w_p = jnp.zeros((3, 5, 5, cin_pad, cout_pad), jnp.float32)
        w_p = w_p.at[:, :, :, :cin, :cout].set(w)
        K = 3 * 5 * 5 * cin_pad
        wt = jnp.transpose(w_p.reshape(K, cout_pad)).astype(jnp.bfloat16)   # (Cout_pad, K)
        b_p = jnp.zeros((cout_pad, 1), jnp.float32).at[:cout, 0].set(b)

        params.append(dict(wt=wt, b=b_p, ksize=(3, 5, 5), stride=(1, 2, 2),
                           padding=pad, act=act, cout=cout))
        cin_pad_prev = cout_pad
    return params


# ----------------------------------------------------------------------------
# Full model forward.
# ----------------------------------------------------------------------------
def video_inpainting_model_s(params, imgs, masks, guidances=None):
    """imgs: (B, T, 3, H, W), masks: (B, T, 1, H, W)  (PyTorch layout)."""
    if guidances is None:
        guidances = jnp.zeros_like(masks)
    x = jnp.concatenate([imgs, masks, guidances], axis=2)   # (B, T, 5, H, W)
    B, T, C, H, W = x.shape

    # Discriminator does transpose(1,2) -> (B, C, T, H, W); we go straight to the
    # channel-first working layout (C, B, T, H, W) used by every layer (no per-layer
    # transposes), pad channels to the sublane granule and cast to bf16.
    x = jnp.transpose(x, (2, 0, 1, 3, 4)).astype(jnp.bfloat16)
    cin_pad0 = params[0]["wt"].shape[1] // (3 * 5 * 5)
    if cin_pad0 > C:
        x = jnp.pad(x, ((0, cin_pad0 - C), (0, 0), (0, 0), (0, 0), (0, 0)))

    n_layers = len(params)
    for li, p in enumerate(params):
        out_dtype = jnp.float32 if li == n_layers - 1 else jnp.bfloat16
        x = conv3d_layer_cf(x, p, out_dtype)

    # x: (Cout_pad, B, To, Ho, Wo) -> PyTorch output (after transpose(1,2)): (B, To, C, Ho, Wo)
    x = x[:params[-1]["cout"]]
    return jnp.transpose(x, (1, 2, 0, 3, 4))


if __name__ == "__main__":
    key = jax.random.PRNGKey(0)
    pkey, ikey, mkey = jax.random.split(key, 3)

    nf = 8
    params = make_params(pkey, nf=nf, nc_in=5)

    B, T, H, W = 2, 4, 16, 16
    imgs = jax.random.normal(ikey, (B, T, 3, H, W), jnp.float32)
    masks = (jax.random.uniform(mkey, (B, T, 1, H, W)) > 0.5).astype(jnp.float32)

    fwd = jax.jit(functools.partial(video_inpainting_model_s, params))
    out = fwd(imgs, masks)
    out = jax.block_until_ready(out)

    assert out.shape == (B, T, 4 * nf, 1, 1), out.shape
    assert out.dtype == jnp.float32
    assert bool(jnp.all(jnp.isfinite(out)))
    assert bool(jnp.all((out >= 0.0) & (out <= 1.0)))   # sigmoid range
    print("KERNEL_OK")
</pallas_src>

<mosaic_0001>
module attributes {stable_mosaic.version = 11 : i64} {
  func.func @_matmul_bias_act_kernel(%arg0: i32, %arg1: memref<8x600xbf16, #tpu.memory_space<vmem>>, %arg2: memref<600x512xbf16, #tpu.memory_space<vmem>>, %arg3: memref<8x1xf32, #tpu.memory_space<vmem>>, %arg4: memref<8x512xbf16, #tpu.memory_space<vmem>>) attributes {dimension_semantics = [#tpu.dimension_semantics<parallel>], iteration_bounds = array<i64: 1>, scalar_prefetch = 0 : i64, scratch_operands = 0 : i64, tpu.core_type = #tpu.core_type<tc>, window_params = [{pipeline_mode = #tpu.pipeline_mode<synchronous>, transform_indices = @transform_0, window_bounds = array<i64: 8, 600>}, {transform_indices = @transform_1, window_bounds = array<i64: 600, 512>}, {pipeline_mode = #tpu.pipeline_mode<synchronous>, transform_indices = @transform_2, window_bounds = array<i64: 8, 1>}, {transform_indices = @transform_3, window_bounds = array<i64: 8, 512>}]} {
    %c0 = arith.constant 0 : index
    %c0_0 = arith.constant 0 : index
    %0 = vector.load %arg1[%c0, %c0_0] : memref<8x600xbf16, #tpu.memory_space<vmem>>, vector<8x600xbf16>
    %c0_1 = arith.constant 0 : index
    %c0_2 = arith.constant 0 : index
    %1 = vector.load %arg2[%c0_1, %c0_2] : memref<600x512xbf16, #tpu.memory_space<vmem>>, vector<600x512xbf16>
    %cst = arith.constant dense<0.000000e+00> : vector<8x512xf32>
    %2 = tpu.matmul %0, %1, %cst {dimension_numbers = #tpu.dot_dimension_numbers<[1], [0], [0], [1], [0, 0, 1, 1], [], []>} : vector<8x600xbf16>, vector<600x512xbf16>, vector<8x512xf32> -> vector<8x512xf32>
    %c0_3 = arith.constant 0 : index
    %c0_4 = arith.constant 0 : index
    %3 = vector.load %arg3[%c0_3, %c0_4] : memref<8x1xf32, #tpu.memory_space<vmem>>, vector<8x1xf32>
    %4 = vector.broadcast %3 : vector<8x1xf32> to vector<8x512xf32>
    %5 = arith.addf %2, %4 : vector<8x512xf32>
    %cst_5 = arith.constant 0.000000e+00 : f32
    %6 = vector.broadcast %cst_5 : f32 to vector<8x512xf32>
    %7 = arith.cmpf oge, %5, %6 : vector<8x512xf32>
    %cst_6 = arith.constant 2.000000e-01 : f32
    %8 = vector.broadcast %cst_6 : f32 to vector<8x512xf32>
    %9 = arith.mulf %8, %5 : vector<8x512xf32>
    %10 = arith.select %7, %5, %9 : vector<8x512xi1>, vector<8x512xf32>
    %11 = arith.truncf %10 : vector<8x512xf32> to vector<8x512xbf16>
    %c0_7 = arith.constant 0 : index
    %c0_8 = arith.constant 0 : index
    %12 = vector.load %arg4[%c0_7, %c0_8] : memref<8x512xbf16, #tpu.memory_space<vmem>>, vector<8x512xbf16>
    tpu.vector_store %arg4[%c0_7, %c0_8], %11 {strides = array<i32>} : memref<8x512xbf16, #tpu.memory_space<vmem>>, vector<8x512xbf16>,
    return
  }
  func.func @transform_0(%arg0: i32) -> (i32, i32) {
    %c0_i32 = arith.constant 0 : i32
    %c0_i32_0 = arith.constant 0 : i32
    %c0_i32_1 = arith.constant 0 : i32
    return %c0_i32, %c0_i32_0 : i32, i32
  }
  func.func @transform_1(%arg0: i32) -> (i32, i32) {
    %c0_i32 = arith.constant 0 : i32
    %c0_i32_0 = arith.constant 0 : i32
    return %c0_i32, %arg0 : i32, i32
  }
  func.func @transform_2(%arg0: i32) -> (i32, i32) {
    %c0_i32 = arith.constant 0 : i32
    %c0_i32_0 = arith.constant 0 : i32
    %c0_i32_1 = arith.constant 0 : i32
    return %c0_i32, %c0_i32_0 : i32, i32
  }
  func.func @transform_3(%arg0: i32) -> (i32, i32) {
    %c0_i32 = arith.constant 0 : i32
    %c0_i32_0 = arith.constant 0 : i32
    return %c0_i32, %arg0 : i32, i32
  }
}

module attributes {stable_mosaic.version = 11 : i64} {
  func.func @_matmul_bias_act_kernel(%arg0: i32, %arg1: memref<16x600xbf16, #tpu.memory_space<vmem>>, %arg2: memref<600x128xbf16, #tpu.memory_space<vmem>>, %arg3: memref<16x1xf32, #tpu.memory_space<vmem>>, %arg4: memref<16x128xbf16, #tpu.memory_space<vmem>>) attributes {dimension_semantics = [#tpu.dimension_semantics<parallel>], iteration_bounds = array<i64: 1>, scalar_prefetch = 0 : i64, scratch_operands = 0 : i64, tpu.core_type = #tpu.core_type<tc>, window_params = [{pipeline_mode = #tpu.pipeline_mode<synchronous>, transform_indices = @transform_0, window_bounds = array<i64: 16, 600>}, {transform_indices = @transform_1, window_bounds = array<i64: 600, 128>}, {pipeline_mode = #tpu.pipeline_mode<synchronous>, transform_indices = @transform_2, window_bounds = array<i64: 16, 1>}, {transform_indices = @transform_3, window_bounds = array<i64: 16, 128>}]} {
    %c0 = arith.constant 0 : index
    %c0_0 = arith.constant 0 : index
    %0 = vector.load %arg1[%c0, %c0_0] : memref<16x600xbf16, #tpu.memory_space<vmem>>, vector<16x600xbf16>
    %c0_1 = arith.constant 0 : index
    %c0_2 = arith.constant 0 : index
    %1 = vector.load %arg2[%c0_1, %c0_2] : memref<600x128xbf16, #tpu.memory_space<vmem>>, vector<600x128xbf16>
    %cst = arith.constant dense<0.000000e+00> : vector<16x128xf32>
    %2 = tpu.matmul %0, %1, %cst {dimension_numbers = #tpu.dot_dimension_numbers<[1], [0], [0], [1], [0, 0, 1, 1], [], []>} : vector<16x600xbf16>, vector<600x128xbf16>, vector<16x128xf32> -> vector<16x128xf32>
    %c0_3 = arith.constant 0 : index
    %c0_4 = arith.constant 0 : index
    %3 = vector.load %arg3[%c0_3, %c0_4] : memref<16x1xf32, #tpu.memory_space<vmem>>, vector<16x1xf32>
    %4 = vector.broadcast %3 : vector<16x1xf32> to vector<16x128xf32>
    %5 = arith.addf %2, %4 : vector<16x128xf32>
    %cst_5 = arith.constant 0.000000e+00 : f32
    %6 = vector.broadcast %cst_5 : f32 to vector<16x128xf32>
    %7 = arith.cmpf oge, %5, %6 : vector<16x128xf32>
    %cst_6 = arith.constant 2.000000e-01 : f32
    %8 = vector.broadcast %cst_6 : f32 to vector<16x128xf32>
    %9 = arith.mulf %8, %5 : vector<16x128xf32>
    %10 = arith.select %7, %5, %9 : vector<16x128xi1>, vector<16x128xf32>
    %11 = arith.truncf %10 : vector<16x128xf32> to vector<16x128xbf16>
    %c0_7 = arith.constant 0 : index
    %c0_8 = arith.constant 0 : index
    %12 = vector.load %arg4[%c0_7, %c0_8] : memref<16x128xbf16, #tpu.memory_space<vmem>>, vector<16x128xbf16>
    tpu.vector_store %arg4[%c0_7, %c0_8], %11 {strides = array<i32>} : memref<16x128xbf16, #tpu.memory_space<vmem>>, vector<16x128xbf16>,
    return
  }
  func.func @transform_0(%arg0: i32) -> (i32, i32) {
    %c0_i32 = arith.constant 0 : i32
    %c0_i32_0 = arith.constant 0 : i32
    %c0_i32_1 = arith.constant 0 : i32
    return %c0_i32, %c0_i32_0 : i32, i32
  }
  func.func @transform_1(%arg0: i32) -> (i32, i32) {
    %c0_i32 = arith.constant 0 : i32
    %c0_i32_0 = arith.constant 0 : i32
    return %c0_i32, %arg0 : i32, i32
  }
  func.func @transform_2(%arg0: i32) -> (i32, i32) {
    %c0_i32 = arith.constant 0 : i32
    %c0_i32_0 = arith.constant 0 : i32
    %c0_i32_1 = arith.constant 0 : i32
    return %c0_i32, %c0_i32_0 : i32, i32
  }
  func.func @transform_3(%arg0: i32) -> (i32, i32) {
    %c0_i32 = arith.constant 0 : i32
    %c0_i32_0 = arith.constant 0 : i32
    return %c0_i32, %arg0 : i32, i32
  }
}

module attributes {stable_mosaic.version = 11 : i64} {
  func.func @_matmul_bias_act_kernel(%arg0: i32, %arg1: memref<32x1200xbf16, #tpu.memory_space<vmem>>, %arg2: memref<1200x128xbf16, #tpu.memory_space<vmem>>, %arg3: memref<32x1xf32, #tpu.memory_space<vmem>>, %arg4: memref<32x128xbf16, #tpu.memory_space<vmem>>) attributes {dimension_semantics = [#tpu.dimension_semantics<parallel>], iteration_bounds = array<i64: 1>, scalar_prefetch = 0 : i64, scratch_operands = 0 : i64, tpu.core_type = #tpu.core_type<tc>, window_params = [{pipeline_mode = #tpu.pipeline_mode<synchronous>, transform_indices = @transform_0, window_bounds = array<i64: 32, 1200>}, {transform_indices = @transform_1, window_bounds = array<i64: 1200, 128>}, {pipeline_mode = #tpu.pipeline_mode<synchronous>, transform_indices = @transform_2, window_bounds = array<i64: 32, 1>}, {transform_indices = @transform_3, window_bounds = array<i64: 32, 128>}]} {
    %c0 = arith.constant 0 : index
    %c0_0 = arith.constant 0 : index
    %0 = vector.load %arg1[%c0, %c0_0] : memref<32x1200xbf16, #tpu.memory_space<vmem>>, vector<32x1200xbf16>
    %c0_1 = arith.constant 0 : index
    %c0_2 = arith.constant 0 : index
    %1 = vector.load %arg2[%c0_1, %c0_2] : memref<1200x128xbf16, #tpu.memory_space<vmem>>, vector<1200x128xbf16>
    %cst = arith.constant dense<0.000000e+00> : vector<32x128xf32>
    %2 = tpu.matmul %0, %1, %cst {dimension_numbers = #tpu.dot_dimension_numbers<[1], [0], [0], [1], [0, 0, 1, 1], [], []>} : vector<32x1200xbf16>, vector<1200x128xbf16>, vector<32x128xf32> -> vector<32x128xf32>
    %c0_3 = arith.constant 0 : index
    %c0_4 = arith.constant 0 : index
    %3 = vector.load %arg3[%c0_3, %c0_4] : memref<32x1xf32, #tpu.memory_space<vmem>>, vector<32x1xf32>
    %4 = vector.broadcast %3 : vector<32x1xf32> to vector<32x128xf32>
    %5 = arith.addf %2, %4 : vector<32x128xf32>
    %cst_5 = arith.constant 0.000000e+00 : f32
    %6 = vector.broadcast %cst_5 : f32 to vector<32x128xf32>
    %7 = arith.cmpf oge, %5, %6 : vector<32x128xf32>
    %cst_6 = arith.constant 2.000000e-01 : f32
    %8 = vector.broadcast %cst_6 : f32 to vector<32x128xf32>
    %9 = arith.mulf %8, %5 : vector<32x128xf32>
    %10 = arith.select %7, %5, %9 : vector<32x128xi1>, vector<32x128xf32>
    %11 = arith.truncf %10 : vector<32x128xf32> to vector<32x128xbf16>
    %c0_7 = arith.constant 0 : index
    %c0_8 = arith.constant 0 : index
    %12 = vector.load %arg4[%c0_7, %c0_8] : memref<32x128xbf16, #tpu.memory_space<vmem>>, vector<32x128xbf16>
    tpu.vector_store %arg4[%c0_7, %c0_8], %11 {strides = array<i32>} : memref<32x128xbf16, #tpu.memory_space<vmem>>, vector<32x128xbf16>,
    return
  }
  func.func @transform_0(%arg0: i32) -> (i32, i32) {
    %c0_i32 = arith.constant 0 : i32
    %c0_i32_0 = arith.constant 0 : i32
    %c0_i32_1 = arith.constant 0 : i32
    return %c0_i32, %c0_i32_0 : i32, i32
  }
  func.func @transform_1(%arg0: i32) -> (i32, i32) {
    %c0_i32 = arith.constant 0 : i32
    %c0_i32_0 = arith.constant 0 : i32
    return %c0_i32, %arg0 : i32, i32
  }
  func.func @transform_2(%arg0: i32) -> (i32, i32) {
    %c0_i32 = arith.constant 0 : i32
    %c0_i32_0 = arith.constant 0 : i32
    %c0_i32_1 = arith.constant 0 : i32
    return %c0_i32, %c0_i32_0 : i32, i32
  }
  func.func @transform_3(%arg0: i32) -> (i32, i32) {
    %c0_i32 = arith.constant 0 : i32
    %c0_i32_0 = arith.constant 0 : i32
    return %c0_i32, %arg0 : i32, i32
  }
}

module attributes {stable_mosaic.version = 11 : i64} {
  func.func @_matmul_bias_act_kernel(%arg0: i32, %arg1: memref<32x2400xbf16, #tpu.memory_space<vmem>>, %arg2: memref<2400x128xbf16, #tpu.memory_space<vmem>>, %arg3: memref<32x1xf32, #tpu.memory_space<vmem>>, %arg4: memref<32x128xbf16, #tpu.memory_space<vmem>>) attributes {dimension_semantics = [#tpu.dimension_semantics<parallel>], iteration_bounds = array<i64: 1>, scalar_prefetch = 0 : i64, scratch_operands = 0 : i64, tpu.core_type = #tpu.core_type<tc>, window_params = [{pipeline_mode = #tpu.pipeline_mode<synchronous>, transform_indices = @transform_0, window_bounds = array<i64: 32, 2400>}, {transform_indices = @transform_1, window_bounds = array<i64: 2400, 128>}, {pipeline_mode = #tpu.pipeline_mode<synchronous>, transform_indices = @transform_2, window_bounds = array<i64: 32, 1>}, {transform_indices = @transform_3, window_bounds = array<i64: 32, 128>}]} {
    %c0 = arith.constant 0 : index
    %c0_0 = arith.constant 0 : index
    %0 = vector.load %arg1[%c0, %c0_0] : memref<32x2400xbf16, #tpu.memory_space<vmem>>, vector<32x2400xbf16>
    %c0_1 = arith.constant 0 : index
    %c0_2 = arith.constant 0 : index
    %1 = vector.load %arg2[%c0_1, %c0_2] : memref<2400x128xbf16, #tpu.memory_space<vmem>>, vector<2400x128xbf16>
    %cst = arith.constant dense<0.000000e+00> : vector<32x128xf32>
    %2 = tpu.matmul %0, %1, %cst {dimension_numbers = #tpu.dot_dimension_numbers<[1], [0], [0], [1], [0, 0, 1, 1], [], []>} : vector<32x2400xbf16>, vector<2400x128xbf16>, vector<32x128xf32> -> vector<32x128xf32>
    %c0_3 = arith.constant 0 : index
    %c0_4 = arith.constant 0 : index
    %3 = vector.load %arg3[%c0_3, %c0_4] : memref<32x1xf32, #tpu.memory_space<vmem>>, vector<32x1xf32>
    %4 = vector.broadcast %3 : vector<32x1xf32> to vector<32x128xf32>
    %5 = arith.addf %2, %4 : vector<32x128xf32>
    %cst_5 = arith.constant 0.000000e+00 : f32
    %6 = vector.broadcast %cst_5 : f32 to vector<32x128xf32>
    %7 = arith.cmpf oge, %5, %6 : vector<32x128xf32>
    %cst_6 = arith.constant 2.000000e-01 : f32
    %8 = vector.broadcast %cst_6 : f32 to vector<32x128xf32>
    %9 = arith.mulf %8, %5 : vector<32x128xf32>
    %10 = arith.select %7, %5, %9 : vector<32x128xi1>, vector<32x128xf32>
    %11 = arith.truncf %10 : vector<32x128xf32> to vector<32x128xbf16>
    %c0_7 = arith.constant 0 : index
    %c0_8 = arith.constant 0 : index
    %12 = vector.load %arg4[%c0_7, %c0_8] : memref<32x128xbf16, #tpu.memory_space<vmem>>, vector<32x128xbf16>
    tpu.vector_store %arg4[%c0_7, %c0_8], %11 {strides = array<i32>} : memref<32x128xbf16, #tpu.memory_space<vmem>>, vector<32x128xbf16>,
    return
  }
  func.func @transform_0(%arg0: i32) -> (i32, i32) {
    %c0_i32 = arith.constant 0 : i32
    %c0_i32_0 = arith.constant 0 : i32
    %c0_i32_1 = arith.constant 0 : i32
    return %c0_i32, %c0_i32_0 : i32, i32
  }
  func.func @transform_1(%arg0: i32) -> (i32, i32) {
    %c0_i32 = arith.constant 0 : i32
    %c0_i32_0 = arith.constant 0 : i32
    return %c0_i32, %arg0 : i32, i32
  }
  func.func @transform_2(%arg0: i32) -> (i32, i32) {
    %c0_i32 = arith.constant 0 : i32
    %c0_i32_0 = arith.constant 0 : i32
    %c0_i32_1 = arith.constant 0 : i32
    return %c0_i32, %c0_i32_0 : i32, i32
  }
  func.func @transform_3(%arg0: i32) -> (i32, i32) {
    %c0_i32 = arith.constant 0 : i32
    %c0_i32_0 = arith.constant 0 : i32
    return %c0_i32, %arg0 : i32, i32
  }
}

module attributes {stable_mosaic.version = 11 : i64} {
  func.func @_matmul_bias_act_kernel(%arg0: i32, %arg1: memref<32x2400xbf16, #tpu.memory_space<vmem>>, %arg2: memref<2400x128xbf16, #tpu.memory_space<vmem>>, %arg3: memref<32x1xf32, #tpu.memory_space<vmem>>, %arg4: memref<32x128xf32, #tpu.memory_space<vmem>>) attributes {dimension_semantics = [#tpu.dimension_semantics<parallel>], iteration_bounds = array<i64: 1>, scalar_prefetch = 0 : i64, scratch_operands = 0 : i64, tpu.core_type = #tpu.core_type<tc>, window_params = [{pipeline_mode = #tpu.pipeline_mode<synchronous>, transform_indices = @transform_0, window_bounds = array<i64: 32, 2400>}, {transform_indices = @transform_1, window_bounds = array<i64: 2400, 128>}, {pipeline_mode = #tpu.pipeline_mode<synchronous>, transform_indices = @transform_2, window_bounds = array<i64: 32, 1>}, {transform_indices = @transform_3, window_bounds = array<i64: 32, 128>}]} {
    %c0 = arith.constant 0 : index
    %c0_0 = arith.constant 0 : index
    %0 = vector.load %arg1[%c0, %c0_0] : memref<32x2400xbf16, #tpu.memory_space<vmem>>, vector<32x2400xbf16>
    %c0_1 = arith.constant 0 : index
    %c0_2 = arith.constant 0 : index
    %1 = vector.load %arg2[%c0_1, %c0_2] : memref<2400x128xbf16, #tpu.memory_space<vmem>>, vector<2400x128xbf16>
    %cst = arith.constant dense<0.000000e+00> : vector<32x128xf32>
    %2 = tpu.matmul %0, %1, %cst {dimension_numbers = #tpu.dot_dimension_numbers<[1], [0], [0], [1], [0, 0, 1, 1], [], []>} : vector<32x2400xbf16>, vector<2400x128xbf16>, vector<32x128xf32> -> vector<32x128xf32>
    %c0_3 = arith.constant 0 : index
    %c0_4 = arith.constant 0 : index
    %3 = vector.load %arg3[%c0_3, %c0_4] : memref<32x1xf32, #tpu.memory_space<vmem>>, vector<32x1xf32>
    %4 = vector.broadcast %3 : vector<32x1xf32> to vector<32x128xf32>
    %5 = arith.addf %2, %4 : vector<32x128xf32>
    %6 = arith.negf %5 : vector<32x128xf32>
    %7 = math.exp %6 : vector<32x128xf32>
    %cst_5 = arith.constant 1.000000e+00 : f32
    %8 = vector.broadcast %cst_5 : f32 to vector<32x128xf32>
    %9 = arith.addf %8, %7 : vector<32x128xf32>
    %10 = arith.divf %8, %9 : vector<32x128xf32>
    %c0_6 = arith.constant 0 : index
    %c0_7 = arith.constant 0 : index
    %11 = vector.load %arg4[%c0_6, %c0_7] : memref<32x128xf32, #tpu.memory_space<vmem>>, vector<32x128xf32>
    tpu.vector_store %arg4[%c0_6, %c0_7], %10 {strides = array<i32>} : memref<32x128xf32, #tpu.memory_space<vmem>>, vector<32x128xf32>,
    return
  }
  func.func @transform_0(%arg0: i32) -> (i32, i32) {
    %c0_i32 = arith.constant 0 : i32
    %c0_i32_0 = arith.constant 0 : i32
    %c0_i32_1 = arith.constant 0 : i32
    return %c0_i32, %c0_i32_0 : i32, i32
  }
  func.func @transform_1(%arg0: i32) -> (i32, i32) {
    %c0_i32 = arith.constant 0 : i32
    %c0_i32_0 = arith.constant 0 : i32
    return %c0_i32, %arg0 : i32, i32
  }
  func.func @transform_2(%arg0: i32) -> (i32, i32) {
    %c0_i32 = arith.constant 0 : i32
    %c0_i32_0 = arith.constant 0 : i32
    %c0_i32_1 = arith.constant 0 : i32
    return %c0_i32, %c0_i32_0 : i32, i32
  }
  func.func @transform_3(%arg0: i32) -> (i32, i32) {
    %c0_i32 = arith.constant 0 : i32
    %c0_i32_0 = arith.constant 0 : i32
    return %c0_i32, %arg0 : i32, i32
  }
}

</mosaic_0001>

<llo_original>
// kernel: video_inpainting_model_s.6
$region0: #{video_inpainting_model_s.6}
  #allocation0 [shape = 'u32[]', space=smem, size = 0x4, offset = 0x4, fixed_abs, tag = 'smem constant byte address 0x4 - core index']
  #allocation1 [shape = 'u32[144,128]{1,0:T(1,128)}', space=vmem, size = 0x12000, scoped, tag = 'internal scratch']
  %s0 = inlined_call_operand.vmem [shape: bf16[8,600], index: 0, kind: input, shape index: {}]
  %s1 = inlined_call_operand.vmem [shape: bf16[600,512], index: 1, kind: input, shape index: {}]
  %s2 = inlined_call_operand.vmem [shape: f32[8,1], index: 2, kind: input, shape index: {}]
  %s3 = inlined_call_operand.vmem [shape: bf16[8,512], index: 3, kind: output, shape index: {}]
  %s4 = sld [smem:[#allocation0]]
  $region22: #{video_inpainting_model_s.6} parent=0
    _
  %s6 = ssub.s32 1, %s4
  %s7 = scalar_select 0, %s6, %s4
  // Predicated region
  $region2: #{video_inpainting_model_s.6} parent=0 // pred_check
    _
  $region3: #{video_inpainting_model_s.6} parent=0 // pred_check_branch
    %9 = sbr.rel (0) target = $region5
  $region4: #{video_inpainting_model_s.6} parent=0 // pred_region
    _
  $region5: #{video_inpainting_model_s.6} parent=0 // pred_fallthru
    _
  // Predicated region
  $region6: #{video_inpainting_model_s.6} parent=0 // pred_check
    _
  $region7: #{video_inpainting_model_s.6} parent=0 // pred_check_branch
    %11 = sbr.rel (0) target = $region9
  $region8: #{video_inpainting_model_s.6} parent=0 // pred_region
    _
  $region9: #{video_inpainting_model_s.6} parent=0 // pred_fallthru
    _
  // Predicated region
  $region10: #{video_inpainting_model_s.6} parent=0 // pred_check
    _
  $region11: #{video_inpainting_model_s.6} parent=0 // pred_check_branch
    %13 = sbr.rel (0) target = $region13
  $region12: #{video_inpainting_model_s.6} parent=0 // pred_region
    _
  $region13: #{video_inpainting_model_s.6} parent=0 // pred_fallthru
    _
  %v15 = vld [vmem:[%s0] sm:$0xff]
  %v16 = vld [vmem:[%s0 + $0x8] sm:$0xff]
  %v17 = vld [vmem:[%s0 + $0x10] sm:$0xf]
  %v18 = vld [vmem:[%s1] sm:$0xff]
  %v19 = vld [vmem:[%s1 + $0x8] sm:$0xff]
  %v20 = vld [vmem:[%s1 + $0x10] sm:$0xff]
  %v21 = vld [vmem:[%s1 + $0x18] sm:$0xff]
  %v22 = vld [vmem:[%s1 + $0x20] sm:$0xff]
  %v23 = vld [vmem:[%s1 + $0x28] sm:$0xff]
  %v24 = vld [vmem:[%s1 + $0x30] sm:$0xff]
  %v25 = vld [vmem:[%s1 + $0x38] sm:$0xff]
  %v26 = vld [vmem:[%s1 + $0x40] sm:$0xff]
  %v27 = vld [vmem:[%s1 + $0x48] sm:$0xff]
  %v28 = vld [vmem:[%s1 + $0x50] sm:$0xff]
  %v29 = vld [vmem:[%s1 + $0x58] sm:$0xff]
  %v30 = vld [vmem:[%s1 + $0x60] sm:$0xff]
  %v31 = vld [vmem:[%s1 + $0x68] sm:$0xff]
  %v32 = vld [vmem:[%s1 + $0x70] sm:$0xff]
  %v33 = vld [vmem:[%s1 + $0x78] sm:$0xff]
  %v34 = vld [vmem:[%s1 + $0x80] sm:$0xff]
  %v35 = vld [vmem:[%s1 + $0x88] sm:$0xff]
  %v36 = vld [vmem:[%s1 + $0x90] sm:$0xff]
  %v37 = vld [vmem:[%s1 + $0x98] sm:$0xff]
  %v38 = vld [vmem:[%s1 + $0xa0] sm:$0xff]
  %v39 = vld [vmem:[%s1 + $0xa8] sm:$0xff]
  %v40 = vld [vmem:[%s1 + $0xb0] sm:$0xff]
  %v41 = vld [vmem:[%s1 + $0xb8] sm:$0xff]
  %v42 = vld [vmem:[%s1 + $0xc0] sm:$0xff]
  %v43 = vld [vmem:[%s1 + $0xc8] sm:$0xff]
  %v44 = vld [vmem:[%s1 + $0xd0] sm:$0xff]
  %v45 = vld [vmem:[%s1 + $0xd8] sm:$0xff]
  %v46 = vld [vmem:[%s1 + $0xe0] sm:$0xff]
  %v47 = vld [vmem:[%s1 + $0xe8] sm:$0xff]
  %v48 = vld [vmem:[%s1 + $0xf0] sm:$0xff]
  %v49 = vld [vmem:[%s1 + $0xf8] sm:$0xff]
  %v50 = vld [vmem:[%s1 + $0x100] sm:$0xff]
  %v51 = vld [vmem:[%s1 + $0x108] sm:$0xff]
  %v52 = vld [vmem:[%s1 + $0x110] sm:$0xff]
  %v53 = vld [vmem:[%s1 + $0x118] sm:$0xff]
  %v54 = vld [vmem:[%s1 + $0x120] sm:$0xff]
  %v55 = vld [vmem:[%s1 + $0x128] sm:$0xff]
  %v56 = vld [vmem:[%s1 + $0x130] sm:$0xff]
  %v57 = vld [vmem:[%s1 + $0x138] sm:$0xff]
  %v58 = vld [vmem:[%s1 + $0x140] sm:$0xff]
  %v59 = vld [vmem:[%s1 + $0x148] sm:$0xff]
  %v60 = vld [vmem:[%s1 + $0x150] sm:$0xff]
  %v61 = vld [vmem:[%s1 + $0x158] sm:$0xff]
  %v62 = vld [vmem:[%s1 + $0x160] sm:$0xff]
  %v63 = vld [vmem:[%s1 + $0x168] sm:$0xff]
  %v64 = vld [vmem:[%s1 + $0x170] sm:$0xff]
  %v65 = vld [vmem:[%s1 + $0x178] sm:$0xff]
  %v66 = vld [vmem:[%s1 + $0x180] sm:$0xff]
  %v67 = vld [vmem:[%s1 + $0x188] sm:$0xff]
  %v68 = vld [vmem:[%s1 + $0x190] sm:$0xff]
  %v69 = vld [vmem:[%s1 + $0x198] sm:$0xff]
  %v70 = vld [vmem:[%s1 + $0x1a0] sm:$0xff]
  %v71 = vld [vmem:[%s1 + $0x1a8] sm:$0xff]
  %v72 = vld [vmem:[%s1 + $0x1b0] sm:$0xff]
  %v73 = vld [vmem:[%s1 + $0x1b8] sm:$0xff]
  %v74 = vld [vmem:[%s1 + $0x1c0] sm:$0xff]
  %v75 = vld [vmem:[%s1 + $0x1c8] sm:$0xff]
  %v76 = vld [vmem:[%s1 + $0x1d0] sm:$0xff]
  %v77 = vld [vmem:[%s1 + $0x1d8] sm:$0xff]
  %v78 = vld [vmem:[%s1 + $0x1e0] sm:$0xff]
  %v79 = vld [vmem:[%s1 + $0x1e8] sm:$0xff]
  %v80 = vld [vmem:[%s1 + $0x1f0] sm:$0xff]
  %v81 = vld [vmem:[%s1 + $0x1f8] sm:$0xff]
  %v82 = vld [vmem:[%s1 + $0x200] sm:$0xff]
  %v83 = vld [vmem:[%s1 + $0x208] sm:$0xff]
  %v84 = vld [vmem:[%s1 + $0x210] sm:$0xff]
  %v85 = vld [vmem:[%s1 + $0x218] sm:$0xff]
  %v86 = vld [vmem:[%s1 + $0x220] sm:$0xff]
  %v87 = vld [vmem:[%s1 + $0x228] sm:$0xff]
  %v88 = vld [vmem:[%s1 + $0x230] sm:$0xff]
  %v89 = vld [vmem:[%s1 + $0x238] sm:$0xff]
  %v90 = vld [vmem:[%s1 + $0x240] sm:$0xff]
  %v91 = vld [vmem:[%s1 + $0x248] sm:$0xff]
  %v92 = vld [vmem:[%s1 + $0x250] sm:$0xff]
  %v93 = vld [vmem:[%s1 + $0x258] sm:$0xff]
  %v94 = vld [vmem:[%s1 + $0x260] sm:$0xff]
  %v95 = vld [vmem:[%s1 + $0x268] sm:$0xff]
  %v96 = vld [vmem:[%s1 + $0x270] sm:$0xff]
  %v97 = vld [vmem:[%s1 + $0x278] sm:$0xff]
  %v98 = vld [vmem:[%s1 + $0x280] sm:$0xff]
  %v99 = vld [vmem:[%s1 + $0x288] sm:$0xff]
  %v100 = vld [vmem:[%s1 + $0x290] sm:$0xff]
  %v101 = vld [vmem:[%s1 + $0x298] sm:$0xff]
  %v102 = vld [vmem:[%s1 + $0x2a0] sm:$0xff]
  %v103 = vld [vmem:[%s1 + $0x2a8] sm:$0xff]
  %v104 = vld [vmem:[%s1 + $0x2b0] sm:$0xff]
  %v105 = vld [vmem:[%s1 + $0x2b8] sm:$0xff]
  %v106 = vld [vmem:[%s1 + $0x2c0] sm:$0xff]
  %v107 = vld [vmem:[%s1 + $0x2c8] sm:$0xff]
  %v108 = vld [vmem:[%s1 + $0x2d0] sm:$0xff]
  %v109 = vld [vmem:[%s1 + $0x2d8] sm:$0xff]
  %v110 = vld [vmem:[%s1 + $0x2e0] sm:$0xff]
  %v111 = vld [vmem:[%s1 + $0x2e8] sm:$0xff]
  %v112 = vld [vmem:[%s1 + $0x2f0] sm:$0xff]
  %v113 = vld [vmem:[%s1 + $0x2f8] sm:$0xff]
  %v114 = vld [vmem:[%s1 + $0x300] sm:$0xff]
  %v115 = vld [vmem:[%s1 + $0x308] sm:$0xff]
  %v116 = vld [vmem:[%s1 + $0x310] sm:$0xff]
  %v117 = vld [vmem:[%s1 + $0x318] sm:$0xff]
  %v118 = vld [vmem:[%s1 + $0x320] sm:$0xff]
  %v119 = vld [vmem:[%s1 + $0x328] sm:$0xff]
  %v120 = vld [vmem:[%s1 + $0x330] sm:$0xff]
  %v121 = vld [vmem:[%s1 + $0x338] sm:$0xff]
  %v122 = vld [vmem:[%s1 + $0x340] sm:$0xff]
  %v123 = vld [vmem:[%s1 + $0x348] sm:$0xff]
  %v124 = vld [vmem:[%s1 + $0x350] sm:$0xff]
  %v125 = vld [vmem:[%s1 + $0x358] sm:$0xff]
  %v126 = vld [vmem:[%s1 + $0x360] sm:$0xff]
  %v127 = vld [vmem:[%s1 + $0x368] sm:$0xff]
  %v128 = vld [vmem:[%s1 + $0x370] sm:$0xff]
  %v129 = vld [vmem:[%s1 + $0x378] sm:$0xff]
  %v130 = vld [vmem:[%s1 + $0x380] sm:$0xff]
  %v131 = vld [vmem:[%s1 + $0x388] sm:$0xff]
  %v132 = vld [vmem:[%s1 + $0x390] sm:$0xff]
  %v133 = vld [vmem:[%s1 + $0x398] sm:$0xff]
  %v134 = vld [vmem:[%s1 + $0x3a0] sm:$0xff]
  %v135 = vld [vmem:[%s1 + $0x3a8] sm:$0xff]
  %v136 = vld [vmem:[%s1 + $0x3b0] sm:$0xff]
  %v137 = vld [vmem:[%s1 + $0x3b8] sm:$0xff]
  %v138 = vld [vmem:[%s1 + $0x3c0] sm:$0xff]
  %v139 = vld [vmem:[%s1 + $0x3c8] sm:$0xff]
  %v140 = vld [vmem:[%s1 + $0x3d0] sm:$0xff]
  %v141 = vld [vmem:[%s1 + $0x3d8] sm:$0xff]
  %v142 = vld [vmem:[%s1 + $0x3e0] sm:$0xff]
  %v143 = vld [vmem:[%s1 + $0x3e8] sm:$0xff]
  %v144 = vld [vmem:[%s1 + $0x3f0] sm:$0xff]
  %v145 = vld [vmem:[%s1 + $0x3f8] sm:$0xff]
  %v146 = vld [vmem:[%s1 + $0x400] sm:$0xff]
  %v147 = vld [vmem:[%s1 + $0x408] sm:$0xff]
  %v148 = vld [vmem:[%s1 + $0x410] sm:$0xff]
  %v149 = vld [vmem:[%s1 + $0x418] sm:$0xff]
  %v150 = vld [vmem:[%s1 + $0x420] sm:$0xff]
  %v151 = vld [vmem:[%s1 + $0x428] sm:$0xff]
  %v152 = vld [vmem:[%s1 + $0x430] sm:$0xff]
  %v153 = vld [vmem:[%s1 + $0x438] sm:$0xff]
  %v154 = vld [vmem:[%s1 + $0x440] sm:$0xff]
  %v155 = vld [vmem:[%s1 + $0x448] sm:$0xff]
  %v156 = vld [vmem:[%s1 + $0x450] sm:$0xff]
  %v157 = vld [vmem:[%s1 + $0x458] sm:$0xff]
  %v158 = vld [vmem:[%s1 + $0x460] sm:$0xff]
  %v159 = vld [vmem:[%s1 + $0x468] sm:$0xff]
  %v160 = vld [vmem:[%s1 + $0x470] sm:$0xff]
  %v161 = vld [vmem:[%s1 + $0x478] sm:$0xff]
  %v162 = vld [vmem:[%s1 + $0x480] sm:$0xff]
  %v163 = vld [vmem:[%s1 + $0x488] sm:$0xff]
  %v164 = vld [vmem:[%s1 + $0x490] sm:$0xff]
  %v165 = vld [vmem:[%s1 + $0x498] sm:$0xff]
  %v166 = vld [vmem:[%s1 + $0x4a0] sm:$0xff]
  %v167 = vld [vmem:[%s1 + $0x4a8] sm:$0xff]
  %v168 = vld [vmem:[%s2] sm:$0xff]
  %170 = vset.pattern.permute.xlu0 0
  %171 = vperm.xlu0 %170, %v168
  %v172 = vpop.permute.xlu0 %171
  %v177 = vunpack.c.l.b16 %v15
  %v178 = vunpack.c.h.b16 %v15
  %v179 = vunpack.c.l.b16 %v16
  %v180 = vunpack.c.h.b16 %v16
  %v181 = vunpack.c.l.b16 %v17
  %v182 = vpack.c.b16 %v177, %v177
  %v183 = vpack.c.b16 %v178, %v178
  %v184 = vpack.c.b16 %v179, %v179
  %v185 = vpack.c.b16 %v180, %v180
  %v186 = vpack.c.b16 %v181, %v181
  %v341 = vunpack.c.l.b16 %v18
  %v342 = vunpack.c.h.b16 %v18
  %v343 = vunpack.c.l.b16 %v19
  %v344 = vunpack.c.h.b16 %v19
  %v345 = vunpack.c.l.b16 %v20
  %v346 = vunpack.c.h.b16 %v20
  %v347 = vunpack.c.l.b16 %v21
  %v348 = vunpack.c.h.b16 %v21
  %v349 = vunpack.c.l.b16 %v22
  %v350 = vunpack.c.h.b16 %v22
  %v351 = vunpack.c.l.b16 %v23
  %v352 = vunpack.c.h.b16 %v23
  %v353 = vunpack.c.l.b16 %v24
  %v354 = vunpack.c.h.b16 %v24
  %v355 = vunpack.c.l.b16 %v25
  %v356 = vunpack.c.h.b16 %v25
  %v357 = vunpack.c.l.b16 %v26
  %v358 = vunpack.c.h.b16 %v26
  %v359 = vunpack.c.l.b16 %v27
  %v360 = vunpack.c.h.b16 %v27
  %v361 = vunpack.c.l.b16 %v28
  %v362 = vunpack.c.h.b16 %v28
  %v363 = vunpack.c.l.b16 %v29
  %v364 = vunpack.c.h.b16 %v29
  %v365 = vunpack.c.l.b16 %v30
  %v366 = vunpack.c.h.b16 %v30
  %v367 = vunpack.c.l.b16 %v31
  %v368 = vunpack.c.h.b16 %v31
  %v369 = vunpack.c.l.b16 %v32
  %v370 = vunpack.c.h.b16 %v32
  %v371 = vunpack.c.l.b16 %v33
  %v372 = vunpack.c.h.b16 %v33
  %v373 = vunpack.c.l.b16 %v34
  %v374 = vunpack.c.h.b16 %v34
  %v375 = vunpack.c.l.b16 %v35
  %v376 = vunpack.c.h.b16 %v35
  %v377 = vunpack.c.l.b16 %v36
  %v378 = vunpack.c.h.b16 %v36
  %v379 = vunpack.c.l.b16 %v37
  %v380 = vunpack.c.h.b16 %v37
  %v381 = vunpack.c.l.b16 %v38
  %v382 = vunpack.c.h.b16 %v38
  %v383 = vunpack.c.l.b16 %v39
  %v384 = vunpack.c.h.b16 %v39
  %v385 = vunpack.c.l.b16 %v40
  %v386 = vunpack.c.h.b16 %v40
  %v387 = vunpack.c.l.b16 %v41
  %v388 = vunpack.c.h.b16 %v41
  %v389 = vunpack.c.l.b16 %v42
  %v390 = vunpack.c.h.b16 %v42
  %v391 = vunpack.c.l.b16 %v43
  %v392 = vunpack.c.h.b16 %v43
  %v393 = vunpack.c.l.b16 %v44
  %v394 = vunpack.c.h.b16 %v44
  %v395 = vunpack.c.l.b16 %v45
  %v396 = vunpack.c.h.b16 %v45
  %v397 = vunpack.c.l.b16 %v46
  %v398 = vunpack.c.h.b16 %v46
  %v399 = vunpack.c.l.b16 %v47
  %v400 = vunpack.c.h.b16 %v47
  %v401 = vunpack.c.l.b16 %v48
  %v402 = vunpack.c.h.b16 %v48
  %v403 = vunpack.c.l.b16 %v49
  %v404 = vunpack.c.h.b16 %v49
  %v405 = vunpack.c.l.b16 %v50
  %v406 = vunpack.c.h.b16 %v50
  %v407 = vunpack.c.l.b16 %v51
  %v408 = vunpack.c.h.b16 %v51
  %v409 = vunpack.c.l.b16 %v52
  %v410 = vunpack.c.h.b16 %v52
  %v411 = vunpack.c.l.b16 %v53
  %v412 = vunpack.c.h.b16 %v53
  %v413 = vunpack.c.l.b16 %v54
  %v414 = vunpack.c.h.b16 %v54
  %v415 = vunpack.c.l.b16 %v55
  %v416 = vunpack.c.h.b16 %v55
  %v417 = vunpack.c.l.b16 %v56
  %v418 = vunpack.c.h.b16 %v56
  %v419 = vunpack.c.l.b16 %v57
  %v420 = vunpack.c.h.b16 %v57
  %v421 = vunpack.c.l.b16 %v58
  %v422 = vunpack.c.h.b16 %v58
  %v423 = vunpack.c.l.b16 %v59
  %v424 = vunpack.c.h.b16 %v59
  %v425 = vunpack.c.l.b16 %v60
  %v426 = vunpack.c.h.b16 %v60
  %v427 = vunpack.c.l.b16 %v61
  %v428 = vunpack.c.h.b16 %v61
  %v429 = vunpack.c.l.b16 %v62
  %v430 = vunpack.c.h.b16 %v62
  %v431 = vunpack.c.l.b16 %v63
  %v432 = vunpack.c.h.b16 %v63
  %v433 = vunpack.c.l.b16 %v64
  %v434 = vunpack.c.h.b16 %v64
  %v435 = vunpack.c.l.b16 %v65
  %v436 = vunpack.c.h.b16 %v65
  %v437 = vunpack.c.l.b16 %v66
  %v438 = vunpack.c.h.b16 %v66
  %v439 = vunpack.c.l.b16 %v67
  %v440 = vunpack.c.h.b16 %v67
  %v441 = vunpack.c.l.b16 %v68
  %v442 = vunpack.c.h.b16 %v68
  %v443 = vunpack.c.l.b16 %v69
  %v444 = vunpack.c.h.b16 %v69
  %v445 = vunpack.c.l.b16 %v70
  %v446 = vunpack.c.h.b16 %v70
  %v447 = vunpack.c.l.b16 %v71
  %v448 = vunpack.c.h.b16 %v71
  %v449 = vunpack.c.l.b16 %v72
  %v450 = vunpack.c.h.b16 %v72
  %v451 = vunpack.c.l.b16 %v73
  %v452 = vunpack.c.h.b16 %v73
  %v453 = vunpack.c.l.b16 %v74
  %v454 = vunpack.c.h.b16 %v74
  %v455 = vunpack.c.l.b16 %v75
  %v456 = vunpack.c.h.b16 %v75
  %v457 = vunpack.c.l.b16 %v76
  %v458 = vunpack.c.h.b16 %v76
  %v459 = vunpack.c.l.b16 %v77
  %v460 = vunpack.c.h.b16 %v77
  %v461 = vunpack.c.l.b16 %v78
  %v462 = vunpack.c.h.b16 %v78
  %v463 = vunpack.c.l.b16 %v79
  %v464 = vunpack.c.h.b16 %v79
  %v465 = vunpack.c.l.b16 %v80
  %v466 = vunpack.c.h.b16 %v80
  %v467 = vunpack.c.l.b16 %v81
  %v468 = vunpack.c.h.b16 %v81
  %v469 = vunpack.c.l.b16 %v82
  %v470 = vunpack.c.h.b16 %v82
  %v471 = vunpack.c.l.b16 %v83
  %v472 = vunpack.c.h.b16 %v83
  %v473 = vunpack.c.l.b16 %v84
  %v474 = vunpack.c.h.b16 %v84
  %v475 = vunpack.c.l.b16 %v85
  %v476 = vunpack.c.h.b16 %v85
  %v477 = vunpack.c.l.b16 %v86
  %v478 = vunpack.c.h.b16 %v86
  %v479 = vunpack.c.l.b16 %v87
  %v480 = vunpack.c.h.b16 %v87
  %v481 = vunpack.c.l.b16 %v88
  %v482 = vunpack.c.h.b16 %v88
  %v483 = vunpack.c.l.b16 %v89
  %v484 = vunpack.c.h.b16 %v89
  %v485 = vunpack.c.l.b16 %v90
  %v486 = vunpack.c.h.b16 %v90
  %v487 = vunpack.c.l.b16 %v91
  %v488 = vunpack.c.h.b16 %v91
  %v489 = vunpack.c.l.b16 %v92
  %v490 = vunpack.c.h.b16 %v92
  %v491 = vunpack.c.l.b16 %v93
  %v492 = vunpack.c.h.b16 %v93
  %v493 = vunpack.c.l.b16 %v94
  %v494 = vunpack.c.h.b16 %v94
  %v495 = vunpack.c.l.b16 %v95
  %v496 = vunpack.c.h.b16 %v95
  %v497 = vunpack.c.l.b16 %v96
  %v498 = vunpack.c.h.b16 %v96
  %v499 = vunpack.c.l.b16 %v97
  %v500 = vunpack.c.h.b16 %v97
  %v501 = vunpack.c.l.b16 %v98
  %v502 = vunpack.c.h.b16 %v98
  %v503 = vunpack.c.l.b16 %v99
  %v504 = vunpack.c.h.b16 %v99
  %v505 = vunpack.c.l.b16 %v100
  %v506 = vunpack.c.h.b16 %v100
  %v507 = vunpack.c.l.b16 %v101
  %v508 = vunpack.c.h.b16 %v101
  %v509 = vunpack.c.l.b16 %v102
  %v510 = vunpack.c.h.b16 %v102
  %v511 = vunpack.c.l.b16 %v103
  %v512 = vunpack.c.h.b16 %v103
  %v513 = vunpack.c.l.b16 %v104
  %v514 = vunpack.c.h.b16 %v104
  %v515 = vunpack.c.l.b16 %v105
  %v516 = vunpack.c.h.b16 %v105
  %v517 = vunpack.c.l.b16 %v106
  %v518 = vunpack.c.h.b16 %v106
  %v519 = vunpack.c.l.b16 %v107
  %v520 = vunpack.c.h.b16 %v107
  %v521 = vunpack.c.l.b16 %v108
  %v522 = vunpack.c.h.b16 %v108
  %v523 = vunpack.c.l.b16 %v109
  %v524 = vunpack.c.h.b16 %v109
  %v525 = vunpack.c.l.b16 %v110
  %v526 = vunpack.c.h.b16 %v110
  %v527 = vunpack.c.l.b16 %v111
  %v528 = vunpack.c.h.b16 %v111
  %v529 = vunpack.c.l.b16 %v112
  %v530 = vunpack.c.h.b16 %v112
  %v531 = vunpack.c.l.b16 %v113
  %v532 = vunpack.c.h.b16 %v113
  %v533 = vunpack.c.l.b16 %v114
  %v534 = vunpack.c.h.b16 %v114
  %v535 = vunpack.c.l.b16 %v115
  %v536 = vunpack.c.h.b16 %v115
  %v537 = vunpack.c.l.b16 %v116
  %v538 = vunpack.c.h.b16 %v116
  %v539 = vunpack.c.l.b16 %v117
  %v540 = vunpack.c.h.b16 %v117
  %v541 = vunpack.c.l.b16 %v118
  %v542 = vunpack.c.h.b16 %v118
  %v543 = vunpack.c.l.b16 %v119
  %v544 = vunpack.c.h.b16 %v119
  %v545 = vunpack.c.l.b16 %v120
  %v546 = vunpack.c.h.b16 %v120
  %v547 = vunpack.c.l.b16 %v121
  %v548 = vunpack.c.h.b16 %v121
  %v549 = vunpack.c.l.b16 %v122
  %v550 = vunpack.c.h.b16 %v122
  %v551 = vunpack.c.l.b16 %v123
  %v552 = vunpack.c.h.b16 %v123
  %v553 = vunpack.c.l.b16 %v124
  %v554 = vunpack.c.h.b16 %v124
  %v555 = vunpack.c.l.b16 %v125
  %v556 = vunpack.c.h.b16 %v125
  %v557 = vunpack.c.l.b16 %v126
  %v558 = vunpack.c.h.b16 %v126
  %v559 = vunpack.c.l.b16 %v127
  %v560 = vunpack.c.h.b16 %v127
  %v561 = vunpack.c.l.b16 %v128
  %v562 = vunpack.c.h.b16 %v128
  %v563 = vunpack.c.l.b16 %v129
  %v564 = vunpack.c.h.b16 %v129
  %v565 = vunpack.c.l.b16 %v130
  %v566 = vunpack.c.h.b16 %v130
  %v567 = vunpack.c.l.b16 %v131
  %v568 = vunpack.c.h.b16 %v131
  %v569 = vunpack.c.l.b16 %v132
  %v570 = vunpack.c.h.b16 %v132
  %v571 = vunpack.c.l.b16 %v133
  %v572 = vunpack.c.h.b16 %v133
  %v573 = vunpack.c.l.b16 %v134
  %v574 = vunpack.c.h.b16 %v134
  %v575 = vunpack.c.l.b16 %v135
  %v576 = vunpack.c.h.b16 %v135
  %v577 = vunpack.c.l.b16 %v136
  %v578 = vunpack.c.h.b16 %v136
  %v579 = vunpack.c.l.b16 %v137
  %v580 = vunpack.c.h.b16 %v137
  %v581 = vunpack.c.l.b16 %v138
  %v582 = vunpack.c.h.b16 %v138
  %v583 = vunpack.c.l.b16 %v139
  %v584 = vunpack.c.h.b16 %v139
  %v585 = vunpack.c.l.b16 %v140
  %v586 = vunpack.c.h.b16 %v140
  %v587 = vunpack.c.l.b16 %v141
  %v588 = vunpack.c.h.b16 %v141
  %v589 = vunpack.c.l.b16 %v142
  %v590 = vunpack.c.h.b16 %v142
  %v591 = vunpack.c.l.b16 %v143
  %v592 = vunpack.c.h.b16 %v143
  %v593 = vunpack.c.l.b16 %v144
  %v594 = vunpack.c.h.b16 %v144
  %v595 = vunpack.c.l.b16 %v145
  %v596 = vunpack.c.h.b16 %v145
  %v597 = vunpack.c.l.b16 %v146
  %v598 = vunpack.c.h.b16 %v146
  %v599 = vunpack.c.l.b16 %v147
  %v600 = vunpack.c.h.b16 %v147
  %v601 = vunpack.c.l.b16 %v148
  %v602 = vunpack.c.h.b16 %v148
  %v603 = vunpack.c.l.b16 %v149
  %v604 = vunpack.c.h.b16 %v149
  %v605 = vunpack.c.l.b16 %v150
  %v606 = vunpack.c.h.b16 %v150
  %v607 = vunpack.c.l.b16 %v151
  %v608 = vunpack.c.h.b16 %v151
  %v609 = vunpack.c.l.b16 %v152
  %v610 = vunpack.c.h.b16 %v152
  %v611 = vunpack.c.l.b16 %v153
  %v612 = vunpack.c.h.b16 %v153
  %v613 = vunpack.c.l.b16 %v154
  %v614 = vunpack.c.h.b16 %v154
  %v615 = vunpack.c.l.b16 %v155
  %v616 = vunpack.c.h.b16 %v155
  %v617 = vunpack.c.l.b16 %v156
  %v618 = vunpack.c.h.b16 %v156
  %v619 = vunpack.c.l.b16 %v157
  %v620 = vunpack.c.h.b16 %v157
  %v621 = vunpack.c.l.b16 %v158
  %v622 = vunpack.c.h.b16 %v158
  %v623 = vunpack.c.l.b16 %v159
  %v624 = vunpack.c.h.b16 %v159
  %v625 = vunpack.c.l.b16 %v160
  %v626 = vunpack.c.h.b16 %v160
  %v627 = vunpack.c.l.b16 %v161
  %v628 = vunpack.c.h.b16 %v161
  %v629 = vunpack.c.l.b16 %v162
  %v630 = vunpack.c.h.b16 %v162
  %v631 = vunpack.c.l.b16 %v163
  %v632 = vunpack.c.h.b16 %v163
  %v633 = vunpack.c.l.b16 %v164
  %v634 = vunpack.c.h.b16 %v164
  %v635 = vunpack.c.l.b16 %v165
  %v636 = vunpack.c.h.b16 %v165
  %v637 = vunpack.c.l.b16 %v166
  %v638 = vunpack.c.h.b16 %v166
  %v639 = vunpack.c.l.b16 %v167
  %v640 = vunpack.c.h.b16 %v167
  %v641 = vpack.c.b16 %v345, %v341
  %v642 = vpack.c.b16 %v346, %v342
  %v643 = vpack.c.b16 %v347, %v343
  %v644 = vpack.c.b16 %v348, %v344
  %v645 = vpack.c.b16 %v353, %v349
  %v646 = vpack.c.b16 %v354, %v350
  %v647 = vpack.c.b16 %v355, %v351
  %v648 = vpack.c.b16 %v356, %v352
  %v649 = vpack.c.b16 %v361, %v357
  %v650 = vpack.c.b16 %v362, %v358
  %v651 = vpack.c.b16 %v363, %v359
  %v652 = vpack.c.b16 %v364, %v360
  %v653 = vpack.c.b16 %v369, %v365
  %v654 = vpack.c.b16 %v370, %v366
  %v655 = vpack.c.b16 %v371, %v367
  %v656 = vpack.c.b16 %v372, %v368
  %v657 = vpack.c.b16 %v377, %v373
  %v658 = vpack.c.b16 %v378, %v374
  %v659 = vpack.c.b16 %v379, %v375
  %v660 = vpack.c.b16 %v380, %v376
  %v661 = vpack.c.b16 %v385, %v381
  %v662 = vpack.c.b16 %v386, %v382
  %v663 = vpack.c.b16 %v387, %v383
  %v664 = vpack.c.b16 %v388, %v384
  %v665 = vpack.c.b16 %v393, %v389
  %v666 = vpack.c.b16 %v394, %v390
  %v667 = vpack.c.b16 %v395, %v391
  %v668 = vpack.c.b16 %v396, %v392
  %v669 = vpack.c.b16 %v401, %v397
  %v670 = vpack.c.b16 %v402, %v398
  %v671 = vpack.c.b16 %v403, %v399
  %v672 = vpack.c.b16 %v404, %v400
  %v673 = vpack.c.b16 %v409, %v405
  %v674 = vpack.c.b16 %v410, %v406
  %v675 = vpack.c.b16 %v411, %v407
  %v676 = vpack.c.b16 %v412, %v408
  %v677 = vpack.c.b16 %v417, %v413
  %v678 = vpack.c.b16 %v418, %v414
  %v679 = vpack.c.b16 %v419, %v415
  %v680 = vpack.c.b16 %v420, %v416
  %v681 = vpack.c.b16 %v425, %v421
  %v682 = vpack.c.b16 %v426, %v422
  %v683 = vpack.c.b16 %v427, %v423
  %v684 = vpack.c.b16 %v428, %v424
  %v685 = vpack.c.b16 %v433, %v429
  %v686 = vpack.c.b16 %v434, %v430
  %v687 = vpack.c.b16 %v435, %v431
  %v688 = vpack.c.b16 %v436, %v432
  %v689 = vpack.c.b16 %v441, %v437
  %v690 = vpack.c.b16 %v442, %v438
  %v691 = vpack.c.b16 %v443, %v439
  %v692 = vpack.c.b16 %v444, %v440
  %v693 = vpack.c.b16 %v449, %v445
  %v694 = vpack.c.b16 %v450, %v446
  %v695 = vpack.c.b16 %v451, %v447
  %v696 = vpack.c.b16 %v452, %v448
  %v697 = vpack.c.b16 %v457, %v453
  %v698 = vpack.c.b16 %v458, %v454
  %v699 = vpack.c.b16 %v459, %v455
  %v700 = vpack.c.b16 %v460, %v456
  %v701 = vpack.c.b16 %v465, %v461
  %v702 = vpack.c.b16 %v466, %v462
  %v703 = vpack.c.b16 %v467, %v463
  %v704 = vpack.c.b16 %v468, %v464
  %v705 = vpack.c.b16 %v473, %v469
  %v706 = vpack.c.b16 %v474, %v470
  %v707 = vpack.c.b16 %v475, %v471
  %v708 = vpack.c.b16 %v476, %v472
  %v709 = vpack.c.b16 %v481, %v477
  %v710 = vpack.c.b16 %v482, %v478
  %v711 = vpack.c.b16 %v483, %v479
  %v712 = vpack.c.b16 %v484, %v480
  %v713 = vpack.c.b16 %v489, %v485
  %v714 = vpack.c.b16 %v490, %v486
  %v715 = vpack.c.b16 %v491, %v487
  %v716 = vpack.c.b16 %v492, %v488
  %v717 = vpack.c.b16 %v497, %v493
  %v718 = vpack.c.b16 %v498, %v494
  %v719 = vpack.c.b16 %v499, %v495
  %v720 = vpack.c.b16 %v500, %v496
  %v721 = vpack.c.b16 %v505, %v501
  %v722 = vpack.c.b16 %v506, %v502
  %v723 = vpack.c.b16 %v507, %v503
  %v724 = vpack.c.b16 %v508, %v504
  %v725 = vpack.c.b16 %v513, %v509
  %v726 = vpack.c.b16 %v514, %v510
  %v727 = vpack.c.b16 %v515, %v511
  %v728 = vpack.c.b16 %v516, %v512
  %v729 = vpack.c.b16 %v521, %v517
  %v730 = vpack.c.b16 %v522, %v518
  %v731 = vpack.c.b16 %v523, %v519
  %v732 = vpack.c.b16 %v524, %v520
  %v733 = vpack.c.b16 %v529, %v525
  %v734 = vpack.c.b16 %v530, %v526
  %v735 = vpack.c.b16 %v531, %v527
  %v736 = vpack.c.b16 %v532, %v528
  %v737 = vpack.c.b16 %v537, %v533
  %v738 = vpack.c.b16 %v538, %v534
  %v739 = vpack.c.b16 %v539, %v535
  %v740 = vpack.c.b16 %v540, %v536
  %v741 = vpack.c.b16 %v545, %v541
  %v742 = vpack.c.b16 %v546, %v542
  %v743 = vpack.c.b16 %v547, %v543
  %v744 = vpack.c.b16 %v548, %v544
  %v745 = vpack.c.b16 %v553, %v549
  %v746 = vpack.c.b16 %v554, %v550
  %v747 = vpack.c.b16 %v555, %v551
  %v748 = vpack.c.b16 %v556, %v552
  %v749 = vpack.c.b16 %v561, %v557
  %v750 = vpack.c.b16 %v562, %v558
  %v751 = vpack.c.b16 %v563, %v559
  %v752 = vpack.c.b16 %v564, %v560
  %v753 = vpack.c.b16 %v569, %v565
  %v754 = vpack.c.b16 %v570, %v566
  %v755 = vpack.c.b16 %v571, %v567
  %v756 = vpack.c.b16 %v572, %v568
  %v757 = vpack.c.b16 %v577, %v573
  %v758 = vpack.c.b16 %v578, %v574
  %v759 = vpack.c.b16 %v579, %v575
  %v760 = vpack.c.b16 %v580, %v576
  %v761 = vpack.c.b16 %v585, %v581
  %v762 = vpack.c.b16 %v586, %v582
  %v763 = vpack.c.b16 %v587, %v583
  %v764 = vpack.c.b16 %v588, %v584
  %v765 = vpack.c.b16 %v593, %v589
  %v766 = vpack.c.b16 %v594, %v590
  %v767 = vpack.c.b16 %v595, %v591
  %v768 = vpack.c.b16 %v596, %v592
  %v769 = vpack.c.b16 %v601, %v597
  %v770 = vpack.c.b16 %v602, %v598
  %v771 = vpack.c.b16 %v603, %v599
  %v772 = vpack.c.b16 %v604, %v600
  %v773 = vpack.c.b16 %v609, %v605
  %v774 = vpack.c.b16 %v610, %v606
  %v775 = vpack.c.b16 %v611, %v607
  %v776 = vpack.c.b16 %v612, %v608
  %v777 = vpack.c.b16 %v617, %v613
  %v778 = vpack.c.b16 %v618, %v614
  %v779 = vpack.c.b16 %v619, %v615
  %v780 = vpack.c.b16 %v620, %v616
  %v781 = vpack.c.b16 %v625, %v621
  %v782 = vpack.c.b16 %v626, %v622
  %v783 = vpack.c.b16 %v627, %v623
  %v784 = vpack.c.b16 %v628, %v624
  %v785 = vpack.c.b16 %v633, %v629
  %v786 = vpack.c.b16 %v634, %v630
  %v787 = vpack.c.b16 %v635, %v631
  %v788 = vpack.c.b16 %v636, %v632
  %v789 = vpack.c.b16 %v637, %v637
  %v790 = vpack.c.b16 %v638, %v638
  %v791 = vpack.c.b16 %v639, %v639
  %v792 = vpack.c.b16 %v640, %v640
  %vm941 = vcmask 719872
  %v943 = vsel %vm941, %v186, 0
  %vm945 = vcmask 1043456
  %v947 = vsel %vm945, %v789, 0
  %v950 = vsel %vm945, %v790, 0
  %v953 = vsel %vm945, %v791, 0
  %v956 = vsel %vm945, %v792, 0
  %958 = vmatprep.subr.bf16.mxu0 %v670
  %959 = vmatpush1.bf16.msra.mxu0 %v669
  %960 = vmatprep.subr.bf16.mxu0 %v666
  %961 = vmatpush1.bf16.msra.mxu0 %v665
  %962 = vmatprep.subr.bf16.mxu0 %v662
  %963 = vmatpush1.bf16.msra.mxu0 %v661
  %964 = vmatprep.subr.bf16.mxu0 %v658
  %965 = vmatpush1.bf16.msra.mxu0 %v657
  %966 = vmatprep.subr.bf16.mxu0 %v654
  %967 = vmatpush1.bf16.msra.mxu0 %v653
  %968 = vmatprep.subr.bf16.mxu0 %v650
  %969 = vmatpush1.bf16.msra.mxu0 %v649
  %970 = vmatprep.subr.bf16.mxu0 %v646
  %971 = vmatpush1.bf16.msra.mxu0 %v645
  %972 = vmatprep.subr.bf16.mxu0 %v642
  %973 = vmatpush1.bf16.msra.mxu0 %v641
  %974 = vmatprep.subr.bf16.mxu0 %v702
  %975 = vmatpush2.bf16.msra.mxu0 %v701
  %976 = vmatprep.subr.bf16.mxu0 %v698
  %977 = vmatpush2.bf16.msra.mxu0 %v697
  %978 = vmatprep.subr.bf16.mxu0 %v694
  %979 = vmatpush2.bf16.msra.mxu0 %v693
  %980 = vmatprep.subr.bf16.mxu0 %v690
  %981 = vmatpush2.bf16.msra.mxu0 %v689
  %982 = vmatprep.subr.bf16.mxu0 %v686
  %983 = vmatpush2.bf16.msra.mxu0 %v685
  %984 = vmatprep.subr.bf16.mxu0 %v682
  %985 = vmatpush2.bf16.msra.mxu0 %v681
  %986 = vmatprep.subr.bf16.mxu0 %v678
  %987 = vmatpush2.bf16.msra.mxu0 %v677
  %988 = vmatprep.subr.bf16.mxu0 %v674
  %989 = vmatpush2.bf16.msra.mxu0 %v673
  %990 = vmatprep.mubr.bf16.mxu0 %v183
  %991 = vmatmul.mubr.bf16.gmra.mxu0 %v182
  %v992 = vpop.f32.mrf.mxu0
  %v993 = vadd.f32 %v172, %v992
  %v994 = vpop.f32.mrf.mxu0
  %v995 = vadd.f32 %v172, %v994
  %v996 = vpop.f32.mrf.mxu0
  %v997 = vpop.f32.mrf.mxu0
  %998 = vdwg.mxu0
  %999 = vmatprep.subr.bf16.mxu0 %v734
  %1000 = vmatpush1.bf16.msra.mxu0 %v733
  %1001 = vmatprep.subr.bf16.mxu0 %v730
  %1002 = vmatpush1.bf16.msra.mxu0 %v729
  %1003 = vmatprep.subr.bf16.mxu0 %v726
  %1004 = vmatpush1.bf16.msra.mxu0 %v725
  %1005 = vmatprep.subr.bf16.mxu0 %v722
  %1006 = vmatpush1.bf16.msra.mxu0 %v721
  %1007 = vmatprep.subr.bf16.mxu0 %v718
  %1008 = vmatpush1.bf16.msra.mxu0 %v717
  %1009 = vmatprep.subr.bf16.mxu0 %v714
  %1010 = vmatpush1.bf16.msra.mxu0 %v713
  %1011 = vmatprep.subr.bf16.mxu0 %v710
  %1012 = vmatpush1.bf16.msra.mxu0 %v709
  %1013 = vmatprep.subr.bf16.mxu0 %v706
  %1014 = vmatpush1.bf16.msra.mxu0 %v705
  %1015 = vmatprep.subr.bf16.mxu0 %v766
  %1016 = vmatpush2.bf16.msra.mxu0 %v765
  %1017 = vmatprep.subr.bf16.mxu0 %v762
  %1018 = vmatpush2.bf16.msra.mxu0 %v761
  %1019 = vmatprep.subr.bf16.mxu0 %v758
  %1020 = vmatpush2.bf16.msra.mxu0 %v757
  %1021 = vmatprep.subr.bf16.mxu0 %v754
  %1022 = vmatpush2.bf16.msra.mxu0 %v753
  %1023 = vmatprep.subr.bf16.mxu0 %v750
  %1024 = vmatpush2.bf16.msra.mxu0 %v749
  %1025 = vmatprep.subr.bf16.mxu0 %v746
  %1026 = vmatpush2.bf16.msra.mxu0 %v745
  %1027 = vmatprep.subr.bf16.mxu0 %v742
  %1028 = vmatpush2.bf16.msra.mxu0 %v741
  %1029 = vmatprep.subr.bf16.mxu0 %v738
  %1030 = vmatpush2.bf16.msra.mxu0 %v737
  %1031 = vmatprep.mubr.bf16.mxu0 %v185
  %1032 = vmatmul.mubr.bf16.gmra.mxu0 %v184
  %v1033 = vpop.f32.mrf.mxu0
  %v1034 = vadd.f32 %v993, %v1033
  %v1035 = vpop.f32.mrf.mxu0
  %v1036 = vadd.f32 %v995, %v1035
  %v1037 = vpop.f32.mrf.mxu0
  %v1038 = vpop.f32.mrf.mxu0
  %1039 = vdwg.mxu0
  %1040 = vmatprep.subr.bf16.mxu0 0
  %1041 = vmatpush1.bf16.msra.mxu0 0
  %1042 = vmatprep.subr.bf16.mxu0 0
  %1043 = vmatpush1.bf16.msra.mxu0 0
  %1044 = vmatprep.subr.bf16.mxu0 %v950
  %1045 = vmatpush1.bf16.msra.mxu0 %v947
  %1046 = vmatprep.subr.bf16.mxu0 %v786
  %1047 = vmatpush1.bf16.msra.mxu0 %v785
  %1048 = vmatprep.subr.bf16.mxu0 %v782
  %1049 = vmatpush1.bf16.msra.mxu0 %v781
  %1050 = vmatprep.subr.bf16.mxu0 %v778
  %1051 = vmatpush1.bf16.msra.mxu0 %v777
  %1052 = vmatprep.subr.bf16.mxu0 %v774
  %1053 = vmatpush1.bf16.msra.mxu0 %v773
  %1054 = vmatprep.subr.bf16.mxu0 %v770
  %1055 = vmatpush1.bf16.msra.mxu0 %v769
  %1056 = vmatprep.subr.bf16.mxu0 0
  %1057 = vmatpush2.bf16.msra.mxu0 0
  %1058 = vmatprep.subr.bf16.mxu0 0
  %1059 = vmatpush2.bf16.msra.mxu0 0
  %1060 = vmatprep.subr.bf16.mxu0 0
  %1061 = vmatpush2.bf16.msra.mxu0 0
  %1062 = vmatprep.subr.bf16.mxu0 0
  %1063 = vmatpush2.bf16.msra.mxu0 0
  %1064 = vmatprep.subr.bf16.mxu0 0
  %1065 = vmatpush2.bf16.msra.mxu0 0
  %1066 = vmatprep.subr.bf16.mxu0 0
  %1067 = vmatpush2.bf16.msra.mxu0 0
  %1068 = vmatprep.subr.bf16.mxu0 0
  %1069 = vmatpush2.bf16.msra.mxu0 0
  %1070 = vmatprep.subr.bf16.mxu0 0
  %1071 = vmatpush2.bf16.msra.mxu0 0
  %1072 = vmatprep.mubr.bf16.mxu0 0
  %1073 = vmatmul.mubr.bf16.gmra.mxu0 %v943
  %v1074 = vpop.f32.mrf.mxu0
  %v1075 = vadd.f32 %v1034, %v1074
  %v1076 = vpop.f32.mrf.mxu0
  %v1077 = vadd.f32 %v1036, %v1076
  %v1078 = vpop.f32.mrf.mxu0
  %v1079 = vpop.f32.mrf.mxu0
  %1080 = vdwg.mxu0
  %1081 = vmatprep.subr.bf16.mxu0 %v672
  %1082 = vmatpush1.bf16.msra.mxu0 %v671
  %1083 = vmatprep.subr.bf16.mxu0 %v668
  %1084 = vmatpush1.bf16.msra.mxu0 %v667
  %1085 = vmatprep.subr.bf16.mxu0 %v664
  %1086 = vmatpush1.bf16.msra.mxu0 %v663
  %1087 = vmatprep.subr.bf16.mxu0 %v660
  %1088 = vmatpush1.bf16.msra.mxu0 %v659
  %1089 = vmatprep.subr.bf16.mxu0 %v656
  %1090 = vmatpush1.bf16.msra.mxu0 %v655
  %1091 = vmatprep.subr.bf16.mxu0 %v652
  %1092 = vmatpush1.bf16.msra.mxu0 %v651
  %1093 = vmatprep.subr.bf16.mxu0 %v648
  %1094 = vmatpush1.bf16.msra.mxu0 %v647
  %1095 = vmatprep.subr.bf16.mxu0 %v644
  %1096 = vmatpush1.bf16.msra.mxu0 %v643
  %1097 = vmatprep.subr.bf16.mxu0 %v704
  %1098 = vmatpush2.bf16.msra.mxu0 %v703
  %1099 = vmatprep.subr.bf16.mxu0 %v700
  %1100 = vmatpush2.bf16.msra.mxu0 %v699
  %1101 = vmatprep.subr.bf16.mxu0 %v696
  %1102 = vmatpush2.bf16.msra.mxu0 %v695
  %1103 = vmatprep.subr.bf16.mxu0 %v692
  %1104 = vmatpush2.bf16.msra.mxu0 %v691
  %1105 = vmatprep.subr.bf16.mxu0 %v688
  %1106 = vmatpush2.bf16.msra.mxu0 %v687
  %1107 = vmatprep.subr.bf16.mxu0 %v684
  %1108 = vmatpush2.bf16.msra.mxu0 %v683
  %1109 = vmatprep.subr.bf16.mxu0 %v680
  %1110 = vmatpush2.bf16.msra.mxu0 %v679
  %1111 = vmatprep.subr.bf16.mxu0 %v676
  %1112 = vmatpush2.bf16.msra.mxu0 %v675
  %1113 = vmatprep.mubr.bf16.mxu0 %v183
  %1114 = vmatmul.mubr.bf16.gmra.mxu0 %v182
  %v1115 = vpop.f32.mrf.mxu0
  %v1116 = vadd.f32 %v172, %v1115
  %v1117 = vpop.f32.mrf.mxu0
  %v1118 = vadd.f32 %v172, %v1117
  %v1119 = vpop.f32.mrf.mxu0
  %v1120 = vpop.f32.mrf.mxu0
  %1121 = vdwg.mxu0
  %1122 = vmatprep.subr.bf16.mxu0 %v736
  %1123 = vmatpush1.bf16.msra.mxu0 %v735
  %1124 = vmatprep.subr.bf16.mxu0 %v732
  %1125 = vmatpush1.bf16.msra.mxu0 %v731
  %1126 = vmatprep.subr.bf16.mxu0 %v728
  %1127 = vmatpush1.bf16.msra.mxu0 %v727
  %1128 = vmatprep.subr.bf16.mxu0 %v724
  %1129 = vmatpush1.bf16.msra.mxu0 %v723
  %1130 = vmatprep.subr.bf16.mxu0 %v720
  %1131 = vmatpush1.bf16.msra.mxu0 %v719
  %1132 = vmatprep.subr.bf16.mxu0 %v716
  %1133 = vmatpush1.bf16.msra.mxu0 %v715
  %1134 = vmatprep.subr.bf16.mxu0 %v712
  %1135 = vmatpush1.bf16.msra.mxu0 %v711
  %1136 = vmatprep.subr.bf16.mxu0 %v708
  %1137 = vmatpush1.bf16.msra.mxu0 %v707
  %1138 = vmatprep.subr.bf16.mxu0 %v768
  %1139 = vmatpush2.bf16.msra.mxu0 %v767
  %1140 = vmatprep.subr.bf16.mxu0 %v764
  %1141 = vmatpush2.bf16.msra.mxu0 %v763
  %1142 = vmatprep.subr.bf16.mxu0 %v760
  %1143 = vmatpush2.bf16.msra.mxu0 %v759
  %1144 = vmatprep.subr.bf16.mxu0 %v756
  %1145 = vmatpush2.bf16.msra.mxu0 %v755
  %1146 = vmatprep.subr.bf16.mxu0 %v752
  %1147 = vmatpush2.bf16.msra.mxu0 %v751
  %1148 = vmatprep.subr.bf16.mxu0 %v748
  %1149 = vmatpush2.bf16.msra.mxu0 %v747
  %1150 = vmatprep.subr.bf16.mxu0 %v744
  %1151 = vmatpush2.bf16.msra.mxu0 %v743
  %1152 = vmatprep.subr.bf16.mxu0 %v740
  %1153 = vmatpush2.bf16.msra.mxu0 %v739
  %1154 = vmatprep.mubr.bf16.mxu0 %v185
  %1155 = vmatmul.mubr.bf16.gmra.mxu0 %v184
  %v1156 = vpop.f32.mrf.mxu0
  %v1157 = vadd.f32 %v1116, %v1156
  %v1158 = vpop.f32.mrf.mxu0
  %v1159 = vadd.f32 %v1118, %v1158
  %v1160 = vpop.f32.mrf.mxu0
  %v1161 = vpop.f32.mrf.mxu0
  %1162 = vdwg.mxu0
  %1163 = vmatprep.subr.bf16.mxu0 0
  %1164 = vmatpush1.bf16.msra.mxu0 0
  %1165 = vmatprep.subr.bf16.mxu0 0
  %1166 = vmatpush1.bf16.msra.mxu0 0
  %1167 = vmatprep.subr.bf16.mxu0 %v956
  %1168 = vmatpush1.bf16.msra.mxu0 %v953
  %1169 = vmatprep.subr.bf16.mxu0 %v788
  %1170 = vmatpush1.bf16.msra.mxu0 %v787
  %1171 = vmatprep.subr.bf16.mxu0 %v784
  %1172 = vmatpush1.bf16.msra.mxu0 %v783
  %1173 = vmatprep.subr.bf16.mxu0 %v780
  %1174 = vmatpush1.bf16.msra.mxu0 %v779
  %1175 = vmatprep.subr.bf16.mxu0 %v776
  %1176 = vmatpush1.bf16.msra.mxu0 %v775
  %1177 = vmatprep.subr.bf16.mxu0 %v772
  %1178 = vmatpush1.bf16.msra.mxu0 %v771
  %1179 = vmatprep.subr.bf16.mxu0 0
  %1180 = vmatpush2.bf16.msra.mxu0 0
  %1181 = vmatprep.subr.bf16.mxu0 0
  %1182 = vmatpush2.bf16.msra.mxu0 0
  %1183 = vmatprep.subr.bf16.mxu0 0
  %1184 = vmatpush2.bf16.msra.mxu0 0
  %1185 = vmatprep.subr.bf16.mxu0 0
  %1186 = vmatpush2.bf16.msra.mxu0 0
  %1187 = vmatprep.subr.bf16.mxu0 0
  %1188 = vmatpush2.bf16.msra.mxu0 0
  %1189 = vmatprep.subr.bf16.mxu0 0
  %1190 = vmatpush2.bf16.msra.mxu0 0
  %1191 = vmatprep.subr.bf16.mxu0 0
  %1192 = vmatpush2.bf16.msra.mxu0 0
  %1193 = vmatprep.subr.bf16.mxu0 0
  %1194 = vmatpush2.bf16.msra.mxu0 0
  %1195 = vmatprep.mubr.bf16.mxu0 0
  %1196 = vmatmul.mubr.bf16.gmra.mxu0 %v943
  %v1197 = vpop.f32.mrf.mxu0
  %v1198 = vadd.f32 %v1157, %v1197
  %v1199 = vpop.f32.mrf.mxu0
  %v1200 = vadd.f32 %v1159, %v1199
  %v1201 = vpop.f32.mrf.mxu0
  %v1202 = vpop.f32.mrf.mxu0
  %1203 = vdwg.mxu0
  %vm1204 = vcmp.ge.f32.partialorder %v1075, 0.0
  %vm1205 = vcmp.ge.f32.partialorder %v1077, 0.0
  %vm1206 = vcmp.ge.f32.partialorder %v1198, 0.0
  %vm1207 = vcmp.ge.f32.partialorder %v1200, 0.0
  %v1208 = vmul.f32 %v1075, 0.2
  %v1209 = vmul.f32 %v1077, 0.2
  %v1210 = vmul.f32 %v1198, 0.2
  %v1211 = vmul.f32 %v1200, 0.2
  %v1212 = vsel %vm1204, %v1075, %v1208
  %v1213 = vsel %vm1205, %v1077, %v1209
  %v1214 = vsel %vm1206, %v1198, %v1210
  %v1215 = vsel %vm1207, %v1200, %v1211
  %v1216 = vpack.c.bf16 %v1212, %v1212
  %v1217 = vpack.c.bf16 %v1213, %v1213
  %v1218 = vpack.c.bf16 %v1214, %v1214
  %v1219 = vpack.c.bf16 %v1215, %v1215
  %v1224 = vunpack.c.l.b16 %v1216
  %v1225 = vunpack.c.l.b16 %v1217
  %v1226 = vunpack.c.l.b16 %v1218
  %v1227 = vunpack.c.l.b16 %v1219
  %v1228 = vpack.c.b16 %v1225, %v1224
  %v1229 = vpack.c.b16 %v1227, %v1226
  %1232 = vst [vmem:[%s3] sm:$0xff] %v1228
  %1233 = vst [vmem:[%s3 + $0x8] sm:$0xff] %v1229
  // Predicated region
  $region14: #{video_inpainting_model_s.6} parent=0 // pred_check
    _
  $region15: #{video_inpainting_model_s.6} parent=0 // pred_check_branch
    %1235 = sbr.rel (0) target = $region17
  $region16: #{video_inpainting_model_s.6} parent=0 // pred_region
    _
  $region17: #{video_inpainting_model_s.6} parent=0 // pred_fallthru
    _
  // Predicated region
  $region18: #{video_inpainting_model_s.6} parent=0 // pred_check
    _
  $region19: #{video_inpainting_model_s.6} parent=0 // pred_check_branch
    %1237 = sbr.rel (0) target = $region21
  $region20: #{video_inpainting_model_s.6} parent=0 // pred_region
    _
  $region21: #{video_inpainting_model_s.6} parent=0 // pred_fallthru
    _

// kernel: video_inpainting_model_s.7
$region0: #{video_inpainting_model_s.7}
  #allocation0 [shape = 'u32[]', space=smem, size = 0x4, offset = 0x4, fixed_abs, tag = 'smem constant byte address 0x4 - core index']
  #allocation1 [shape = 'u32[144,128]{1,0:T(1,128)}', space=vmem, size = 0x12000, scoped, tag = 'internal scratch']
  %s0 = inlined_call_operand.vmem [shape: bf16[16,600], index: 0, kind: input, shape index: {}]
  %s1 = inlined_call_operand.vmem [shape: bf16[600,128], index: 1, kind: input, shape index: {}]
  %s2 = inlined_call_operand.vmem [shape: f32[16,1], index: 2, kind: input, shape index: {}]
  %s3 = inlined_call_operand.vmem [shape: bf16[16,128], index: 3, kind: output, shape index: {}]
  %s4 = sld [smem:[#allocation0]]
  $region22: #{video_inpainting_model_s.7} parent=0
    _
  %s6 = ssub.s32 1, %s4
  %s7 = scalar_select 0, %s6, %s4
  // Predicated region
  $region2: #{video_inpainting_model_s.7} parent=0 // pred_check
    _
  $region3: #{video_inpainting_model_s.7} parent=0 // pred_check_branch
    %9 = sbr.rel (0) target = $region5
  $region4: #{video_inpainting_model_s.7} parent=0 // pred_region
    _
  $region5: #{video_inpainting_model_s.7} parent=0 // pred_fallthru
    _
  // Predicated region
  $region6: #{video_inpainting_model_s.7} parent=0 // pred_check
    _
  $region7: #{video_inpainting_model_s.7} parent=0 // pred_check_branch
    %11 = sbr.rel (0) target = $region9
  $region8: #{video_inpainting_model_s.7} parent=0 // pred_region
    _
  $region9: #{video_inpainting_model_s.7} parent=0 // pred_fallthru
    _
  // Predicated region
  $region10: #{video_inpainting_model_s.7} parent=0 // pred_check
    _
  $region11: #{video_inpainting_model_s.7} parent=0 // pred_check_branch
    %13 = sbr.rel (0) target = $region13
  $region12: #{video_inpainting_model_s.7} parent=0 // pred_region
    _
  $region13: #{video_inpainting_model_s.7} parent=0 // pred_fallthru
    _
  %v15 = vld [vmem:[%s0] sm:$0xff]
  %v16 = vld [vmem:[%s0 + $0x8] sm:$0xff]
  %v17 = vld [vmem:[%s0 + $0x10] sm:$0xf]
  %v18 = vld [vmem:[%s0 + $0x14] sm:$0xff]
  %v19 = vld [vmem:[%s0 + $0x1c] sm:$0xff]
  %v20 = vld [vmem:[%s0 + $0x24] sm:$0xf]
  %v21 = vld [vmem:[%s1] sm:$0xf]
  %v22 = vld [vmem:[%s1 + $0x4] sm:$0xf]
  %v23 = vld [vmem:[%s1 + $0x8] sm:$0xf]
  %v24 = vld [vmem:[%s1 + $0xc] sm:$0xf]
  %v25 = vld [vmem:[%s1 + $0x10] sm:$0xf]
  %v26 = vld [vmem:[%s1 + $0x14] sm:$0xf]
  %v27 = vld [vmem:[%s1 + $0x18] sm:$0xf]
  %v28 = vld [vmem:[%s1 + $0x1c] sm:$0xf]
  %v29 = vld [vmem:[%s1 + $0x20] sm:$0xf]
  %v30 = vld [vmem:[%s1 + $0x24] sm:$0xf]
  %v31 = vld [vmem:[%s1 + $0x28] sm:$0xf]
  %v32 = vld [vmem:[%s1 + $0x2c] sm:$0xf]
  %v33 = vld [vmem:[%s1 + $0x30] sm:$0xf]
  %v34 = vld [vmem:[%s1 + $0x34] sm:$0xf]
  %v35 = vld [vmem:[%s1 + $0x38] sm:$0xf]
  %v36 = vld [vmem:[%s1 + $0x3c] sm:$0xf]
  %v37 = vld [vmem:[%s1 + $0x40] sm:$0xf]
  %v38 = vld [vmem:[%s1 + $0x44] sm:$0xf]
  %v39 = vld [vmem:[%s1 + $0x48] sm:$0xf]
  %v40 = vld [vmem:[%s1 + $0x4c] sm:$0xf]
  %v41 = vld [vmem:[%s1 + $0x50] sm:$0xf]
  %v42 = vld [vmem:[%s1 + $0x54] sm:$0xf]
  %v43 = vld [vmem:[%s1 + $0x58] sm:$0xf]
  %v44 = vld [vmem:[%s1 + $0x5c] sm:$0xf]
  %v45 = vld [vmem:[%s1 + $0x60] sm:$0xf]
  %v46 = vld [vmem:[%s1 + $0x64] sm:$0xf]
  %v47 = vld [vmem:[%s1 + $0x68] sm:$0xf]
  %v48 = vld [vmem:[%s1 + $0x6c] sm:$0xf]
  %v49 = vld [vmem:[%s1 + $0x70] sm:$0xf]
  %v50 = vld [vmem:[%s1 + $0x74] sm:$0xf]
  %v51 = vld [vmem:[%s1 + $0x78] sm:$0xf]
  %v52 = vld [vmem:[%s1 + $0x7c] sm:$0xf]
  %v53 = vld [vmem:[%s1 + $0x80] sm:$0xf]
  %v54 = vld [vmem:[%s1 + $0x84] sm:$0xf]
  %v55 = vld [vmem:[%s1 + $0x88] sm:$0xf]
  %v56 = vld [vmem:[%s1 + $0x8c] sm:$0xf]
  %v57 = vld [vmem:[%s1 + $0x90] sm:$0xf]
  %v58 = vld [vmem:[%s1 + $0x94] sm:$0xf]
  %v59 = vld [vmem:[%s1 + $0x98] sm:$0xf]
  %v60 = vld [vmem:[%s1 + $0x9c] sm:$0xf]
  %v61 = vld [vmem:[%s1 + $0xa0] sm:$0xf]
  %v62 = vld [vmem:[%s1 + $0xa4] sm:$0xf]
  %v63 = vld [vmem:[%s1 + $0xa8] sm:$0xf]
  %v64 = vld [vmem:[%s1 + $0xac] sm:$0xf]
  %v65 = vld [vmem:[%s1 + $0xb0] sm:$0xf]
  %v66 = vld [vmem:[%s1 + $0xb4] sm:$0xf]
  %v67 = vld [vmem:[%s1 + $0xb8] sm:$0xf]
  %v68 = vld [vmem:[%s1 + $0xbc] sm:$0xf]
  %v69 = vld [vmem:[%s1 + $0xc0] sm:$0xf]
  %v70 = vld [vmem:[%s1 + $0xc4] sm:$0xf]
  %v71 = vld [vmem:[%s1 + $0xc8] sm:$0xf]
  %v72 = vld [vmem:[%s1 + $0xcc] sm:$0xf]
  %v73 = vld [vmem:[%s1 + $0xd0] sm:$0xf]
  %v74 = vld [vmem:[%s1 + $0xd4] sm:$0xf]
  %v75 = vld [vmem:[%s1 + $0xd8] sm:$0xf]
  %v76 = vld [vmem:[%s1 + $0xdc] sm:$0xf]
  %v77 = vld [vmem:[%s1 + $0xe0] sm:$0xf]
  %v78 = vld [vmem:[%s1 + $0xe4] sm:$0xf]
  %v79 = vld [vmem:[%s1 + $0xe8] sm:$0xf]
  %v80 = vld [vmem:[%s1 + $0xec] sm:$0xf]
  %v81 = vld [vmem:[%s1 + $0xf0] sm:$0xf]
  %v82 = vld [vmem:[%s1 + $0xf4] sm:$0xf]
  %v83 = vld [vmem:[%s1 + $0xf8] sm:$0xf]
  %v84 = vld [vmem:[%s1 + $0xfc] sm:$0xf]
  %v85 = vld [vmem:[%s1 + $0x100] sm:$0xf]
  %v86 = vld [vmem:[%s1 + $0x104] sm:$0xf]
  %v87 = vld [vmem:[%s1 + $0x108] sm:$0xf]
  %v88 = vld [vmem:[%s1 + $0x10c] sm:$0xf]
  %v89 = vld [vmem:[%s1 + $0x110] sm:$0xf]
  %v90 = vld [vmem:[%s1 + $0x114] sm:$0xf]
  %v91 = vld [vmem:[%s1 + $0x118] sm:$0xf]
  %v92 = vld [vmem:[%s1 + $0x11c] sm:$0xf]
  %v93 = vld [vmem:[%s1 + $0x120] sm:$0xf]
  %v94 = vld [vmem:[%s1 + $0x124] sm:$0xf]
  %v95 = vld [vmem:[%s1 + $0x128] sm:$0xf]
  %v96 = vld [vmem:[%s2] sm:$0xff]
  %v97 = vld [vmem:[%s2 + $0x8] sm:$0xff]
  %99 = vset.pattern.permute.xlu0 0
  %100 = vperm.xlu0 %99, %v96
  %v101 = vpop.permute.xlu0 %100
  %104 = vset.pattern.permute.xlu0 0
  %105 = vperm.xlu0 %104, %v97
  %v106 = vpop.permute.xlu0 %105
  %v114 = vunpack.c.l.b16 %v15
  %v115 = vunpack.c.h.b16 %v15
  %v116 = vunpack.c.l.b16 %v16
  %v117 = vunpack.c.h.b16 %v16
  %v118 = vunpack.c.l.b16 %v17
  %v119 = vunpack.c.l.b16 %v18
  %v120 = vunpack.c.h.b16 %v18
  %v121 = vunpack.c.l.b16 %v19
  %v122 = vunpack.c.h.b16 %v19
  %v123 = vunpack.c.l.b16 %v20
  %v124 = vpack.c.b16 %v119, %v114
  %v125 = vpack.c.b16 %v120, %v115
  %v126 = vpack.c.b16 %v121, %v116
  %v127 = vpack.c.b16 %v122, %v117
  %v128 = vpack.c.b16 %v123, %v118
  %v208 = vunpack.c.l.b16 %v21
  %v209 = vunpack.c.l.b16 %v22
  %v210 = vunpack.c.l.b16 %v23
  %v211 = vunpack.c.l.b16 %v24
  %v212 = vunpack.c.l.b16 %v25
  %v213 = vunpack.c.l.b16 %v26
  %v214 = vunpack.c.l.b16 %v27
  %v215 = vunpack.c.l.b16 %v28
  %v216 = vunpack.c.l.b16 %v29
  %v217 = vunpack.c.l.b16 %v30
  %v218 = vunpack.c.l.b16 %v31
  %v219 = vunpack.c.l.b16 %v32
  %v220 = vunpack.c.l.b16 %v33
  %v221 = vunpack.c.l.b16 %v34
  %v222 = vunpack.c.l.b16 %v35
  %v223 = vunpack.c.l.b16 %v36
  %v224 = vunpack.c.l.b16 %v37
  %v225 = vunpack.c.l.b16 %v38
  %v226 = vunpack.c.l.b16 %v39
  %v227 = vunpack.c.l.b16 %v40
  %v228 = vunpack.c.l.b16 %v41
  %v229 = vunpack.c.l.b16 %v42
  %v230 = vunpack.c.l.b16 %v43
  %v231 = vunpack.c.l.b16 %v44
  %v232 = vunpack.c.l.b16 %v45
  %v233 = vunpack.c.l.b16 %v46
  %v234 = vunpack.c.l.b16 %v47
  %v235 = vunpack.c.l.b16 %v48
  %v236 = vunpack.c.l.b16 %v49
  %v237 = vunpack.c.l.b16 %v50
  %v238 = vunpack.c.l.b16 %v51
  %v239 = vunpack.c.l.b16 %v52
  %v240 = vunpack.c.l.b16 %v53
  %v241 = vunpack.c.l.b16 %v54
  %v242 = vunpack.c.l.b16 %v55
  %v243 = vunpack.c.l.b16 %v56
  %v244 = vunpack.c.l.b16 %v57
  %v245 = vunpack.c.l.b16 %v58
  %v246 = vunpack.c.l.b16 %v59
  %v247 = vunpack.c.l.b16 %v60
  %v248 = vunpack.c.l.b16 %v61
  %v249 = vunpack.c.l.b16 %v62
  %v250 = vunpack.c.l.b16 %v63
  %v251 = vunpack.c.l.b16 %v64
  %v252 = vunpack.c.l.b16 %v65
  %v253 = vunpack.c.l.b16 %v66
  %v254 = vunpack.c.l.b16 %v67
  %v255 = vunpack.c.l.b16 %v68
  %v256 = vunpack.c.l.b16 %v69
  %v257 = vunpack.c.l.b16 %v70
  %v258 = vunpack.c.l.b16 %v71
  %v259 = vunpack.c.l.b16 %v72
  %v260 = vunpack.c.l.b16 %v73
  %v261 = vunpack.c.l.b16 %v74
  %v262 = vunpack.c.l.b16 %v75
  %v263 = vunpack.c.l.b16 %v76
  %v264 = vunpack.c.l.b16 %v77
  %v265 = vunpack.c.l.b16 %v78
  %v266 = vunpack.c.l.b16 %v79
  %v267 = vunpack.c.l.b16 %v80
  %v268 = vunpack.c.l.b16 %v81
  %v269 = vunpack.c.l.b16 %v82
  %v270 = vunpack.c.l.b16 %v83
  %v271 = vunpack.c.l.b16 %v84
  %v272 = vunpack.c.l.b16 %v85
  %v273 = vunpack.c.l.b16 %v86
  %v274 = vunpack.c.l.b16 %v87
  %v275 = vunpack.c.l.b16 %v88
  %v276 = vunpack.c.l.b16 %v89
  %v277 = vunpack.c.l.b16 %v90
  %v278 = vunpack.c.l.b16 %v91
  %v279 = vunpack.c.l.b16 %v92
  %v280 = vunpack.c.l.b16 %v93
  %v281 = vunpack.c.l.b16 %v94
  %v282 = vunpack.c.l.b16 %v95
  %v283 = vpack.c.b16 %v209, %v208
  %v284 = vpack.c.b16 %v211, %v210
  %v285 = vpack.c.b16 %v213, %v212
  %v286 = vpack.c.b16 %v215, %v214
  %v287 = vpack.c.b16 %v217, %v216
  %v288 = vpack.c.b16 %v219, %v218
  %v289 = vpack.c.b16 %v221, %v220
  %v290 = vpack.c.b16 %v223, %v222
  %v291 = vpack.c.b16 %v225, %v224
  %v292 = vpack.c.b16 %v227, %v226
  %v293 = vpack.c.b16 %v229, %v228
  %v294 = vpack.c.b16 %v231, %v230
  %v295 = vpack.c.b16 %v233, %v232
  %v296 = vpack.c.b16 %v235, %v234
  %v297 = vpack.c.b16 %v237, %v236
  %v298 = vpack.c.b16 %v239, %v238
  %v299 = vpack.c.b16 %v241, %v240
  %v300 = vpack.c.b16 %v243, %v242
  %v301 = vpack.c.b16 %v245, %v244
  %v302 = vpack.c.b16 %v247, %v246
  %v303 = vpack.c.b16 %v249, %v248
  %v304 = vpack.c.b16 %v251, %v250
  %v305 = vpack.c.b16 %v253, %v252
  %v306 = vpack.c.b16 %v255, %v254
  %v307 = vpack.c.b16 %v257, %v256
  %v308 = vpack.c.b16 %v259, %v258
  %v309 = vpack.c.b16 %v261, %v260
  %v310 = vpack.c.b16 %v263, %v262
  %v311 = vpack.c.b16 %v265, %v264
  %v312 = vpack.c.b16 %v267, %v266
  %v313 = vpack.c.b16 %v269, %v268
  %v314 = vpack.c.b16 %v271, %v270
  %v315 = vpack.c.b16 %v273, %v272
  %v316 = vpack.c.b16 %v275, %v274
  %v317 = vpack.c.b16 %v277, %v276
  %v318 = vpack.c.b16 %v279, %v278
  %v319 = vpack.c.b16 %v281, %v280
  %v320 = vpack.c.b16 %v282, %v282
  %vm358 = vcmask 719872
  %v360 = vsel %vm358, %v128, 0
  %vm362 = vcmask 1043456
  %v364 = vsel %vm362, %v320, 0
  %366 = vmatprep.subr.bf16.mxu0 0
  %367 = vmatpush1.bf16.msra.mxu0 %v290
  %368 = vmatprep.subr.bf16.mxu0 0
  %369 = vmatpush1.bf16.msra.mxu0 %v289
  %370 = vmatprep.subr.bf16.mxu0 0
  %371 = vmatpush1.bf16.msra.mxu0 %v288
  %372 = vmatprep.subr.bf16.mxu0 0
  %373 = vmatpush1.bf16.msra.mxu0 %v287
  %374 = vmatprep.subr.bf16.mxu0 0
  %375 = vmatpush1.bf16.msra.mxu0 %v286
  %376 = vmatprep.subr.bf16.mxu0 0
  %377 = vmatpush1.bf16.msra.mxu0 %v285
  %378 = vmatprep.subr.bf16.mxu0 0
  %379 = vmatpush1.bf16.msra.mxu0 %v284
  %380 = vmatprep.subr.bf16.mxu0 0
  %381 = vmatpush1.bf16.msra.mxu0 %v283
  %382 = vmatprep.subr.bf16.mxu0 0
  %383 = vmatpush2.bf16.msra.mxu0 %v298
  %384 = vmatprep.subr.bf16.mxu0 0
  %385 = vmatpush2.bf16.msra.mxu0 %v297
  %386 = vmatprep.subr.bf16.mxu0 0
  %387 = vmatpush2.bf16.msra.mxu0 %v296
  %388 = vmatprep.subr.bf16.mxu0 0
  %389 = vmatpush2.bf16.msra.mxu0 %v295
  %390 = vmatprep.subr.bf16.mxu0 0
  %391 = vmatpush2.bf16.msra.mxu0 %v294
  %392 = vmatprep.subr.bf16.mxu0 0
  %393 = vmatpush2.bf16.msra.mxu0 %v293
  %394 = vmatprep.subr.bf16.mxu0 0
  %395 = vmatpush2.bf16.msra.mxu0 %v292
  %396 = vmatprep.subr.bf16.mxu0 0
  %397 = vmatpush2.bf16.msra.mxu0 %v291
  %398 = vmatprep.mubr.bf16.mxu0 %v125
  %399 = vmatmul.mubr.bf16.gmra.mxu0 %v124
  %v400 = vpop.f32.mrf.mxu0
  %v401 = vadd.f32 %v101, %v400
  %v402 = vpop.f32.mrf.mxu0
  %v403 = vpop.f32.mrf.mxu0
  %v404 = vadd.f32 %v106, %v403
  %v405 = vpop.f32.mrf.mxu0
  %406 = vdwg.mxu0
  %407 = vmatprep.subr.bf16.mxu0 0
  %408 = vmatpush1.bf16.msra.mxu0 %v306
  %409 = vmatprep.subr.bf16.mxu0 0
  %410 = vmatpush1.bf16.msra.mxu0 %v305
  %411 = vmatprep.subr.bf16.mxu0 0
  %412 = vmatpush1.bf16.msra.mxu0 %v304
  %413 = vmatprep.subr.bf16.mxu0 0
  %414 = vmatpush1.bf16.msra.mxu0 %v303
  %415 = vmatprep.subr.bf16.mxu0 0
  %416 = vmatpush1.bf16.msra.mxu0 %v302
  %417 = vmatprep.subr.bf16.mxu0 0
  %418 = vmatpush1.bf16.msra.mxu0 %v301
  %419 = vmatprep.subr.bf16.mxu0 0
  %420 = vmatpush1.bf16.msra.mxu0 %v300
  %421 = vmatprep.subr.bf16.mxu0 0
  %422 = vmatpush1.bf16.msra.mxu0 %v299
  %423 = vmatprep.subr.bf16.mxu0 0
  %424 = vmatpush2.bf16.msra.mxu0 %v314
  %425 = vmatprep.subr.bf16.mxu0 0
  %426 = vmatpush2.bf16.msra.mxu0 %v313
  %427 = vmatprep.subr.bf16.mxu0 0
  %428 = vmatpush2.bf16.msra.mxu0 %v312
  %429 = vmatprep.subr.bf16.mxu0 0
  %430 = vmatpush2.bf16.msra.mxu0 %v311
  %431 = vmatprep.subr.bf16.mxu0 0
  %432 = vmatpush2.bf16.msra.mxu0 %v310
  %433 = vmatprep.subr.bf16.mxu0 0
  %434 = vmatpush2.bf16.msra.mxu0 %v309
  %435 = vmatprep.subr.bf16.mxu0 0
  %436 = vmatpush2.bf16.msra.mxu0 %v308
  %437 = vmatprep.subr.bf16.mxu0 0
  %438 = vmatpush2.bf16.msra.mxu0 %v307
  %439 = vmatprep.mubr.bf16.mxu0 %v127
  %440 = vmatmul.mubr.bf16.gmra.mxu0 %v126
  %v441 = vpop.f32.mrf.mxu0
  %v442 = vadd.f32 %v401, %v441
  %v443 = vpop.f32.mrf.mxu0
  %v444 = vpop.f32.mrf.mxu0
  %v445 = vadd.f32 %v404, %v444
  %v446 = vpop.f32.mrf.mxu0
  %447 = vdwg.mxu0
  %448 = vmatprep.subr.bf16.mxu0 0
  %449 = vmatpush1.bf16.msra.mxu0 0
  %450 = vmatprep.subr.bf16.mxu0 0
  %451 = vmatpush1.bf16.msra.mxu0 0
  %452 = vmatprep.subr.bf16.mxu0 0
  %453 = vmatpush1.bf16.msra.mxu0 %v364
  %454 = vmatprep.subr.bf16.mxu0 0
  %455 = vmatpush1.bf16.msra.mxu0 %v319
  %456 = vmatprep.subr.bf16.mxu0 0
  %457 = vmatpush1.bf16.msra.mxu0 %v318
  %458 = vmatprep.subr.bf16.mxu0 0
  %459 = vmatpush1.bf16.msra.mxu0 %v317
  %460 = vmatprep.subr.bf16.mxu0 0
  %461 = vmatpush1.bf16.msra.mxu0 %v316
  %462 = vmatprep.subr.bf16.mxu0 0
  %463 = vmatpush1.bf16.msra.mxu0 %v315
  %464 = vmatprep.subr.bf16.mxu0 0
  %465 = vmatpush2.bf16.msra.mxu0 0
  %466 = vmatprep.subr.bf16.mxu0 0
  %467 = vmatpush2.bf16.msra.mxu0 0
  %468 = vmatprep.subr.bf16.mxu0 0
  %469 = vmatpush2.bf16.msra.mxu0 0
  %470 = vmatprep.subr.bf16.mxu0 0
  %471 = vmatpush2.bf16.msra.mxu0 0
  %472 = vmatprep.subr.bf16.mxu0 0
  %473 = vmatpush2.bf16.msra.mxu0 0
  %474 = vmatprep.subr.bf16.mxu0 0
  %475 = vmatpush2.bf16.msra.mxu0 0
  %476 = vmatprep.subr.bf16.mxu0 0
  %477 = vmatpush2.bf16.msra.mxu0 0
  %478 = vmatprep.subr.bf16.mxu0 0
  %479 = vmatpush2.bf16.msra.mxu0 0
  %480 = vmatprep.mubr.bf16.mxu0 0
  %481 = vmatmul.mubr.bf16.gmra.mxu0 %v360
  %v482 = vpop.f32.mrf.mxu0
  %v483 = vadd.f32 %v442, %v482
  %v484 = vpop.f32.mrf.mxu0
  %v485 = vpop.f32.mrf.mxu0
  %v486 = vadd.f32 %v445, %v485
  %v487 = vpop.f32.mrf.mxu0
  %488 = vdwg.mxu0
  %vm489 = vcmp.ge.f32.partialorder %v483, 0.0
  %vm490 = vcmp.ge.f32.partialorder %v486, 0.0
  %v491 = vmul.f32 %v483, 0.2
  %v492 = vmul.f32 %v486, 0.2
  %v493 = vsel %vm489, %v483, %v491
  %v494 = vsel %vm490, %v486, %v492
  %v495 = vpack.c.bf16 %v494, %v493
  %v497 = vunpack.c.l.b16 %v495
  %v498 = vunpack.c.h.b16 %v495
  %v499 = vpack.c.b16 %v497, %v497
  %v500 = vpack.c.b16 %v498, %v498
  %503 = vst [vmem:[%s3] sm:$0xf] %v499
  %504 = vst [vmem:[%s3 + $0x4] sm:$0xf] %v500
  // Predicated region
  $region14: #{video_inpainting_model_s.7} parent=0 // pred_check
    _
  $region15: #{video_inpainting_model_s.7} parent=0 // pred_check_branch
    %506 = sbr.rel (0) target = $region17
  $region16: #{video_inpainting_model_s.7} parent=0 // pred_region
    _
  $region17: #{video_inpainting_model_s.7} parent=0 // pred_fallthru
    _
  // Predicated region
  $region18: #{video_inpainting_model_s.7} parent=0 // pred_check
    _
  $region19: #{video_inpainting_model_s.7} parent=0 // pred_check_branch
    %508 = sbr.rel (0) target = $region21
  $region20: #{video_inpainting_model_s.7} parent=0 // pred_region
    _
  $region21: #{video_inpainting_model_s.7} parent=0 // pred_fallthru
    _

// kernel: video_inpainting_model_s.8
$region0: #{video_inpainting_model_s.8}
  #allocation0 [shape = 'u32[]', space=smem, size = 0x4, offset = 0x4, fixed_abs, tag = 'smem constant byte address 0x4 - core index']
  #allocation1 [shape = 'u32[144,128]{1,0:T(1,128)}', space=vmem, size = 0x12000, scoped, tag = 'internal scratch']
  %s0 = inlined_call_operand.vmem [shape: bf16[32,1200], index: 0, kind: input, shape index: {}]
  %s1 = inlined_call_operand.vmem [shape: bf16[1200,128], index: 1, kind: input, shape index: {}]
  %s2 = inlined_call_operand.vmem [shape: f32[32,1], index: 2, kind: input, shape index: {}]
  %s3 = inlined_call_operand.vmem [shape: bf16[32,128], index: 3, kind: output, shape index: {}]
  %s4 = sld [smem:[#allocation0]]
  $region22: #{video_inpainting_model_s.8} parent=0
    _
  %s6 = ssub.s32 1, %s4
  %s7 = scalar_select 0, %s6, %s4
  // Predicated region
  $region2: #{video_inpainting_model_s.8} parent=0 // pred_check
    _
  $region3: #{video_inpainting_model_s.8} parent=0 // pred_check_branch
    %9 = sbr.rel (0) target = $region5
  $region4: #{video_inpainting_model_s.8} parent=0 // pred_region
    _
  $region5: #{video_inpainting_model_s.8} parent=0 // pred_fallthru
    _
  // Predicated region
  $region6: #{video_inpainting_model_s.8} parent=0 // pred_check
    _
  $region7: #{video_inpainting_model_s.8} parent=0 // pred_check_branch
    %11 = sbr.rel (0) target = $region9
  $region8: #{video_inpainting_model_s.8} parent=0 // pred_region
    _
  $region9: #{video_inpainting_model_s.8} parent=0 // pred_fallthru
    _
  // Predicated region
  $region10: #{video_inpainting_model_s.8} parent=0 // pred_check
    _
  $region11: #{video_inpainting_model_s.8} parent=0 // pred_check_branch
    %13 = sbr.rel (0) target = $region13
  $region12: #{video_inpainting_model_s.8} parent=0 // pred_region
    _
  $region13: #{video_inpainting_model_s.8} parent=0 // pred_fallthru
    _
  %v15 = vld [vmem:[%s0] sm:$0xff]
  %v16 = vld [vmem:[%s0 + $0x8] sm:$0xff]
  %v17 = vld [vmem:[%s0 + $0x10] sm:$0xff]
  %v18 = vld [vmem:[%s0 + $0x18] sm:$0xff]
  %v19 = vld [vmem:[%s0 + $0x20] sm:$0xff]
  %v20 = vld [vmem:[%s0 + $0x28] sm:$0xff]
  %v21 = vld [vmem:[%s0 + $0x30] sm:$0xff]
  %v22 = vld [vmem:[%s0 + $0x38] sm:$0xff]
  %v23 = vld [vmem:[%s0 + $0x40] sm:$0xff]
  %v24 = vld [vmem:[%s0 + $0x48] sm:$0xff]
  %v25 = vld [vmem:[%s0 + $0x50] sm:$0xff]
  %v26 = vld [vmem:[%s0 + $0x58] sm:$0xff]
  %v27 = vld [vmem:[%s0 + $0x60] sm:$0xff]
  %v28 = vld [vmem:[%s0 + $0x68] sm:$0xff]
  %v29 = vld [vmem:[%s0 + $0x70] sm:$0xff]
  %v30 = vld [vmem:[%s0 + $0x78] sm:$0xff]
  %v31 = vld [vmem:[%s0 + $0x80] sm:$0xff]
  %v32 = vld [vmem:[%s0 + $0x88] sm:$0xff]
  %v33 = vld [vmem:[%s0 + $0x90] sm:$0xff]
  %v34 = vld [vmem:[%s0 + $0x98] sm:$0xff]
  %v35 = vld [vmem:[%s1] sm:$0xf]
  %v36 = vld [vmem:[%s1 + $0x4] sm:$0xf]
  %v37 = vld [vmem:[%s1 + $0x8] sm:$0xf]
  %v38 = vld [vmem:[%s1 + $0xc] sm:$0xf]
  %v39 = vld [vmem:[%s1 + $0x10] sm:$0xf]
  %v40 = vld [vmem:[%s1 + $0x14] sm:$0xf]
  %v41 = vld [vmem:[%s1 + $0x18] sm:$0xf]
  %v42 = vld [vmem:[%s1 + $0x1c] sm:$0xf]
  %v43 = vld [vmem:[%s1 + $0x20] sm:$0xf]
  %v44 = vld [vmem:[%s1 + $0x24] sm:$0xf]
  %v45 = vld [vmem:[%s1 + $0x28] sm:$0xf]
  %v46 = vld [vmem:[%s1 + $0x2c] sm:$0xf]
  %v47 = vld [vmem:[%s1 + $0x30] sm:$0xf]
  %v48 = vld [vmem:[%s1 + $0x34] sm:$0xf]
  %v49 = vld [vmem:[%s1 + $0x38] sm:$0xf]
  %v50 = vld [vmem:[%s1 + $0x3c] sm:$0xf]
  %v51 = vld [vmem:[%s1 + $0x40] sm:$0xf]
  %v52 = vld [vmem:[%s1 + $0x44] sm:$0xf]
  %v53 = vld [vmem:[%s1 + $0x48] sm:$0xf]
  %v54 = vld [vmem:[%s1 + $0x4c] sm:$0xf]
  %v55 = vld [vmem:[%s1 + $0x50] sm:$0xf]
  %v56 = vld [vmem:[%s1 + $0x54] sm:$0xf]
  %v57 = vld [vmem:[%s1 + $0x58] sm:$0xf]
  %v58 = vld [vmem:[%s1 + $0x5c] sm:$0xf]
  %v59 = vld [vmem:[%s1 + $0x60] sm:$0xf]
  %v60 = vld [vmem:[%s1 + $0x64] sm:$0xf]
  %v61 = vld [vmem:[%s1 + $0x68] sm:$0xf]
  %v62 = vld [vmem:[%s1 + $0x6c] sm:$0xf]
  %v63 = vld [vmem:[%s1 + $0x70] sm:$0xf]
  %v64 = vld [vmem:[%s1 + $0x74] sm:$0xf]
  %v65 = vld [vmem:[%s1 + $0x78] sm:$0xf]
  %v66 = vld [vmem:[%s1 + $0x7c] sm:$0xf]
  %v67 = vld [vmem:[%s1 + $0x80] sm:$0xf]
  %v68 = vld [vmem:[%s1 + $0x84] sm:$0xf]
  %v69 = vld [vmem:[%s1 + $0x88] sm:$0xf]
  %v70 = vld [vmem:[%s1 + $0x8c] sm:$0xf]
  %v71 = vld [vmem:[%s1 + $0x90] sm:$0xf]
  %v72 = vld [vmem:[%s1 + $0x94] sm:$0xf]
  %v73 = vld [vmem:[%s1 + $0x98] sm:$0xf]
  %v74 = vld [vmem:[%s1 + $0x9c] sm:$0xf]
  %v75 = vld [vmem:[%s1 + $0xa0] sm:$0xf]
  %v76 = vld [vmem:[%s1 + $0xa4] sm:$0xf]
  %v77 = vld [vmem:[%s1 + $0xa8] sm:$0xf]
  %v78 = vld [vmem:[%s1 + $0xac] sm:$0xf]
  %v79 = vld [vmem:[%s1 + $0xb0] sm:$0xf]
  %v80 = vld [vmem:[%s1 + $0xb4] sm:$0xf]
  %v81 = vld [vmem:[%s1 + $0xb8] sm:$0xf]
  %v82 = vld [vmem:[%s1 + $0xbc] sm:$0xf]
  %v83 = vld [vmem:[%s1 + $0xc0] sm:$0xf]
  %v84 = vld [vmem:[%s1 + $0xc4] sm:$0xf]
  %v85 = vld [vmem:[%s1 + $0xc8] sm:$0xf]
  %v86 = vld [vmem:[%s1 + $0xcc] sm:$0xf]
  %v87 = vld [vmem:[%s1 + $0xd0] sm:$0xf]
  %v88 = vld [vmem:[%s1 + $0xd4] sm:$0xf]
  %v89 = vld [vmem:[%s1 + $0xd8] sm:$0xf]
  %v90 = vld [vmem:[%s1 + $0xdc] sm:$0xf]
  %v91 = vld [vmem:[%s1 + $0xe0] sm:$0xf]
  %v92 = vld [vmem:[%s1 + $0xe4] sm:$0xf]
  %v93 = vld [vmem:[%s1 + $0xe8] sm:$0xf]
  %v94 = vld [vmem:[%s1 + $0xec] sm:$0xf]
  %v95 = vld [vmem:[%s1 + $0xf0] sm:$0xf]
  %v96 = vld [vmem:[%s1 + $0xf4] sm:$0xf]
  %v97 = vld [vmem:[%s1 + $0xf8] sm:$0xf]
  %v98 = vld [vmem:[%s1 + $0xfc] sm:$0xf]
  %v99 = vld [vmem:[%s1 + $0x100] sm:$0xf]
  %v100 = vld [vmem:[%s1 + $0x104] sm:$0xf]
  %v101 = vld [vmem:[%s1 + $0x108] sm:$0xf]
  %v102 = vld [vmem:[%s1 + $0x10c] sm:$0xf]
  %v103 = vld [vmem:[%s1 + $0x110] sm:$0xf]
  %v104 = vld [vmem:[%s1 + $0x114] sm:$0xf]
  %v105 = vld [vmem:[%s1 + $0x118] sm:$0xf]
  %v106 = vld [vmem:[%s1 + $0x11c] sm:$0xf]
  %v107 = vld [vmem:[%s1 + $0x120] sm:$0xf]
  %v108 = vld [vmem:[%s1 + $0x124] sm:$0xf]
  %v109 = vld [vmem:[%s1 + $0x128] sm:$0xf]
  %v110 = vld [vmem:[%s1 + $0x12c] sm:$0xf]
  %v111 = vld [vmem:[%s1 + $0x130] sm:$0xf]
  %v112 = vld [vmem:[%s1 + $0x134] sm:$0xf]
  %v113 = vld [vmem:[%s1 + $0x138] sm:$0xf]
  %v114 = vld [vmem:[%s1 + $0x13c] sm:$0xf]
  %v115 = vld [vmem:[%s1 + $0x140] sm:$0xf]
  %v116 = vld [vmem:[%s1 + $0x144] sm:$0xf]
  %v117 = vld [vmem:[%s1 + $0x148] sm:$0xf]
  %v118 = vld [vmem:[%s1 + $0x14c] sm:$0xf]
  %v119 = vld [vmem:[%s1 + $0x150] sm:$0xf]
  %v120 = vld [vmem:[%s1 + $0x154] sm:$0xf]
  %v121 = vld [vmem:[%s1 + $0x158] sm:$0xf]
  %v122 = vld [vmem:[%s1 + $0x15c] sm:$0xf]
  %v123 = vld [vmem:[%s1 + $0x160] sm:$0xf]
  %v124 = vld [vmem:[%s1 + $0x164] sm:$0xf]
  %v125 = vld [vmem:[%s1 + $0x168] sm:$0xf]
  %v126 = vld [vmem:[%s1 + $0x16c] sm:$0xf]
  %v127 = vld [vmem:[%s1 + $0x170] sm:$0xf]
  %v128 = vld [vmem:[%s1 + $0x174] sm:$0xf]
  %v129 = vld [vmem:[%s1 + $0x178] sm:$0xf]
  %v130 = vld [vmem:[%s1 + $0x17c] sm:$0xf]
  %v131 = vld [vmem:[%s1 + $0x180] sm:$0xf]
  %v132 = vld [vmem:[%s1 + $0x184] sm:$0xf]
  %v133 = vld [vmem:[%s1 + $0x188] sm:$0xf]
  %v134 = vld [vmem:[%s1 + $0x18c] sm:$0xf]
  %v135 = vld [vmem:[%s1 + $0x190] sm:$0xf]
  %v136 = vld [vmem:[%s1 + $0x194] sm:$0xf]
  %v137 = vld [vmem:[%s1 + $0x198] sm:$0xf]
  %v138 = vld [vmem:[%s1 + $0x19c] sm:$0xf]
  %v139 = vld [vmem:[%s1 + $0x1a0] sm:$0xf]
  %v140 = vld [vmem:[%s1 + $0x1a4] sm:$0xf]
  %v141 = vld [vmem:[%s1 + $0x1a8] sm:$0xf]
  %v142 = vld [vmem:[%s1 + $0x1ac] sm:$0xf]
  %v143 = vld [vmem:[%s1 + $0x1b0] sm:$0xf]
  %v144 = vld [vmem:[%s1 + $0x1b4] sm:$0xf]
  %v145 = vld [vmem:[%s1 + $0x1b8] sm:$0xf]
  %v146 = vld [vmem:[%s1 + $0x1bc] sm:$0xf]
  %v147 = vld [vmem:[%s1 + $0x1c0] sm:$0xf]
  %v148 = vld [vmem:[%s1 + $0x1c4] sm:$0xf]
  %v149 = vld [vmem:[%s1 + $0x1c8] sm:$0xf]
  %v150 = vld [vmem:[%s1 + $0x1cc] sm:$0xf]
  %v151 = vld [vmem:[%s1 + $0x1d0] sm:$0xf]
  %v152 = vld [vmem:[%s1 + $0x1d4] sm:$0xf]
  %v153 = vld [vmem:[%s1 + $0x1d8] sm:$0xf]
  %v154 = vld [vmem:[%s1 + $0x1dc] sm:$0xf]
  %v155 = vld [vmem:[%s1 + $0x1e0] sm:$0xf]
  %v156 = vld [vmem:[%s1 + $0x1e4] sm:$0xf]
  %v157 = vld [vmem:[%s1 + $0x1e8] sm:$0xf]
  %v158 = vld [vmem:[%s1 + $0x1ec] sm:$0xf]
  %v159 = vld [vmem:[%s1 + $0x1f0] sm:$0xf]
  %v160 = vld [vmem:[%s1 + $0x1f4] sm:$0xf]
  %v161 = vld [vmem:[%s1 + $0x1f8] sm:$0xf]
  %v162 = vld [vmem:[%s1 + $0x1fc] sm:$0xf]
  %v163 = vld [vmem:[%s1 + $0x200] sm:$0xf]
  %v164 = vld [vmem:[%s1 + $0x204] sm:$0xf]
  %v165 = vld [vmem:[%s1 + $0x208] sm:$0xf]
  %v166 = vld [vmem:[%s1 + $0x20c] sm:$0xf]
  %v167 = vld [vmem:[%s1 + $0x210] sm:$0xf]
  %v168 = vld [vmem:[%s1 + $0x214] sm:$0xf]
  %v169 = vld [vmem:[%s1 + $0x218] sm:$0xf]
  %v170 = vld [vmem:[%s1 + $0x21c] sm:$0xf]
  %v171 = vld [vmem:[%s1 + $0x220] sm:$0xf]
  %v172 = vld [vmem:[%s1 + $0x224] sm:$0xf]
  %v173 = vld [vmem:[%s1 + $0x228] sm:$0xf]
  %v174 = vld [vmem:[%s1 + $0x22c] sm:$0xf]
  %v175 = vld [vmem:[%s1 + $0x230] sm:$0xf]
  %v176 = vld [vmem:[%s1 + $0x234] sm:$0xf]
  %v177 = vld [vmem:[%s1 + $0x238] sm:$0xf]
  %v178 = vld [vmem:[%s1 + $0x23c] sm:$0xf]
  %v179 = vld [vmem:[%s1 + $0x240] sm:$0xf]
  %v180 = vld [vmem:[%s1 + $0x244] sm:$0xf]
  %v181 = vld [vmem:[%s1 + $0x248] sm:$0xf]
  %v182 = vld [vmem:[%s1 + $0x24c] sm:$0xf]
  %v183 = vld [vmem:[%s1 + $0x250] sm:$0xf]
  %v184 = vld [vmem:[%s1 + $0x254] sm:$0xf]
  %v185 = vld [vmem:[%s2] sm:$0xff]
  %v186 = vld [vmem:[%s2 + $0x8] sm:$0xff]
  %v187 = vld [vmem:[%s2 + $0x10] sm:$0xff]
  %v188 = vld [vmem:[%s2 + $0x18] sm:$0xff]
  %190 = vset.pattern.permute.xlu0 0
  %191 = vperm.xlu0 %190, %v185
  %v192 = vpop.permute.xlu0 %191
  %195 = vset.pattern.permute.xlu0 0
  %196 = vperm.xlu0 %195, %v186
  %v197 = vpop.permute.xlu0 %196
  %200 = vset.pattern.permute.xlu0 0
  %201 = vperm.xlu0 %200, %v187
  %v202 = vpop.permute.xlu0 %201
  %205 = vset.pattern.permute.xlu0 0
  %206 = vperm.xlu0 %205, %v188
  %v207 = vpop.permute.xlu0 %206
  %v229 = vunpack.c.l.b16 %v15
  %v230 = vunpack.c.h.b16 %v15
  %v231 = vunpack.c.l.b16 %v16
  %v232 = vunpack.c.h.b16 %v16
  %v233 = vunpack.c.l.b16 %v17
  %v234 = vunpack.c.h.b16 %v17
  %v235 = vunpack.c.l.b16 %v18
  %v236 = vunpack.c.h.b16 %v18
  %v237 = vunpack.c.l.b16 %v19
  %v238 = vunpack.c.h.b16 %v19
  %v239 = vunpack.c.l.b16 %v20
  %v240 = vunpack.c.h.b16 %v20
  %v241 = vunpack.c.l.b16 %v21
  %v242 = vunpack.c.h.b16 %v21
  %v243 = vunpack.c.l.b16 %v22
  %v244 = vunpack.c.h.b16 %v22
  %v245 = vunpack.c.l.b16 %v23
  %v246 = vunpack.c.h.b16 %v23
  %v247 = vunpack.c.l.b16 %v24
  %v248 = vunpack.c.h.b16 %v24
  %v249 = vunpack.c.l.b16 %v25
  %v250 = vunpack.c.h.b16 %v25
  %v251 = vunpack.c.l.b16 %v26
  %v252 = vunpack.c.h.b16 %v26
  %v253 = vunpack.c.l.b16 %v27
  %v254 = vunpack.c.h.b16 %v27
  %v255 = vunpack.c.l.b16 %v28
  %v256 = vunpack.c.h.b16 %v28
  %v257 = vunpack.c.l.b16 %v29
  %v258 = vunpack.c.h.b16 %v29
  %v259 = vunpack.c.l.b16 %v30
  %v260 = vunpack.c.h.b16 %v30
  %v261 = vunpack.c.l.b16 %v31
  %v262 = vunpack.c.h.b16 %v31
  %v263 = vunpack.c.l.b16 %v32
  %v264 = vunpack.c.h.b16 %v32
  %v265 = vunpack.c.l.b16 %v33
  %v266 = vunpack.c.h.b16 %v33
  %v267 = vunpack.c.l.b16 %v34
  %v268 = vunpack.c.h.b16 %v34
  %v269 = vpack.c.b16 %v239, %v229
  %v270 = vpack.c.b16 %v240, %v230
  %v271 = vpack.c.b16 %v241, %v231
  %v272 = vpack.c.b16 %v242, %v232
  %v273 = vpack.c.b16 %v243, %v233
  %v274 = vpack.c.b16 %v244, %v234
  %v275 = vpack.c.b16 %v245, %v235
  %v276 = vpack.c.b16 %v246, %v236
  %v277 = vpack.c.b16 %v247, %v237
  %v278 = vpack.c.b16 %v248, %v238
  %v279 = vpack.c.b16 %v259, %v249
  %v280 = vpack.c.b16 %v260, %v250
  %v281 = vpack.c.b16 %v261, %v251
  %v282 = vpack.c.b16 %v262, %v252
  %v283 = vpack.c.b16 %v263, %v253
  %v284 = vpack.c.b16 %v264, %v254
  %v285 = vpack.c.b16 %v265, %v255
  %v286 = vpack.c.b16 %v266, %v256
  %v287 = vpack.c.b16 %v267, %v257
  %v288 = vpack.c.b16 %v268, %v258
  %v457 = vunpack.c.l.b16 %v35
  %v458 = vunpack.c.l.b16 %v36
  %v459 = vunpack.c.l.b16 %v37
  %v460 = vunpack.c.l.b16 %v38
  %v461 = vunpack.c.l.b16 %v39
  %v462 = vunpack.c.l.b16 %v40
  %v463 = vunpack.c.l.b16 %v41
  %v464 = vunpack.c.l.b16 %v42
  %v465 = vunpack.c.l.b16 %v43
  %v466 = vunpack.c.l.b16 %v44
  %v467 = vunpack.c.l.b16 %v45
  %v468 = vunpack.c.l.b16 %v46
  %v469 = vunpack.c.l.b16 %v47
  %v470 = vunpack.c.l.b16 %v48
  %v471 = vunpack.c.l.b16 %v49
  %v472 = vunpack.c.l.b16 %v50
  %v473 = vunpack.c.l.b16 %v51
  %v474 = vunpack.c.l.b16 %v52
  %v475 = vunpack.c.l.b16 %v53
  %v476 = vunpack.c.l.b16 %v54
  %v477 = vunpack.c.l.b16 %v55
  %v478 = vunpack.c.l.b16 %v56
  %v479 = vunpack.c.l.b16 %v57
  %v480 = vunpack.c.l.b16 %v58
  %v481 = vunpack.c.l.b16 %v59
  %v482 = vunpack.c.l.b16 %v60
  %v483 = vunpack.c.l.b16 %v61
  %v484 = vunpack.c.l.b16 %v62
  %v485 = vunpack.c.l.b16 %v63
  %v486 = vunpack.c.l.b16 %v64
  %v487 = vunpack.c.l.b16 %v65
  %v488 = vunpack.c.l.b16 %v66
  %v489 = vunpack.c.l.b16 %v67
  %v490 = vunpack.c.l.b16 %v68
  %v491 = vunpack.c.l.b16 %v69
  %v492 = vunpack.c.l.b16 %v70
  %v493 = vunpack.c.l.b16 %v71
  %v494 = vunpack.c.l.b16 %v72
  %v495 = vunpack.c.l.b16 %v73
  %v496 = vunpack.c.l.b16 %v74
  %v497 = vunpack.c.l.b16 %v75
  %v498 = vunpack.c.l.b16 %v76
  %v499 = vunpack.c.l.b16 %v77
  %v500 = vunpack.c.l.b16 %v78
  %v501 = vunpack.c.l.b16 %v79
  %v502 = vunpack.c.l.b16 %v80
  %v503 = vunpack.c.l.b16 %v81
  %v504 = vunpack.c.l.b16 %v82
  %v505 = vunpack.c.l.b16 %v83
  %v506 = vunpack.c.l.b16 %v84
  %v507 = vunpack.c.l.b16 %v85
  %v508 = vunpack.c.l.b16 %v86
  %v509 = vunpack.c.l.b16 %v87
  %v510 = vunpack.c.l.b16 %v88
  %v511 = vunpack.c.l.b16 %v89
  %v512 = vunpack.c.l.b16 %v90
  %v513 = vunpack.c.l.b16 %v91
  %v514 = vunpack.c.l.b16 %v92
  %v515 = vunpack.c.l.b16 %v93
  %v516 = vunpack.c.l.b16 %v94
  %v517 = vunpack.c.l.b16 %v95
  %v518 = vunpack.c.l.b16 %v96
  %v519 = vunpack.c.l.b16 %v97
  %v520 = vunpack.c.l.b16 %v98
  %v521 = vunpack.c.l.b16 %v99
  %v522 = vunpack.c.l.b16 %v100
  %v523 = vunpack.c.l.b16 %v101
  %v524 = vunpack.c.l.b16 %v102
  %v525 = vunpack.c.l.b16 %v103
  %v526 = vunpack.c.l.b16 %v104
  %v527 = vunpack.c.l.b16 %v105
  %v528 = vunpack.c.l.b16 %v106
  %v529 = vunpack.c.l.b16 %v107
  %v530 = vunpack.c.l.b16 %v108
  %v531 = vunpack.c.l.b16 %v109
  %v532 = vunpack.c.l.b16 %v110
  %v533 = vunpack.c.l.b16 %v111
  %v534 = vunpack.c.l.b16 %v112
  %v535 = vunpack.c.l.b16 %v113
  %v536 = vunpack.c.l.b16 %v114
  %v537 = vunpack.c.l.b16 %v115
  %v538 = vunpack.c.l.b16 %v116
  %v539 = vunpack.c.l.b16 %v117
  %v540 = vunpack.c.l.b16 %v118
  %v541 = vunpack.c.l.b16 %v119
  %v542 = vunpack.c.l.b16 %v120
  %v543 = vunpack.c.l.b16 %v121
  %v544 = vunpack.c.l.b16 %v122
  %v545 = vunpack.c.l.b16 %v123
  %v546 = vunpack.c.l.b16 %v124
  %v547 = vunpack.c.l.b16 %v125
  %v548 = vunpack.c.l.b16 %v126
  %v549 = vunpack.c.l.b16 %v127
  %v550 = vunpack.c.l.b16 %v128
  %v551 = vunpack.c.l.b16 %v129
  %v552 = vunpack.c.l.b16 %v130
  %v553 = vunpack.c.l.b16 %v131
  %v554 = vunpack.c.l.b16 %v132
  %v555 = vunpack.c.l.b16 %v133
  %v556 = vunpack.c.l.b16 %v134
  %v557 = vunpack.c.l.b16 %v135
  %v558 = vunpack.c.l.b16 %v136
  %v559 = vunpack.c.l.b16 %v137
  %v560 = vunpack.c.l.b16 %v138
  %v561 = vunpack.c.l.b16 %v139
  %v562 = vunpack.c.l.b16 %v140
  %v563 = vunpack.c.l.b16 %v141
  %v564 = vunpack.c.l.b16 %v142
  %v565 = vunpack.c.l.b16 %v143
  %v566 = vunpack.c.l.b16 %v144
  %v567 = vunpack.c.l.b16 %v145
  %v568 = vunpack.c.l.b16 %v146
  %v569 = vunpack.c.l.b16 %v147
  %v570 = vunpack.c.l.b16 %v148
  %v571 = vunpack.c.l.b16 %v149
  %v572 = vunpack.c.l.b16 %v150
  %v573 = vunpack.c.l.b16 %v151
  %v574 = vunpack.c.l.b16 %v152
  %v575 = vunpack.c.l.b16 %v153
  %v576 = vunpack.c.l.b16 %v154
  %v577 = vunpack.c.l.b16 %v155
  %v578 = vunpack.c.l.b16 %v156
  %v579 = vunpack.c.l.b16 %v157
  %v580 = vunpack.c.l.b16 %v158
  %v581 = vunpack.c.l.b16 %v159
  %v582 = vunpack.c.l.b16 %v160
  %v583 = vunpack.c.l.b16 %v161
  %v584 = vunpack.c.l.b16 %v162
  %v585 = vunpack.c.l.b16 %v163
  %v586 = vunpack.c.l.b16 %v164
  %v587 = vunpack.c.l.b16 %v165
  %v588 = vunpack.c.l.b16 %v166
  %v589 = vunpack.c.l.b16 %v167
  %v590 = vunpack.c.l.b16 %v168
  %v591 = vunpack.c.l.b16 %v169
  %v592 = vunpack.c.l.b16 %v170
  %v593 = vunpack.c.l.b16 %v171
  %v594 = vunpack.c.l.b16 %v172
  %v595 = vunpack.c.l.b16 %v173
  %v596 = vunpack.c.l.b16 %v174
  %v597 = vunpack.c.l.b16 %v175
  %v598 = vunpack.c.l.b16 %v176
  %v599 = vunpack.c.l.b16 %v177
  %v600 = vunpack.c.l.b16 %v178
  %v601 = vunpack.c.l.b16 %v179
  %v602 = vunpack.c.l.b16 %v180
  %v603 = vunpack.c.l.b16 %v181
  %v604 = vunpack.c.l.b16 %v182
  %v605 = vunpack.c.l.b16 %v183
  %v606 = vunpack.c.l.b16 %v184
  %v607 = vpack.c.b16 %v458, %v457
  %v608 = vpack.c.b16 %v460, %v459
  %v609 = vpack.c.b16 %v462, %v461
  %v610 = vpack.c.b16 %v464, %v463
  %v611 = vpack.c.b16 %v466, %v465
  %v612 = vpack.c.b16 %v468, %v467
  %v613 = vpack.c.b16 %v470, %v469
  %v614 = vpack.c.b16 %v472, %v471
  %v615 = vpack.c.b16 %v474, %v473
  %v616 = vpack.c.b16 %v476, %v475
  %v617 = vpack.c.b16 %v478, %v477
  %v618 = vpack.c.b16 %v480, %v479
  %v619 = vpack.c.b16 %v482, %v481
  %v620 = vpack.c.b16 %v484, %v483
  %v621 = vpack.c.b16 %v486, %v485
  %v622 = vpack.c.b16 %v488, %v487
  %v623 = vpack.c.b16 %v490, %v489
  %v624 = vpack.c.b16 %v492, %v491
  %v625 = vpack.c.b16 %v494, %v493
  %v626 = vpack.c.b16 %v496, %v495
  %v627 = vpack.c.b16 %v498, %v497
  %v628 = vpack.c.b16 %v500, %v499
  %v629 = vpack.c.b16 %v502, %v501
  %v630 = vpack.c.b16 %v504, %v503
  %v631 = vpack.c.b16 %v506, %v505
  %v632 = vpack.c.b16 %v508, %v507
  %v633 = vpack.c.b16 %v510, %v509
  %v634 = vpack.c.b16 %v512, %v511
  %v635 = vpack.c.b16 %v514, %v513
  %v636 = vpack.c.b16 %v516, %v515
  %v637 = vpack.c.b16 %v518, %v517
  %v638 = vpack.c.b16 %v520, %v519
  %v639 = vpack.c.b16 %v522, %v521
  %v640 = vpack.c.b16 %v524, %v523
  %v641 = vpack.c.b16 %v526, %v525
  %v642 = vpack.c.b16 %v528, %v527
  %v643 = vpack.c.b16 %v530, %v529
  %v644 = vpack.c.b16 %v532, %v531
  %v645 = vpack.c.b16 %v534, %v533
  %v646 = vpack.c.b16 %v536, %v535
  %v647 = vpack.c.b16 %v538, %v537
  %v648 = vpack.c.b16 %v540, %v539
  %v649 = vpack.c.b16 %v542, %v541
  %v650 = vpack.c.b16 %v544, %v543
  %v651 = vpack.c.b16 %v546, %v545
  %v652 = vpack.c.b16 %v548, %v547
  %v653 = vpack.c.b16 %v550, %v549
  %v654 = vpack.c.b16 %v552, %v551
  %v655 = vpack.c.b16 %v554, %v553
  %v656 = vpack.c.b16 %v556, %v555
  %v657 = vpack.c.b16 %v558, %v557
  %v658 = vpack.c.b16 %v560, %v559
  %v659 = vpack.c.b16 %v562, %v561
  %v660 = vpack.c.b16 %v564, %v563
  %v661 = vpack.c.b16 %v566, %v565
  %v662 = vpack.c.b16 %v568, %v567
  %v663 = vpack.c.b16 %v570, %v569
  %v664 = vpack.c.b16 %v572, %v571
  %v665 = vpack.c.b16 %v574, %v573
  %v666 = vpack.c.b16 %v576, %v575
  %v667 = vpack.c.b16 %v578, %v577
  %v668 = vpack.c.b16 %v580, %v579
  %v669 = vpack.c.b16 %v582, %v581
  %v670 = vpack.c.b16 %v584, %v583
  %v671 = vpack.c.b16 %v586, %v585
  %v672 = vpack.c.b16 %v588, %v587
  %v673 = vpack.c.b16 %v590, %v589
  %v674 = vpack.c.b16 %v592, %v591
  %v675 = vpack.c.b16 %v594, %v593
  %v676 = vpack.c.b16 %v596, %v595
  %v677 = vpack.c.b16 %v598, %v597
  %v678 = vpack.c.b16 %v600, %v599
  %v679 = vpack.c.b16 %v602, %v601
  %v680 = vpack.c.b16 %v604, %v603
  %v681 = vpack.c.b16 %v606, %v605
  %vm757 = vcmask 392192
  %v759 = vsel %vm757, %v278, 0
  %v762 = vsel %vm757, %v288, 0
  %764 = vmatprep.subr.bf16.mxu0 0
  %765 = vmatpush1.bf16.msra.mxu0 %v614
  %766 = vmatprep.subr.bf16.mxu0 0
  %767 = vmatpush1.bf16.msra.mxu0 %v613
  %768 = vmatprep.subr.bf16.mxu0 0
  %769 = vmatpush1.bf16.msra.mxu0 %v612
  %770 = vmatprep.subr.bf16.mxu0 0
  %771 = vmatpush1.bf16.msra.mxu0 %v611
  %772 = vmatprep.subr.bf16.mxu0 0
  %773 = vmatpush1.bf16.msra.mxu0 %v610
  %774 = vmatprep.subr.bf16.mxu0 0
  %775 = vmatpush1.bf16.msra.mxu0 %v609
  %776 = vmatprep.subr.bf16.mxu0 0
  %777 = vmatpush1.bf16.msra.mxu0 %v608
  %778 = vmatprep.subr.bf16.mxu0 0
  %779 = vmatpush1.bf16.msra.mxu0 %v607
  %780 = vmatprep.subr.bf16.mxu0 0
  %781 = vmatpush2.bf16.msra.mxu0 %v622
  %782 = vmatprep.subr.bf16.mxu0 0
  %783 = vmatpush2.bf16.msra.mxu0 %v621
  %784 = vmatprep.subr.bf16.mxu0 0
  %785 = vmatpush2.bf16.msra.mxu0 %v620
  %786 = vmatprep.subr.bf16.mxu0 0
  %787 = vmatpush2.bf16.msra.mxu0 %v619
  %788 = vmatprep.subr.bf16.mxu0 0
  %789 = vmatpush2.bf16.msra.mxu0 %v618
  %790 = vmatprep.subr.bf16.mxu0 0
  %791 = vmatpush2.bf16.msra.mxu0 %v617
  %792 = vmatprep.subr.bf16.mxu0 0
  %793 = vmatpush2.bf16.msra.mxu0 %v616
  %794 = vmatprep.subr.bf16.mxu0 0
  %795 = vmatpush2.bf16.msra.mxu0 %v615
  %796 = vmatprep.mubr.bf16.mxu0 %v270
  %797 = vmatmul.mubr.bf16.gmra.mxu0 %v269
  %v798 = vpop.f32.mrf.mxu0
  %v799 = vadd.f32 %v192, %v798
  %v800 = vpop.f32.mrf.mxu0
  %v801 = vpop.f32.mrf.mxu0
  %v802 = vadd.f32 %v197, %v801
  %v803 = vpop.f32.mrf.mxu0
  %804 = vmatprep.mubr.bf16.mxu0 %v280
  %805 = vmatmul.mubr.bf16.gmra.mxu0 %v279
  %v806 = vpop.f32.mrf.mxu0
  %v807 = vadd.f32 %v202, %v806
  %v808 = vpop.f32.mrf.mxu0
  %v809 = vpop.f32.mrf.mxu0
  %v810 = vadd.f32 %v207, %v809
  %v811 = vpop.f32.mrf.mxu0
  %812 = vdwg.mxu0
  %813 = vmatprep.subr.bf16.mxu0 0
  %814 = vmatpush1.bf16.msra.mxu0 %v630
  %815 = vmatprep.subr.bf16.mxu0 0
  %816 = vmatpush1.bf16.msra.mxu0 %v629
  %817 = vmatprep.subr.bf16.mxu0 0
  %818 = vmatpush1.bf16.msra.mxu0 %v628
  %819 = vmatprep.subr.bf16.mxu0 0
  %820 = vmatpush1.bf16.msra.mxu0 %v627
  %821 = vmatprep.subr.bf16.mxu0 0
  %822 = vmatpush1.bf16.msra.mxu0 %v626
  %823 = vmatprep.subr.bf16.mxu0 0
  %824 = vmatpush1.bf16.msra.mxu0 %v625
  %825 = vmatprep.subr.bf16.mxu0 0
  %826 = vmatpush1.bf16.msra.mxu0 %v624
  %827 = vmatprep.subr.bf16.mxu0 0
  %828 = vmatpush1.bf16.msra.mxu0 %v623
  %829 = vmatprep.subr.bf16.mxu0 0
  %830 = vmatpush2.bf16.msra.mxu0 %v638
  %831 = vmatprep.subr.bf16.mxu0 0
  %832 = vmatpush2.bf16.msra.mxu0 %v637
  %833 = vmatprep.subr.bf16.mxu0 0
  %834 = vmatpush2.bf16.msra.mxu0 %v636
  %835 = vmatprep.subr.bf16.mxu0 0
  %836 = vmatpush2.bf16.msra.mxu0 %v635
  %837 = vmatprep.subr.bf16.mxu0 0
  %838 = vmatpush2.bf16.msra.mxu0 %v634
  %839 = vmatprep.subr.bf16.mxu0 0
  %840 = vmatpush2.bf16.msra.mxu0 %v633
  %841 = vmatprep.subr.bf16.mxu0 0
  %842 = vmatpush2.bf16.msra.mxu0 %v632
  %843 = vmatprep.subr.bf16.mxu0 0
  %844 = vmatpush2.bf16.msra.mxu0 %v631
  %845 = vmatprep.mubr.bf16.mxu0 %v272
  %846 = vmatmul.mubr.bf16.gmra.mxu0 %v271
  %v847 = vpop.f32.mrf.mxu0
  %v848 = vadd.f32 %v799, %v847
  %v849 = vpop.f32.mrf.mxu0
  %v850 = vpop.f32.mrf.mxu0
  %v851 = vadd.f32 %v802, %v850
  %v852 = vpop.f32.mrf.mxu0
  %853 = vmatprep.mubr.bf16.mxu0 %v282
  %854 = vmatmul.mubr.bf16.gmra.mxu0 %v281
  %v855 = vpop.f32.mrf.mxu0
  %v856 = vadd.f32 %v807, %v855
  %v857 = vpop.f32.mrf.mxu0
  %v858 = vpop.f32.mrf.mxu0
  %v859 = vadd.f32 %v810, %v858
  %v860 = vpop.f32.mrf.mxu0
  %861 = vdwg.mxu0
  %862 = vmatprep.subr.bf16.mxu0 0
  %863 = vmatpush1.bf16.msra.mxu0 %v646
  %864 = vmatprep.subr.bf16.mxu0 0
  %865 = vmatpush1.bf16.msra.mxu0 %v645
  %866 = vmatprep.subr.bf16.mxu0 0
  %867 = vmatpush1.bf16.msra.mxu0 %v644
  %868 = vmatprep.subr.bf16.mxu0 0
  %869 = vmatpush1.bf16.msra.mxu0 %v643
  %870 = vmatprep.subr.bf16.mxu0 0
  %871 = vmatpush1.bf16.msra.mxu0 %v642
  %872 = vmatprep.subr.bf16.mxu0 0
  %873 = vmatpush1.bf16.msra.mxu0 %v641
  %874 = vmatprep.subr.bf16.mxu0 0
  %875 = vmatpush1.bf16.msra.mxu0 %v640
  %876 = vmatprep.subr.bf16.mxu0 0
  %877 = vmatpush1.bf16.msra.mxu0 %v639
  %878 = vmatprep.subr.bf16.mxu0 0
  %879 = vmatpush2.bf16.msra.mxu0 %v654
  %880 = vmatprep.subr.bf16.mxu0 0
  %881 = vmatpush2.bf16.msra.mxu0 %v653
  %882 = vmatprep.subr.bf16.mxu0 0
  %883 = vmatpush2.bf16.msra.mxu0 %v652
  %884 = vmatprep.subr.bf16.mxu0 0
  %885 = vmatpush2.bf16.msra.mxu0 %v651
  %886 = vmatprep.subr.bf16.mxu0 0
  %887 = vmatpush2.bf16.msra.mxu0 %v650
  %888 = vmatprep.subr.bf16.mxu0 0
  %889 = vmatpush2.bf16.msra.mxu0 %v649
  %890 = vmatprep.subr.bf16.mxu0 0
  %891 = vmatpush2.bf16.msra.mxu0 %v648
  %892 = vmatprep.subr.bf16.mxu0 0
  %893 = vmatpush2.bf16.msra.mxu0 %v647
  %894 = vmatprep.mubr.bf16.mxu0 %v274
  %895 = vmatmul.mubr.bf16.gmra.mxu0 %v273
  %v896 = vpop.f32.mrf.mxu0
  %v897 = vadd.f32 %v848, %v896
  %v898 = vpop.f32.mrf.mxu0
  %v899 = vpop.f32.mrf.mxu0
  %v900 = vadd.f32 %v851, %v899
  %v901 = vpop.f32.mrf.mxu0
  %902 = vmatprep.mubr.bf16.mxu0 %v284
  %903 = vmatmul.mubr.bf16.gmra.mxu0 %v283
  %v904 = vpop.f32.mrf.mxu0
  %v905 = vadd.f32 %v856, %v904
  %v906 = vpop.f32.mrf.mxu0
  %v907 = vpop.f32.mrf.mxu0
  %v908 = vadd.f32 %v859, %v907
  %v909 = vpop.f32.mrf.mxu0
  %910 = vdwg.mxu0
  %911 = vmatprep.subr.bf16.mxu0 0
  %912 = vmatpush1.bf16.msra.mxu0 %v662
  %913 = vmatprep.subr.bf16.mxu0 0
  %914 = vmatpush1.bf16.msra.mxu0 %v661
  %915 = vmatprep.subr.bf16.mxu0 0
  %916 = vmatpush1.bf16.msra.mxu0 %v660
  %917 = vmatprep.subr.bf16.mxu0 0
  %918 = vmatpush1.bf16.msra.mxu0 %v659
  %919 = vmatprep.subr.bf16.mxu0 0
  %920 = vmatpush1.bf16.msra.mxu0 %v658
  %921 = vmatprep.subr.bf16.mxu0 0
  %922 = vmatpush1.bf16.msra.mxu0 %v657
  %923 = vmatprep.subr.bf16.mxu0 0
  %924 = vmatpush1.bf16.msra.mxu0 %v656
  %925 = vmatprep.subr.bf16.mxu0 0
  %926 = vmatpush1.bf16.msra.mxu0 %v655
  %927 = vmatprep.subr.bf16.mxu0 0
  %928 = vmatpush2.bf16.msra.mxu0 %v670
  %929 = vmatprep.subr.bf16.mxu0 0
  %930 = vmatpush2.bf16.msra.mxu0 %v669
  %931 = vmatprep.subr.bf16.mxu0 0
  %932 = vmatpush2.bf16.msra.mxu0 %v668
  %933 = vmatprep.subr.bf16.mxu0 0
  %934 = vmatpush2.bf16.msra.mxu0 %v667
  %935 = vmatprep.subr.bf16.mxu0 0
  %936 = vmatpush2.bf16.msra.mxu0 %v666
  %937 = vmatprep.subr.bf16.mxu0 0
  %938 = vmatpush2.bf16.msra.mxu0 %v665
  %939 = vmatprep.subr.bf16.mxu0 0
  %940 = vmatpush2.bf16.msra.mxu0 %v664
  %941 = vmatprep.subr.bf16.mxu0 0
  %942 = vmatpush2.bf16.msra.mxu0 %v663
  %943 = vmatprep.mubr.bf16.mxu0 %v276
  %944 = vmatmul.mubr.bf16.gmra.mxu0 %v275
  %v945 = vpop.f32.mrf.mxu0
  %v946 = vadd.f32 %v897, %v945
  %v947 = vpop.f32.mrf.mxu0
  %v948 = vpop.f32.mrf.mxu0
  %v949 = vadd.f32 %v900, %v948
  %v950 = vpop.f32.mrf.mxu0
  %951 = vmatprep.mubr.bf16.mxu0 %v286
  %952 = vmatmul.mubr.bf16.gmra.mxu0 %v285
  %v953 = vpop.f32.mrf.mxu0
  %v954 = vadd.f32 %v905, %v953
  %v955 = vpop.f32.mrf.mxu0
  %v956 = vpop.f32.mrf.mxu0
  %v957 = vadd.f32 %v908, %v956
  %v958 = vpop.f32.mrf.mxu0
  %959 = vdwg.mxu0
  %960 = vmatprep.subr.bf16.mxu0 0
  %961 = vmatpush1.bf16.msra.mxu0 %v678
  %962 = vmatprep.subr.bf16.mxu0 0
  %963 = vmatpush1.bf16.msra.mxu0 %v677
  %964 = vmatprep.subr.bf16.mxu0 0
  %965 = vmatpush1.bf16.msra.mxu0 %v676
  %966 = vmatprep.subr.bf16.mxu0 0
  %967 = vmatpush1.bf16.msra.mxu0 %v675
  %968 = vmatprep.subr.bf16.mxu0 0
  %969 = vmatpush1.bf16.msra.mxu0 %v674
  %970 = vmatprep.subr.bf16.mxu0 0
  %971 = vmatpush1.bf16.msra.mxu0 %v673
  %972 = vmatprep.subr.bf16.mxu0 0
  %973 = vmatpush1.bf16.msra.mxu0 %v672
  %974 = vmatprep.subr.bf16.mxu0 0
  %975 = vmatpush1.bf16.msra.mxu0 %v671
  %976 = vmatprep.subr.bf16.mxu0 0
  %977 = vmatpush2.bf16.msra.mxu0 0
  %978 = vmatprep.subr.bf16.mxu0 0
  %979 = vmatpush2.bf16.msra.mxu0 0
  %980 = vmatprep.subr.bf16.mxu0 0
  %981 = vmatpush2.bf16.msra.mxu0 0
  %982 = vmatprep.subr.bf16.mxu0 0
  %983 = vmatpush2.bf16.msra.mxu0 0
  %984 = vmatprep.subr.bf16.mxu0 0
  %985 = vmatpush2.bf16.msra.mxu0 0
  %986 = vmatprep.subr.bf16.mxu0 0
  %987 = vmatpush2.bf16.msra.mxu0 %v681
  %988 = vmatprep.subr.bf16.mxu0 0
  %989 = vmatpush2.bf16.msra.mxu0 %v680
  %990 = vmatprep.subr.bf16.mxu0 0
  %991 = vmatpush2.bf16.msra.mxu0 %v679
  %992 = vmatprep.mubr.bf16.mxu0 %v759
  %993 = vmatmul.mubr.bf16.gmra.mxu0 %v277
  %v994 = vpop.f32.mrf.mxu0
  %v995 = vadd.f32 %v946, %v994
  %v996 = vpop.f32.mrf.mxu0
  %v997 = vpop.f32.mrf.mxu0
  %v998 = vadd.f32 %v949, %v997
  %v999 = vpop.f32.mrf.mxu0
  %1000 = vmatprep.mubr.bf16.mxu0 %v762
  %1001 = vmatmul.mubr.bf16.gmra.mxu0 %v287
  %v1002 = vpop.f32.mrf.mxu0
  %v1003 = vadd.f32 %v954, %v1002
  %v1004 = vpop.f32.mrf.mxu0
  %v1005 = vpop.f32.mrf.mxu0
  %v1006 = vadd.f32 %v957, %v1005
  %v1007 = vpop.f32.mrf.mxu0
  %1008 = vdwg.mxu0
  %vm1009 = vcmp.ge.f32.partialorder %v995, 0.0
  %vm1010 = vcmp.ge.f32.partialorder %v998, 0.0
  %vm1011 = vcmp.ge.f32.partialorder %v1003, 0.0
  %vm1012 = vcmp.ge.f32.partialorder %v1006, 0.0
  %v1013 = vmul.f32 %v995, 0.2
  %v1014 = vmul.f32 %v998, 0.2
  %v1015 = vmul.f32 %v1003, 0.2
  %v1016 = vmul.f32 %v1006, 0.2
  %v1017 = vsel %vm1009, %v995, %v1013
  %v1018 = vsel %vm1010, %v998, %v1014
  %v1019 = vsel %vm1011, %v1003, %v1015
  %v1020 = vsel %vm1012, %v1006, %v1016
  %v1021 = vpack.c.bf16 %v1018, %v1017
  %v1022 = vpack.c.bf16 %v1020, %v1019
  %v1025 = vunpack.c.l.b16 %v1021
  %v1026 = vunpack.c.h.b16 %v1021
  %v1027 = vunpack.c.l.b16 %v1022
  %v1028 = vunpack.c.h.b16 %v1022
  %v1029 = vpack.c.b16 %v1025, %v1025
  %v1030 = vpack.c.b16 %v1026, %v1026
  %v1031 = vpack.c.b16 %v1027, %v1027
  %v1032 = vpack.c.b16 %v1028, %v1028
  %1037 = vst [vmem:[%s3] sm:$0xf] %v1029
  %1038 = vst [vmem:[%s3 + $0x4] sm:$0xf] %v1030
  %1039 = vst [vmem:[%s3 + $0x8] sm:$0xf] %v1031
  %1040 = vst [vmem:[%s3 + $0xc] sm:$0xf] %v1032
  // Predicated region
  $region14: #{video_inpainting_model_s.8} parent=0 // pred_check
    _
  $region15: #{video_inpainting_model_s.8} parent=0 // pred_check_branch
    %1042 = sbr.rel (0) target = $region17
  $region16: #{video_inpainting_model_s.8} parent=0 // pred_region
    _
  $region17: #{video_inpainting_model_s.8} parent=0 // pred_fallthru
    _
  // Predicated region
  $region18: #{video_inpainting_model_s.8} parent=0 // pred_check
    _
  $region19: #{video_inpainting_model_s.8} parent=0 // pred_check_branch
    %1044 = sbr.rel (0) target = $region21
  $region20: #{video_inpainting_model_s.8} parent=0 // pred_region
    _
  $region21: #{video_inpainting_model_s.8} parent=0 // pred_fallthru
    _

// kernel: video_inpainting_model_s.9
$region0: #{video_inpainting_model_s.9}
  #allocation0 [shape = 'u32[]', space=smem, size = 0x4, offset = 0x4, fixed_abs, tag = 'smem constant byte address 0x4 - core index']
  #allocation1 [shape = 'u32[144,128]{1,0:T(1,128)}', space=vmem, size = 0x12000, scoped, tag = 'internal scratch']
  %s0 = inlined_call_operand.vmem [shape: bf16[32,2400], index: 0, kind: input, shape index: {}]
  %s1 = inlined_call_operand.vmem [shape: bf16[2400,128], index: 1, kind: input, shape index: {}]
  %s2 = inlined_call_operand.vmem [shape: f32[32,1], index: 2, kind: input, shape index: {}]
  %s3 = inlined_call_operand.vmem [shape: bf16[32,128], index: 3, kind: output, shape index: {}]
  %s4 = sld [smem:[#allocation0]]
  $region22: #{video_inpainting_model_s.9} parent=0
    _
  %s6 = ssub.s32 1, %s4
  %s7 = scalar_select 0, %s6, %s4
  // Predicated region
  $region2: #{video_inpainting_model_s.9} parent=0 // pred_check
    _
  $region3: #{video_inpainting_model_s.9} parent=0 // pred_check_branch
    %9 = sbr.rel (0) target = $region5
  $region4: #{video_inpainting_model_s.9} parent=0 // pred_region
    _
  $region5: #{video_inpainting_model_s.9} parent=0 // pred_fallthru
    _
  // Predicated region
  $region6: #{video_inpainting_model_s.9} parent=0 // pred_check
    _
  $region7: #{video_inpainting_model_s.9} parent=0 // pred_check_branch
    %11 = sbr.rel (0) target = $region9
  $region8: #{video_inpainting_model_s.9} parent=0 // pred_region
    _
  $region9: #{video_inpainting_model_s.9} parent=0 // pred_fallthru
    _
  // Predicated region
  $region10: #{video_inpainting_model_s.9} parent=0 // pred_check
    _
  $region11: #{video_inpainting_model_s.9} parent=0 // pred_check_branch
    %13 = sbr.rel (0) target = $region13
  $region12: #{video_inpainting_model_s.9} parent=0 // pred_region
    _
  $region13: #{video_inpainting_model_s.9} parent=0 // pred_fallthru
    _
  %v15 = vld [vmem:[%s0] sm:$0xff]
  %v16 = vld [vmem:[%s0 + $0x8] sm:$0xff]
  %v17 = vld [vmem:[%s0 + $0x10] sm:$0xff]
  %v18 = vld [vmem:[%s0 + $0x18] sm:$0xff]
  %v19 = vld [vmem:[%s0 + $0x20] sm:$0xff]
  %v20 = vld [vmem:[%s0 + $0x28] sm:$0xff]
  %v21 = vld [vmem:[%s0 + $0x30] sm:$0xff]
  %v22 = vld [vmem:[%s0 + $0x38] sm:$0xff]
  %v23 = vld [vmem:[%s0 + $0x40] sm:$0xff]
  %v24 = vld [vmem:[%s0 + $0x48] sm:$0xf]
  %v25 = vld [vmem:[%s0 + $0x4c] sm:$0xff]
  %v26 = vld [vmem:[%s0 + $0x54] sm:$0xff]
  %v27 = vld [vmem:[%s0 + $0x5c] sm:$0xff]
  %v28 = vld [vmem:[%s0 + $0x64] sm:$0xff]
  %v29 = vld [vmem:[%s0 + $0x6c] sm:$0xff]
  %v30 = vld [vmem:[%s0 + $0x74] sm:$0xff]
  %v31 = vld [vmem:[%s0 + $0x7c] sm:$0xff]
  %v32 = vld [vmem:[%s0 + $0x84] sm:$0xff]
  %v33 = vld [vmem:[%s0 + $0x8c] sm:$0xff]
  %v34 = vld [vmem:[%s0 + $0x94] sm:$0xf]
  %v35 = vld [vmem:[%s0 + $0x98] sm:$0xff]
  %v36 = vld [vmem:[%s0 + $0xa0] sm:$0xff]
  %v37 = vld [vmem:[%s0 + $0xa8] sm:$0xff]
  %v38 = vld [vmem:[%s0 + $0xb0] sm:$0xff]
  %v39 = vld [vmem:[%s0 + $0xb8] sm:$0xff]
  %v40 = vld [vmem:[%s0 + $0xc0] sm:$0xff]
  %v41 = vld [vmem:[%s0 + $0xc8] sm:$0xff]
  %v42 = vld [vmem:[%s0 + $0xd0] sm:$0xff]
  %v43 = vld [vmem:[%s0 + $0xd8] sm:$0xff]
  %v44 = vld [vmem:[%s0 + $0xe0] sm:$0xf]
  %v45 = vld [vmem:[%s0 + $0xe4] sm:$0xff]
  %v46 = vld [vmem:[%s0 + $0xec] sm:$0xff]
  %v47 = vld [vmem:[%s0 + $0xf4] sm:$0xff]
  %v48 = vld [vmem:[%s0 + $0xfc] sm:$0xff]
  %v49 = vld [vmem:[%s0 + $0x104] sm:$0xff]
  %v50 = vld [vmem:[%s0 + $0x10c] sm:$0xff]
  %v51 = vld [vmem:[%s0 + $0x114] sm:$0xff]
  %v52 = vld [vmem:[%s0 + $0x11c] sm:$0xff]
  %v53 = vld [vmem:[%s0 + $0x124] sm:$0xff]
  %v54 = vld [vmem:[%s0 + $0x12c] sm:$0xf]
  %v55 = vld [vmem:[%s1] sm:$0xf]
  %v56 = vld [vmem:[%s1 + $0x4] sm:$0xf]
  %v57 = vld [vmem:[%s1 + $0x8] sm:$0xf]
  %v58 = vld [vmem:[%s1 + $0xc] sm:$0xf]
  %v59 = vld [vmem:[%s1 + $0x10] sm:$0xf]
  %v60 = vld [vmem:[%s1 + $0x14] sm:$0xf]
  %v61 = vld [vmem:[%s1 + $0x18] sm:$0xf]
  %v62 = vld [vmem:[%s1 + $0x1c] sm:$0xf]
  %v63 = vld [vmem:[%s1 + $0x20] sm:$0xf]
  %v64 = vld [vmem:[%s1 + $0x24] sm:$0xf]
  %v65 = vld [vmem:[%s1 + $0x28] sm:$0xf]
  %v66 = vld [vmem:[%s1 + $0x2c] sm:$0xf]
  %v67 = vld [vmem:[%s1 + $0x30] sm:$0xf]
  %v68 = vld [vmem:[%s1 + $0x34] sm:$0xf]
  %v69 = vld [vmem:[%s1 + $0x38] sm:$0xf]
  %v70 = vld [vmem:[%s1 + $0x3c] sm:$0xf]
  %v71 = vld [vmem:[%s1 + $0x40] sm:$0xf]
  %v72 = vld [vmem:[%s1 + $0x44] sm:$0xf]
  %v73 = vld [vmem:[%s1 + $0x48] sm:$0xf]
  %v74 = vld [vmem:[%s1 + $0x4c] sm:$0xf]
  %v75 = vld [vmem:[%s1 + $0x50] sm:$0xf]
  %v76 = vld [vmem:[%s1 + $0x54] sm:$0xf]
  %v77 = vld [vmem:[%s1 + $0x58] sm:$0xf]
  %v78 = vld [vmem:[%s1 + $0x5c] sm:$0xf]
  %v79 = vld [vmem:[%s1 + $0x60] sm:$0xf]
  %v80 = vld [vmem:[%s1 + $0x64] sm:$0xf]
  %v81 = vld [vmem:[%s1 + $0x68] sm:$0xf]
  %v82 = vld [vmem:[%s1 + $0x6c] sm:$0xf]
  %v83 = vld [vmem:[%s1 + $0x70] sm:$0xf]
  %v84 = vld [vmem:[%s1 + $0x74] sm:$0xf]
  %v85 = vld [vmem:[%s1 + $0x78] sm:$0xf]
  %v86 = vld [vmem:[%s1 + $0x7c] sm:$0xf]
  %v87 = vld [vmem:[%s1 + $0x80] sm:$0xf]
  %v88 = vld [vmem:[%s1 + $0x84] sm:$0xf]
  %v89 = vld [vmem:[%s1 + $0x88] sm:$0xf]
  %v90 = vld [vmem:[%s1 + $0x8c] sm:$0xf]
  %v91 = vld [vmem:[%s1 + $0x90] sm:$0xf]
  %v92 = vld [vmem:[%s1 + $0x94] sm:$0xf]
  %v93 = vld [vmem:[%s1 + $0x98] sm:$0xf]
  %v94 = vld [vmem:[%s1 + $0x9c] sm:$0xf]
  %v95 = vld [vmem:[%s1 + $0xa0] sm:$0xf]
  %v96 = vld [vmem:[%s1 + $0xa4] sm:$0xf]
  %v97 = vld [vmem:[%s1 + $0xa8] sm:$0xf]
  %v98 = vld [vmem:[%s1 + $0xac] sm:$0xf]
  %v99 = vld [vmem:[%s1 + $0xb0] sm:$0xf]
  %v100 = vld [vmem:[%s1 + $0xb4] sm:$0xf]
  %v101 = vld [vmem:[%s1 + $0xb8] sm:$0xf]
  %v102 = vld [vmem:[%s1 + $0xbc] sm:$0xf]
  %v103 = vld [vmem:[%s1 + $0xc0] sm:$0xf]
  %v104 = vld [vmem:[%s1 + $0xc4] sm:$0xf]
  %v105 = vld [vmem:[%s1 + $0xc8] sm:$0xf]
  %v106 = vld [vmem:[%s1 + $0xcc] sm:$0xf]
  %v107 = vld [vmem:[%s1 + $0xd0] sm:$0xf]
  %v108 = vld [vmem:[%s1 + $0xd4] sm:$0xf]
  %v109 = vld [vmem:[%s1 + $0xd8] sm:$0xf]
  %v110 = vld [vmem:[%s1 + $0xdc] sm:$0xf]
  %v111 = vld [vmem:[%s1 + $0xe0] sm:$0xf]
  %v112 = vld [vmem:[%s1 + $0xe4] sm:$0xf]
  %v113 = vld [vmem:[%s1 + $0xe8] sm:$0xf]
  %v114 = vld [vmem:[%s1 + $0xec] sm:$0xf]
  %v115 = vld [vmem:[%s1 + $0xf0] sm:$0xf]
  %v116 = vld [vmem:[%s1 + $0xf4] sm:$0xf]
  %v117 = vld [vmem:[%s1 + $0xf8] sm:$0xf]
  %v118 = vld [vmem:[%s1 + $0xfc] sm:$0xf]
  %v119 = vld [vmem:[%s1 + $0x100] sm:$0xf]
  %v120 = vld [vmem:[%s1 + $0x104] sm:$0xf]
  %v121 = vld [vmem:[%s1 + $0x108] sm:$0xf]
  %v122 = vld [vmem:[%s1 + $0x10c] sm:$0xf]
  %v123 = vld [vmem:[%s1 + $0x110] sm:$0xf]
  %v124 = vld [vmem:[%s1 + $0x114] sm:$0xf]
  %v125 = vld [vmem:[%s1 + $0x118] sm:$0xf]
  %v126 = vld [vmem:[%s1 + $0x11c] sm:$0xf]
  %v127 = vld [vmem:[%s1 + $0x120] sm:$0xf]
  %v128 = vld [vmem:[%s1 + $0x124] sm:$0xf]
  %v129 = vld [vmem:[%s1 + $0x128] sm:$0xf]
  %v130 = vld [vmem:[%s1 + $0x12c] sm:$0xf]
  %v131 = vld [vmem:[%s1 + $0x130] sm:$0xf]
  %v132 = vld [vmem:[%s1 + $0x134] sm:$0xf]
  %v133 = vld [vmem:[%s1 + $0x138] sm:$0xf]
  %v134 = vld [vmem:[%s1 + $0x13c] sm:$0xf]
  %v135 = vld [vmem:[%s1 + $0x140] sm:$0xf]
  %v136 = vld [vmem:[%s1 + $0x144] sm:$0xf]
  %v137 = vld [vmem:[%s1 + $0x148] sm:$0xf]
  %v138 = vld [vmem:[%s1 + $0x14c] sm:$0xf]
  %v139 = vld [vmem:[%s1 + $0x150] sm:$0xf]
  %v140 = vld [vmem:[%s1 + $0x154] sm:$0xf]
  %v141 = vld [vmem:[%s1 + $0x158] sm:$0xf]
  %v142 = vld [vmem:[%s1 + $0x15c] sm:$0xf]
  %v143 = vld [vmem:[%s1 + $0x160] sm:$0xf]
  %v144 = vld [vmem:[%s1 + $0x164] sm:$0xf]
  %v145 = vld [vmem:[%s1 + $0x168] sm:$0xf]
  %v146 = vld [vmem:[%s1 + $0x16c] sm:$0xf]
  %v147 = vld [vmem:[%s1 + $0x170] sm:$0xf]
  %v148 = vld [vmem:[%s1 + $0x174] sm:$0xf]
  %v149 = vld [vmem:[%s1 + $0x178] sm:$0xf]
  %v150 = vld [vmem:[%s1 + $0x17c] sm:$0xf]
  %v151 = vld [vmem:[%s1 + $0x180] sm:$0xf]
  %v152 = vld [vmem:[%s1 + $0x184] sm:$0xf]
  %v153 = vld [vmem:[%s1 + $0x188] sm:$0xf]
  %v154 = vld [vmem:[%s1 + $0x18c] sm:$0xf]
  %v155 = vld [vmem:[%s1 + $0x190] sm:$0xf]
  %v156 = vld [vmem:[%s1 + $0x194] sm:$0xf]
  %v157 = vld [vmem:[%s1 + $0x198] sm:$0xf]
  %v158 = vld [vmem:[%s1 + $0x19c] sm:$0xf]
  %v159 = vld [vmem:[%s1 + $0x1a0] sm:$0xf]
  %v160 = vld [vmem:[%s1 + $0x1a4] sm:$0xf]
  %v161 = vld [vmem:[%s1 + $0x1a8] sm:$0xf]
  %v162 = vld [vmem:[%s1 + $0x1ac] sm:$0xf]
  %v163 = vld [vmem:[%s1 + $0x1b0] sm:$0xf]
  %v164 = vld [vmem:[%s1 + $0x1b4] sm:$0xf]
  %v165 = vld [vmem:[%s1 + $0x1b8] sm:$0xf]
  %v166 = vld [vmem:[%s1 + $0x1bc] sm:$0xf]
  %v167 = vld [vmem:[%s1 + $0x1c0] sm:$0xf]
  %v168 = vld [vmem:[%s1 + $0x1c4] sm:$0xf]
  %v169 = vld [vmem:[%s1 + $0x1c8] sm:$0xf]
  %v170 = vld [vmem:[%s1 + $0x1cc] sm:$0xf]
  %v171 = vld [vmem:[%s1 + $0x1d0] sm:$0xf]
  %v172 = vld [vmem:[%s1 + $0x1d4] sm:$0xf]
  %v173 = vld [vmem:[%s1 + $0x1d8] sm:$0xf]
  %v174 = vld [vmem:[%s1 + $0x1dc] sm:$0xf]
  %v175 = vld [vmem:[%s1 + $0x1e0] sm:$0xf]
  %v176 = vld [vmem:[%s1 + $0x1e4] sm:$0xf]
  %v177 = vld [vmem:[%s1 + $0x1e8] sm:$0xf]
  %v178 = vld [vmem:[%s1 + $0x1ec] sm:$0xf]
  %v179 = vld [vmem:[%s1 + $0x1f0] sm:$0xf]
  %v180 = vld [vmem:[%s1 + $0x1f4] sm:$0xf]
  %v181 = vld [vmem:[%s1 + $0x1f8] sm:$0xf]
  %v182 = vld [vmem:[%s1 + $0x1fc] sm:$0xf]
  %v183 = vld [vmem:[%s1 + $0x200] sm:$0xf]
  %v184 = vld [vmem:[%s1 + $0x204] sm:$0xf]
  %v185 = vld [vmem:[%s1 + $0x208] sm:$0xf]
  %v186 = vld [vmem:[%s1 + $0x20c] sm:$0xf]
  %v187 = vld [vmem:[%s1 + $0x210] sm:$0xf]
  %v188 = vld [vmem:[%s1 + $0x214] sm:$0xf]
  %v189 = vld [vmem:[%s1 + $0x218] sm:$0xf]
  %v190 = vld [vmem:[%s1 + $0x21c] sm:$0xf]
  %v191 = vld [vmem:[%s1 + $0x220] sm:$0xf]
  %v192 = vld [vmem:[%s1 + $0x224] sm:$0xf]
  %v193 = vld [vmem:[%s1 + $0x228] sm:$0xf]
  %v194 = vld [vmem:[%s1 + $0x22c] sm:$0xf]
  %v195 = vld [vmem:[%s1 + $0x230] sm:$0xf]
  %v196 = vld [vmem:[%s1 + $0x234] sm:$0xf]
  %v197 = vld [vmem:[%s1 + $0x238] sm:$0xf]
  %v198 = vld [vmem:[%s1 + $0x23c] sm:$0xf]
  %v199 = vld [vmem:[%s1 + $0x240] sm:$0xf]
  %v200 = vld [vmem:[%s1 + $0x244] sm:$0xf]
  %v201 = vld [vmem:[%s1 + $0x248] sm:$0xf]
  %v202 = vld [vmem:[%s1 + $0x24c] sm:$0xf]
  %v203 = vld [vmem:[%s1 + $0x250] sm:$0xf]
  %v204 = vld [vmem:[%s1 + $0x254] sm:$0xf]
  %v205 = vld [vmem:[%s1 + $0x258] sm:$0xf]
  %v206 = vld [vmem:[%s1 + $0x25c] sm:$0xf]
  %v207 = vld [vmem:[%s1 + $0x260] sm:$0xf]
  %v208 = vld [vmem:[%s1 + $0x264] sm:$0xf]
  %v209 = vld [vmem:[%s1 + $0x268] sm:$0xf]
  %v210 = vld [vmem:[%s1 + $0x26c] sm:$0xf]
  %v211 = vld [vmem:[%s1 + $0x270] sm:$0xf]
  %v212 = vld [vmem:[%s1 + $0x274] sm:$0xf]
  %v213 = vld [vmem:[%s1 + $0x278] sm:$0xf]
  %v214 = vld [vmem:[%s1 + $0x27c] sm:$0xf]
  %v215 = vld [vmem:[%s1 + $0x280] sm:$0xf]
  %v216 = vld [vmem:[%s1 + $0x284] sm:$0xf]
  %v217 = vld [vmem:[%s1 + $0x288] sm:$0xf]
  %v218 = vld [vmem:[%s1 + $0x28c] sm:$0xf]
  %v219 = vld [vmem:[%s1 + $0x290] sm:$0xf]
  %v220 = vld [vmem:[%s1 + $0x294] sm:$0xf]
  %v221 = vld [vmem:[%s1 + $0x298] sm:$0xf]
  %v222 = vld [vmem:[%s1 + $0x29c] sm:$0xf]
  %v223 = vld [vmem:[%s1 + $0x2a0] sm:$0xf]
  %v224 = vld [vmem:[%s1 + $0x2a4] sm:$0xf]
  %v225 = vld [vmem:[%s1 + $0x2a8] sm:$0xf]
  %v226 = vld [vmem:[%s1 + $0x2ac] sm:$0xf]
  %v227 = vld [vmem:[%s1 + $0x2b0] sm:$0xf]
  %v228 = vld [vmem:[%s1 + $0x2b4] sm:$0xf]
  %v229 = vld [vmem:[%s1 + $0x2b8] sm:$0xf]
  %v230 = vld [vmem:[%s1 + $0x2bc] sm:$0xf]
  %v231 = vld [vmem:[%s1 + $0x2c0] sm:$0xf]
  %v232 = vld [vmem:[%s1 + $0x2c4] sm:$0xf]
  %v233 = vld [vmem:[%s1 + $0x2c8] sm:$0xf]
  %v234 = vld [vmem:[%s1 + $0x2cc] sm:$0xf]
  %v235 = vld [vmem:[%s1 + $0x2d0] sm:$0xf]
  %v236 = vld [vmem:[%s1 + $0x2d4] sm:$0xf]
  %v237 = vld [vmem:[%s1 + $0x2d8] sm:$0xf]
  %v238 = vld [vmem:[%s1 + $0x2dc] sm:$0xf]
  %v239 = vld [vmem:[%s1 + $0x2e0] sm:$0xf]
  %v240 = vld [vmem:[%s1 + $0x2e4] sm:$0xf]
  %v241 = vld [vmem:[%s1 + $0x2e8] sm:$0xf]
  %v242 = vld [vmem:[%s1 + $0x2ec] sm:$0xf]
  %v243 = vld [vmem:[%s1 + $0x2f0] sm:$0xf]
  %v244 = vld [vmem:[%s1 + $0x2f4] sm:$0xf]
  %v245 = vld [vmem:[%s1 + $0x2f8] sm:$0xf]
  %v246 = vld [vmem:[%s1 + $0x2fc] sm:$0xf]
  %v247 = vld [vmem:[%s1 + $0x300] sm:$0xf]
  %v248 = vld [vmem:[%s1 + $0x304] sm:$0xf]
  %v249 = vld [vmem:[%s1 + $0x308] sm:$0xf]
  %v250 = vld [vmem:[%s1 + $0x30c] sm:$0xf]
  %v251 = vld [vmem:[%s1 + $0x310] sm:$0xf]
  %v252 = vld [vmem:[%s1 + $0x314] sm:$0xf]
  %v253 = vld [vmem:[%s1 + $0x318] sm:$0xf]
  %v254 = vld [vmem:[%s1 + $0x31c] sm:$0xf]
  %v255 = vld [vmem:[%s1 + $0x320] sm:$0xf]
  %v256 = vld [vmem:[%s1 + $0x324] sm:$0xf]
  %v257 = vld [vmem:[%s1 + $0x328] sm:$0xf]
  %v258 = vld [vmem:[%s1 + $0x32c] sm:$0xf]
  %v259 = vld [vmem:[%s1 + $0x330] sm:$0xf]
  %v260 = vld [vmem:[%s1 + $0x334] sm:$0xf]
  %v261 = vld [vmem:[%s1 + $0x338] sm:$0xf]
  %v262 = vld [vmem:[%s1 + $0x33c] sm:$0xf]
  %v263 = vld [vmem:[%s1 + $0x340] sm:$0xf]
  %v264 = vld [vmem:[%s1 + $0x344] sm:$0xf]
  %v265 = vld [vmem:[%s1 + $0x348] sm:$0xf]
  %v266 = vld [vmem:[%s1 + $0x34c] sm:$0xf]
  %v267 = vld [vmem:[%s1 + $0x350] sm:$0xf]
  %v268 = vld [vmem:[%s1 + $0x354] sm:$0xf]
  %v269 = vld [vmem:[%s1 + $0x358] sm:$0xf]
  %v270 = vld [vmem:[%s1 + $0x35c] sm:$0xf]
  %v271 = vld [vmem:[%s1 + $0x360] sm:$0xf]
  %v272 = vld [vmem:[%s1 + $0x364] sm:$0xf]
  %v273 = vld [vmem:[%s1 + $0x368] sm:$0xf]
  %v274 = vld [vmem:[%s1 + $0x36c] sm:$0xf]
  %v275 = vld [vmem:[%s1 + $0x370] sm:$0xf]
  %v276 = vld [vmem:[%s1 + $0x374] sm:$0xf]
  %v277 = vld [vmem:[%s1 + $0x378] sm:$0xf]
  %v278 = vld [vmem:[%s1 + $0x37c] sm:$0xf]
  %v279 = vld [vmem:[%s1 + $0x380] sm:$0xf]
  %v280 = vld [vmem:[%s1 + $0x384] sm:$0xf]
  %v281 = vld [vmem:[%s1 + $0x388] sm:$0xf]
  %v282 = vld [vmem:[%s1 + $0x38c] sm:$0xf]
  %v283 = vld [vmem:[%s1 + $0x390] sm:$0xf]
  %v284 = vld [vmem:[%s1 + $0x394] sm:$0xf]
  %v285 = vld [vmem:[%s1 + $0x398] sm:$0xf]
  %v286 = vld [vmem:[%s1 + $0x39c] sm:$0xf]
  %v287 = vld [vmem:[%s1 + $0x3a0] sm:$0xf]
  %v288 = vld [vmem:[%s1 + $0x3a4] sm:$0xf]
  %v289 = vld [vmem:[%s1 + $0x3a8] sm:$0xf]
  %v290 = vld [vmem:[%s1 + $0x3ac] sm:$0xf]
  %v291 = vld [vmem:[%s1 + $0x3b0] sm:$0xf]
  %v292 = vld [vmem:[%s1 + $0x3b4] sm:$0xf]
  %v293 = vld [vmem:[%s1 + $0x3b8] sm:$0xf]
  %v294 = vld [vmem:[%s1 + $0x3bc] sm:$0xf]
  %v295 = vld [vmem:[%s1 + $0x3c0] sm:$0xf]
  %v296 = vld [vmem:[%s1 + $0x3c4] sm:$0xf]
  %v297 = vld [vmem:[%s1 + $0x3c8] sm:$0xf]
  %v298 = vld [vmem:[%s1 + $0x3cc] sm:$0xf]
  %v299 = vld [vmem:[%s1 + $0x3d0] sm:$0xf]
  %v300 = vld [vmem:[%s1 + $0x3d4] sm:$0xf]
  %v301 = vld [vmem:[%s1 + $0x3d8] sm:$0xf]
  %v302 = vld [vmem:[%s1 + $0x3dc] sm:$0xf]
  %v303 = vld [vmem:[%s1 + $0x3e0] sm:$0xf]
  %v304 = vld [vmem:[%s1 + $0x3e4] sm:$0xf]
  %v305 = vld [vmem:[%s1 + $0x3e8] sm:$0xf]
  %v306 = vld [vmem:[%s1 + $0x3ec] sm:$0xf]
  %v307 = vld [vmem:[%s1 + $0x3f0] sm:$0xf]
  %v308 = vld [vmem:[%s1 + $0x3f4] sm:$0xf]
  %v309 = vld [vmem:[%s1 + $0x3f8] sm:$0xf]
  %v310 = vld [vmem:[%s1 + $0x3fc] sm:$0xf]
  %v311 = vld [vmem:[%s1 + $0x400] sm:$0xf]
  %v312 = vld [vmem:[%s1 + $0x404] sm:$0xf]
  %v313 = vld [vmem:[%s1 + $0x408] sm:$0xf]
  %v314 = vld [vmem:[%s1 + $0x40c] sm:$0xf]
  %v315 = vld [vmem:[%s1 + $0x410] sm:$0xf]
  %v316 = vld [vmem:[%s1 + $0x414] sm:$0xf]
  %v317 = vld [vmem:[%s1 + $0x418] sm:$0xf]
  %v318 = vld [vmem:[%s1 + $0x41c] sm:$0xf]
  %v319 = vld [vmem:[%s1 + $0x420] sm:$0xf]
  %v320 = vld [vmem:[%s1 + $0x424] sm:$0xf]
  %v321 = vld [vmem:[%s1 + $0x428] sm:$0xf]
  %v322 = vld [vmem:[%s1 + $0x42c] sm:$0xf]
  %v323 = vld [vmem:[%s1 + $0x430] sm:$0xf]
  %v324 = vld [vmem:[%s1 + $0x434] sm:$0xf]
  %v325 = vld [vmem:[%s1 + $0x438] sm:$0xf]
  %v326 = vld [vmem:[%s1 + $0x43c] sm:$0xf]
  %v327 = vld [vmem:[%s1 + $0x440] sm:$0xf]
  %v328 = vld [vmem:[%s1 + $0x444] sm:$0xf]
  %v329 = vld [vmem:[%s1 + $0x448] sm:$0xf]
  %v330 = vld [vmem:[%s1 + $0x44c] sm:$0xf]
  %v331 = vld [vmem:[%s1 + $0x450] sm:$0xf]
  %v332 = vld [vmem:[%s1 + $0x454] sm:$0xf]
  %v333 = vld [vmem:[%s1 + $0x458] sm:$0xf]
  %v334 = vld [vmem:[%s1 + $0x45c] sm:$0xf]
  %v335 = vld [vmem:[%s1 + $0x460] sm:$0xf]
  %v336 = vld [vmem:[%s1 + $0x464] sm:$0xf]
  %v337 = vld [vmem:[%s1 + $0x468] sm:$0xf]
  %v338 = vld [vmem:[%s1 + $0x46c] sm:$0xf]
  %v339 = vld [vmem:[%s1 + $0x470] sm:$0xf]
  %v340 = vld [vmem:[%s1 + $0x474] sm:$0xf]
  %v341 = vld [vmem:[%s1 + $0x478] sm:$0xf]
  %v342 = vld [vmem:[%s1 + $0x47c] sm:$0xf]
  %v343 = vld [vmem:[%s1 + $0x480] sm:$0xf]
  %v344 = vld [vmem:[%s1 + $0x484] sm:$0xf]
  %v345 = vld [vmem:[%s1 + $0x488] sm:$0xf]
  %v346 = vld [vmem:[%s1 + $0x48c] sm:$0xf]
  %v347 = vld [vmem:[%s1 + $0x490] sm:$0xf]
  %v348 = vld [vmem:[%s1 + $0x494] sm:$0xf]
  %v349 = vld [vmem:[%s1 + $0x498] sm:$0xf]
  %v350 = vld [vmem:[%s1 + $0x49c] sm:$0xf]
  %v351 = vld [vmem:[%s1 + $0x4a0] sm:$0xf]
  %v352 = vld [vmem:[%s1 + $0x4a4] sm:$0xf]
  %v353 = vld [vmem:[%s1 + $0x4a8] sm:$0xf]
  %v354 = vld [vmem:[%s1 + $0x4ac] sm:$0xf]
  %v355 = vld [vmem:[%s2] sm:$0xff]
  %v356 = vld [vmem:[%s2 + $0x8] sm:$0xff]
  %v357 = vld [vmem:[%s2 + $0x10] sm:$0xff]
  %v358 = vld [vmem:[%s2 + $0x18] sm:$0xff]
  %360 = vset.pattern.permute.xlu0 0
  %361 = vperm.xlu0 %360, %v355
  %v362 = vpop.permute.xlu0 %361
  %365 = vset.pattern.permute.xlu0 0
  %366 = vperm.xlu0 %365, %v356
  %v367 = vpop.permute.xlu0 %366
  %370 = vset.pattern.permute.xlu0 0
  %371 = vperm.xlu0 %370, %v357
  %v372 = vpop.permute.xlu0 %371
  %375 = vset.pattern.permute.xlu0 0
  %376 = vperm.xlu0 %375, %v358
  %v377 = vpop.permute.xlu0 %376
  %v419 = vunpack.c.l.b16 %v15
  %v420 = vunpack.c.h.b16 %v15
  %v421 = vunpack.c.l.b16 %v16
  %v422 = vunpack.c.h.b16 %v16
  %v423 = vunpack.c.l.b16 %v17
  %v424 = vunpack.c.h.b16 %v17
  %v425 = vunpack.c.l.b16 %v18
  %v426 = vunpack.c.h.b16 %v18
  %v427 = vunpack.c.l.b16 %v19
  %v428 = vunpack.c.h.b16 %v19
  %v429 = vunpack.c.l.b16 %v20
  %v430 = vunpack.c.h.b16 %v20
  %v431 = vunpack.c.l.b16 %v21
  %v432 = vunpack.c.h.b16 %v21
  %v433 = vunpack.c.l.b16 %v22
  %v434 = vunpack.c.h.b16 %v22
  %v435 = vunpack.c.l.b16 %v23
  %v436 = vunpack.c.h.b16 %v23
  %v437 = vunpack.c.l.b16 %v24
  %v438 = vunpack.c.l.b16 %v25
  %v439 = vunpack.c.h.b16 %v25
  %v440 = vunpack.c.l.b16 %v26
  %v441 = vunpack.c.h.b16 %v26
  %v442 = vunpack.c.l.b16 %v27
  %v443 = vunpack.c.h.b16 %v27
  %v444 = vunpack.c.l.b16 %v28
  %v445 = vunpack.c.h.b16 %v28
  %v446 = vunpack.c.l.b16 %v29
  %v447 = vunpack.c.h.b16 %v29
  %v448 = vunpack.c.l.b16 %v30
  %v449 = vunpack.c.h.b16 %v30
  %v450 = vunpack.c.l.b16 %v31
  %v451 = vunpack.c.h.b16 %v31
  %v452 = vunpack.c.l.b16 %v32
  %v453 = vunpack.c.h.b16 %v32
  %v454 = vunpack.c.l.b16 %v33
  %v455 = vunpack.c.h.b16 %v33
  %v456 = vunpack.c.l.b16 %v34
  %v457 = vunpack.c.l.b16 %v35
  %v458 = vunpack.c.h.b16 %v35
  %v459 = vunpack.c.l.b16 %v36
  %v460 = vunpack.c.h.b16 %v36
  %v461 = vunpack.c.l.b16 %v37
  %v462 = vunpack.c.h.b16 %v37
  %v463 = vunpack.c.l.b16 %v38
  %v464 = vunpack.c.h.b16 %v38
  %v465 = vunpack.c.l.b16 %v39
  %v466 = vunpack.c.h.b16 %v39
  %v467 = vunpack.c.l.b16 %v40
  %v468 = vunpack.c.h.b16 %v40
  %v469 = vunpack.c.l.b16 %v41
  %v470 = vunpack.c.h.b16 %v41
  %v471 = vunpack.c.l.b16 %v42
  %v472 = vunpack.c.h.b16 %v42
  %v473 = vunpack.c.l.b16 %v43
  %v474 = vunpack.c.h.b16 %v43
  %v475 = vunpack.c.l.b16 %v44
  %v476 = vunpack.c.l.b16 %v45
  %v477 = vunpack.c.h.b16 %v45
  %v478 = vunpack.c.l.b16 %v46
  %v479 = vunpack.c.h.b16 %v46
  %v480 = vunpack.c.l.b16 %v47
  %v481 = vunpack.c.h.b16 %v47
  %v482 = vunpack.c.l.b16 %v48
  %v483 = vunpack.c.h.b16 %v48
  %v484 = vunpack.c.l.b16 %v49
  %v485 = vunpack.c.h.b16 %v49
  %v486 = vunpack.c.l.b16 %v50
  %v487 = vunpack.c.h.b16 %v50
  %v488 = vunpack.c.l.b16 %v51
  %v489 = vunpack.c.h.b16 %v51
  %v490 = vunpack.c.l.b16 %v52
  %v491 = vunpack.c.h.b16 %v52
  %v492 = vunpack.c.l.b16 %v53
  %v493 = vunpack.c.h.b16 %v53
  %v494 = vunpack.c.l.b16 %v54
  %v495 = vpack.c.b16 %v438, %v419
  %v496 = vpack.c.b16 %v439, %v420
  %v497 = vpack.c.b16 %v440, %v421
  %v498 = vpack.c.b16 %v441, %v422
  %v499 = vpack.c.b16 %v442, %v423
  %v500 = vpack.c.b16 %v443, %v424
  %v501 = vpack.c.b16 %v444, %v425
  %v502 = vpack.c.b16 %v445, %v426
  %v503 = vpack.c.b16 %v446, %v427
  %v504 = vpack.c.b16 %v447, %v428
  %v505 = vpack.c.b16 %v448, %v429
  %v506 = vpack.c.b16 %v449, %v430
  %v507 = vpack.c.b16 %v450, %v431
  %v508 = vpack.c.b16 %v451, %v432
  %v509 = vpack.c.b16 %v452, %v433
  %v510 = vpack.c.b16 %v453, %v434
  %v511 = vpack.c.b16 %v454, %v435
  %v512 = vpack.c.b16 %v455, %v436
  %v513 = vpack.c.b16 %v456, %v437
  %v514 = vpack.c.b16 %v476, %v457
  %v515 = vpack.c.b16 %v477, %v458
  %v516 = vpack.c.b16 %v478, %v459
  %v517 = vpack.c.b16 %v479, %v460
  %v518 = vpack.c.b16 %v480, %v461
  %v519 = vpack.c.b16 %v481, %v462
  %v520 = vpack.c.b16 %v482, %v463
  %v521 = vpack.c.b16 %v483, %v464
  %v522 = vpack.c.b16 %v484, %v465
  %v523 = vpack.c.b16 %v485, %v466
  %v524 = vpack.c.b16 %v486, %v467
  %v525 = vpack.c.b16 %v487, %v468
  %v526 = vpack.c.b16 %v488, %v469
  %v527 = vpack.c.b16 %v489, %v470
  %v528 = vpack.c.b16 %v490, %v471
  %v529 = vpack.c.b16 %v491, %v472
  %v530 = vpack.c.b16 %v492, %v473
  %v531 = vpack.c.b16 %v493, %v474
  %v532 = vpack.c.b16 %v494, %v475
  %v869 = vunpack.c.l.b16 %v55
  %v870 = vunpack.c.l.b16 %v56
  %v871 = vunpack.c.l.b16 %v57
  %v872 = vunpack.c.l.b16 %v58
  %v873 = vunpack.c.l.b16 %v59
  %v874 = vunpack.c.l.b16 %v60
  %v875 = vunpack.c.l.b16 %v61
  %v876 = vunpack.c.l.b16 %v62
  %v877 = vunpack.c.l.b16 %v63
  %v878 = vunpack.c.l.b16 %v64
  %v879 = vunpack.c.l.b16 %v65
  %v880 = vunpack.c.l.b16 %v66
  %v881 = vunpack.c.l.b16 %v67
  %v882 = vunpack.c.l.b16 %v68
  %v883 = vunpack.c.l.b16 %v69
  %v884 = vunpack.c.l.b16 %v70
  %v885 = vunpack.c.l.b16 %v71
  %v886 = vunpack.c.l.b16 %v72
  %v887 = vunpack.c.l.b16 %v73
  %v888 = vunpack.c.l.b16 %v74
  %v889 = vunpack.c.l.b16 %v75
  %v890 = vunpack.c.l.b16 %v76
  %v891 = vunpack.c.l.b16 %v77
  %v892 = vunpack.c.l.b16 %v78
  %v893 = vunpack.c.l.b16 %v79
  %v894 = vunpack.c.l.b16 %v80
  %v895 = vunpack.c.l.b16 %v81
  %v896 = vunpack.c.l.b16 %v82
  %v897 = vunpack.c.l.b16 %v83
  %v898 = vunpack.c.l.b16 %v84
  %v899 = vunpack.c.l.b16 %v85
  %v900 = vunpack.c.l.b16 %v86
  %v901 = vunpack.c.l.b16 %v87
  %v902 = vunpack.c.l.b16 %v88
  %v903 = vunpack.c.l.b16 %v89
  %v904 = vunpack.c.l.b16 %v90
  %v905 = vunpack.c.l.b16 %v91
  %v906 = vunpack.c.l.b16 %v92
  %v907 = vunpack.c.l.b16 %v93
  %v908 = vunpack.c.l.b16 %v94
  %v909 = vunpack.c.l.b16 %v95
  %v910 = vunpack.c.l.b16 %v96
  %v911 = vunpack.c.l.b16 %v97
  %v912 = vunpack.c.l.b16 %v98
  %v913 = vunpack.c.l.b16 %v99
  %v914 = vunpack.c.l.b16 %v100
  %v915 = vunpack.c.l.b16 %v101
  %v916 = vunpack.c.l.b16 %v102
  %v917 = vunpack.c.l.b16 %v103
  %v918 = vunpack.c.l.b16 %v104
  %v919 = vunpack.c.l.b16 %v105
  %v920 = vunpack.c.l.b16 %v106
  %v921 = vunpack.c.l.b16 %v107
  %v922 = vunpack.c.l.b16 %v108
  %v923 = vunpack.c.l.b16 %v109
  %v924 = vunpack.c.l.b16 %v110
  %v925 = vunpack.c.l.b16 %v111
  %v926 = vunpack.c.l.b16 %v112
  %v927 = vunpack.c.l.b16 %v113
  %v928 = vunpack.c.l.b16 %v114
  %v929 = vunpack.c.l.b16 %v115
  %v930 = vunpack.c.l.b16 %v116
  %v931 = vunpack.c.l.b16 %v117
  %v932 = vunpack.c.l.b16 %v118
  %v933 = vunpack.c.l.b16 %v119
  %v934 = vunpack.c.l.b16 %v120
  %v935 = vunpack.c.l.b16 %v121
  %v936 = vunpack.c.l.b16 %v122
  %v937 = vunpack.c.l.b16 %v123
  %v938 = vunpack.c.l.b16 %v124
  %v939 = vunpack.c.l.b16 %v125
  %v940 = vunpack.c.l.b16 %v126
  %v941 = vunpack.c.l.b16 %v127
  %v942 = vunpack.c.l.b16 %v128
  %v943 = vunpack.c.l.b16 %v129
  %v944 = vunpack.c.l.b16 %v130
  %v945 = vunpack.c.l.b16 %v131
  %v946 = vunpack.c.l.b16 %v132
  %v947 = vunpack.c.l.b16 %v133
  %v948 = vunpack.c.l.b16 %v134
  %v949 = vunpack.c.l.b16 %v135
  %v950 = vunpack.c.l.b16 %v136
  %v951 = vunpack.c.l.b16 %v137
  %v952 = vunpack.c.l.b16 %v138
  %v953 = vunpack.c.l.b16 %v139
  %v954 = vunpack.c.l.b16 %v140
  %v955 = vunpack.c.l.b16 %v141
  %v956 = vunpack.c.l.b16 %v142
  %v957 = vunpack.c.l.b16 %v143
  %v958 = vunpack.c.l.b16 %v144
  %v959 = vunpack.c.l.b16 %v145
  %v960 = vunpack.c.l.b16 %v146
  %v961 = vunpack.c.l.b16 %v147
  %v962 = vunpack.c.l.b16 %v148
  %v963 = vunpack.c.l.b16 %v149
  %v964 = vunpack.c.l.b16 %v150
  %v965 = vunpack.c.l.b16 %v151
  %v966 = vunpack.c.l.b16 %v152
  %v967 = vunpack.c.l.b16 %v153
  %v968 = vunpack.c.l.b16 %v154
  %v969 = vunpack.c.l.b16 %v155
  %v970 = vunpack.c.l.b16 %v156
  %v971 = vunpack.c.l.b16 %v157
  %v972 = vunpack.c.l.b16 %v158
  %v973 = vunpack.c.l.b16 %v159
  %v974 = vunpack.c.l.b16 %v160
  %v975 = vunpack.c.l.b16 %v161
  %v976 = vunpack.c.l.b16 %v162
  %v977 = vunpack.c.l.b16 %v163
  %v978 = vunpack.c.l.b16 %v164
  %v979 = vunpack.c.l.b16 %v165
  %v980 = vunpack.c.l.b16 %v166
  %v981 = vunpack.c.l.b16 %v167
  %v982 = vunpack.c.l.b16 %v168
  %v983 = vunpack.c.l.b16 %v169
  %v984 = vunpack.c.l.b16 %v170
  %v985 = vunpack.c.l.b16 %v171
  %v986 = vunpack.c.l.b16 %v172
  %v987 = vunpack.c.l.b16 %v173
  %v988 = vunpack.c.l.b16 %v174
  %v989 = vunpack.c.l.b16 %v175
  %v990 = vunpack.c.l.b16 %v176
  %v991 = vunpack.c.l.b16 %v177
  %v992 = vunpack.c.l.b16 %v178
  %v993 = vunpack.c.l.b16 %v179
  %v994 = vunpack.c.l.b16 %v180
  %v995 = vunpack.c.l.b16 %v181
  %v996 = vunpack.c.l.b16 %v182
  %v997 = vunpack.c.l.b16 %v183
  %v998 = vunpack.c.l.b16 %v184
  %v999 = vunpack.c.l.b16 %v185
  %v1000 = vunpack.c.l.b16 %v186
  %v1001 = vunpack.c.l.b16 %v187
  %v1002 = vunpack.c.l.b16 %v188
  %v1003 = vunpack.c.l.b16 %v189
  %v1004 = vunpack.c.l.b16 %v190
  %v1005 = vunpack.c.l.b16 %v191
  %v1006 = vunpack.c.l.b16 %v192
  %v1007 = vunpack.c.l.b16 %v193
  %v1008 = vunpack.c.l.b16 %v194
  %v1009 = vunpack.c.l.b16 %v195
  %v1010 = vunpack.c.l.b16 %v196
  %v1011 = vunpack.c.l.b16 %v197
  %v1012 = vunpack.c.l.b16 %v198
  %v1013 = vunpack.c.l.b16 %v199
  %v1014 = vunpack.c.l.b16 %v200
  %v1015 = vunpack.c.l.b16 %v201
  %v1016 = vunpack.c.l.b16 %v202
  %v1017 = vunpack.c.l.b16 %v203
  %v1018 = vunpack.c.l.b16 %v204
  %v1019 = vunpack.c.l.b16 %v205
  %v1020 = vunpack.c.l.b16 %v206
  %v1021 = vunpack.c.l.b16 %v207
  %v1022 = vunpack.c.l.b16 %v208
  %v1023 = vunpack.c.l.b16 %v209
  %v1024 = vunpack.c.l.b16 %v210
  %v1025 = vunpack.c.l.b16 %v211
  %v1026 = vunpack.c.l.b16 %v212
  %v1027 = vunpack.c.l.b16 %v213
  %v1028 = vunpack.c.l.b16 %v214
  %v1029 = vunpack.c.l.b16 %v215
  %v1030 = vunpack.c.l.b16 %v216
  %v1031 = vunpack.c.l.b16 %v217
  %v1032 = vunpack.c.l.b16 %v218
  %v1033 = vunpack.c.l.b16 %v219
  %v1034 = vunpack.c.l.b16 %v220
  %v1035 = vunpack.c.l.b16 %v221
  %v1036 = vunpack.c.l.b16 %v222
  %v1037 = vunpack.c.l.b16 %v223
  %v1038 = vunpack.c.l.b16 %v224
  %v1039 = vunpack.c.l.b16 %v225
  %v1040 = vunpack.c.l.b16 %v226
  %v1041 = vunpack.c.l.b16 %v227
  %v1042 = vunpack.c.l.b16 %v228
  %v1043 = vunpack.c.l.b16 %v229
  %v1044 = vunpack.c.l.b16 %v230
  %v1045 = vunpack.c.l.b16 %v231
  %v1046 = vunpack.c.l.b16 %v232
  %v1047 = vunpack.c.l.b16 %v233
  %v1048 = vunpack.c.l.b16 %v234
  %v1049 = vunpack.c.l.b16 %v235
  %v1050 = vunpack.c.l.b16 %v236
  %v1051 = vunpack.c.l.b16 %v237
  %v1052 = vunpack.c.l.b16 %v238
  %v1053 = vunpack.c.l.b16 %v239
  %v1054 = vunpack.c.l.b16 %v240
  %v1055 = vunpack.c.l.b16 %v241
  %v1056 = vunpack.c.l.b16 %v242
  %v1057 = vunpack.c.l.b16 %v243
  %v1058 = vunpack.c.l.b16 %v244
  %v1059 = vunpack.c.l.b16 %v245
  %v1060 = vunpack.c.l.b16 %v246
  %v1061 = vunpack.c.l.b16 %v247
  %v1062 = vunpack.c.l.b16 %v248
  %v1063 = vunpack.c.l.b16 %v249
  %v1064 = vunpack.c.l.b16 %v250
  %v1065 = vunpack.c.l.b16 %v251
  %v1066 = vunpack.c.l.b16 %v252
  %v1067 = vunpack.c.l.b16 %v253
  %v1068 = vunpack.c.l.b16 %v254
  %v1069 = vunpack.c.l.b16 %v255
  %v1070 = vunpack.c.l.b16 %v256
  %v1071 = vunpack.c.l.b16 %v257
  %v1072 = vunpack.c.l.b16 %v258
  %v1073 = vunpack.c.l.b16 %v259
  %v1074 = vunpack.c.l.b16 %v260
  %v1075 = vunpack.c.l.b16 %v261
  %v1076 = vunpack.c.l.b16 %v262
  %v1077 = vunpack.c.l.b16 %v263
  %v1078 = vunpack.c.l.b16 %v264
  %v1079 = vunpack.c.l.b16 %v265
  %v1080 = vunpack.c.l.b16 %v266
  %v1081 = vunpack.c.l.b16 %v267
  %v1082 = vunpack.c.l.b16 %v268
  %v1083 = vunpack.c.l.b16 %v269
  %v1084 = vunpack.c.l.b16 %v270
  %v1085 = vunpack.c.l.b16 %v271
  %v1086 = vunpack.c.l.b16 %v272
  %v1087 = vunpack.c.l.b16 %v273
  %v1088 = vunpack.c.l.b16 %v274
  %v1089 = vunpack.c.l.b16 %v275
  %v1090 = vunpack.c.l.b16 %v276
  %v1091 = vunpack.c.l.b16 %v277
  %v1092 = vunpack.c.l.b16 %v278
  %v1093 = vunpack.c.l.b16 %v279
  %v1094 = vunpack.c.l.b16 %v280
  %v1095 = vunpack.c.l.b16 %v281
  %v1096 = vunpack.c.l.b16 %v282
  %v1097 = vunpack.c.l.b16 %v283
  %v1098 = vunpack.c.l.b16 %v284
  %v1099 = vunpack.c.l.b16 %v285
  %v1100 = vunpack.c.l.b16 %v286
  %v1101 = vunpack.c.l.b16 %v287
  %v1102 = vunpack.c.l.b16 %v288
  %v1103 = vunpack.c.l.b16 %v289
  %v1104 = vunpack.c.l.b16 %v290
  %v1105 = vunpack.c.l.b16 %v291
  %v1106 = vunpack.c.l.b16 %v292
  %v1107 = vunpack.c.l.b16 %v293
  %v1108 = vunpack.c.l.b16 %v294
  %v1109 = vunpack.c.l.b16 %v295
  %v1110 = vunpack.c.l.b16 %v296
  %v1111 = vunpack.c.l.b16 %v297
  %v1112 = vunpack.c.l.b16 %v298
  %v1113 = vunpack.c.l.b16 %v299
  %v1114 = vunpack.c.l.b16 %v300
  %v1115 = vunpack.c.l.b16 %v301
  %v1116 = vunpack.c.l.b16 %v302
  %v1117 = vunpack.c.l.b16 %v303
  %v1118 = vunpack.c.l.b16 %v304
  %v1119 = vunpack.c.l.b16 %v305
  %v1120 = vunpack.c.l.b16 %v306
  %v1121 = vunpack.c.l.b16 %v307
  %v1122 = vunpack.c.l.b16 %v308
  %v1123 = vunpack.c.l.b16 %v309
  %v1124 = vunpack.c.l.b16 %v310
  %v1125 = vunpack.c.l.b16 %v311
  %v1126 = vunpack.c.l.b16 %v312
  %v1127 = vunpack.c.l.b16 %v313
  %v1128 = vunpack.c.l.b16 %v314
  %v1129 = vunpack.c.l.b16 %v315
  %v1130 = vunpack.c.l.b16 %v316
  %v1131 = vunpack.c.l.b16 %v317
  %v1132 = vunpack.c.l.b16 %v318
  %v1133 = vunpack.c.l.b16 %v319
  %v1134 = vunpack.c.l.b16 %v320
  %v1135 = vunpack.c.l.b16 %v321
  %v1136 = vunpack.c.l.b16 %v322
  %v1137 = vunpack.c.l.b16 %v323
  %v1138 = vunpack.c.l.b16 %v324
  %v1139 = vunpack.c.l.b16 %v325
  %v1140 = vunpack.c.l.b16 %v326
  %v1141 = vunpack.c.l.b16 %v327
  %v1142 = vunpack.c.l.b16 %v328
  %v1143 = vunpack.c.l.b16 %v329
  %v1144 = vunpack.c.l.b16 %v330
  %v1145 = vunpack.c.l.b16 %v331
  %v1146 = vunpack.c.l.b16 %v332
  %v1147 = vunpack.c.l.b16 %v333
  %v1148 = vunpack.c.l.b16 %v334
  %v1149 = vunpack.c.l.b16 %v335
  %v1150 = vunpack.c.l.b16 %v336
  %v1151 = vunpack.c.l.b16 %v337
  %v1152 = vunpack.c.l.b16 %v338
  %v1153 = vunpack.c.l.b16 %v339
  %v1154 = vunpack.c.l.b16 %v340
  %v1155 = vunpack.c.l.b16 %v341
  %v1156 = vunpack.c.l.b16 %v342
  %v1157 = vunpack.c.l.b16 %v343
  %v1158 = vunpack.c.l.b16 %v344
  %v1159 = vunpack.c.l.b16 %v345
  %v1160 = vunpack.c.l.b16 %v346
  %v1161 = vunpack.c.l.b16 %v347
  %v1162 = vunpack.c.l.b16 %v348
  %v1163 = vunpack.c.l.b16 %v349
  %v1164 = vunpack.c.l.b16 %v350
  %v1165 = vunpack.c.l.b16 %v351
  %v1166 = vunpack.c.l.b16 %v352
  %v1167 = vunpack.c.l.b16 %v353
  %v1168 = vunpack.c.l.b16 %v354
  %v1169 = vpack.c.b16 %v870, %v869
  %v1170 = vpack.c.b16 %v872, %v871
  %v1171 = vpack.c.b16 %v874, %v873
  %v1172 = vpack.c.b16 %v876, %v875
  %v1173 = vpack.c.b16 %v878, %v877
  %v1174 = vpack.c.b16 %v880, %v879
  %v1175 = vpack.c.b16 %v882, %v881
  %v1176 = vpack.c.b16 %v884, %v883
  %v1177 = vpack.c.b16 %v886, %v885
  %v1178 = vpack.c.b16 %v888, %v887
  %v1179 = vpack.c.b16 %v890, %v889
  %v1180 = vpack.c.b16 %v892, %v891
  %v1181 = vpack.c.b16 %v894, %v893
  %v1182 = vpack.c.b16 %v896, %v895
  %v1183 = vpack.c.b16 %v898, %v897
  %v1184 = vpack.c.b16 %v900, %v899
  %v1185 = vpack.c.b16 %v902, %v901
  %v1186 = vpack.c.b16 %v904, %v903
  %v1187 = vpack.c.b16 %v906, %v905
  %v1188 = vpack.c.b16 %v908, %v907
  %v1189 = vpack.c.b16 %v910, %v909
  %v1190 = vpack.c.b16 %v912, %v911
  %v1191 = vpack.c.b16 %v914, %v913
  %v1192 = vpack.c.b16 %v916, %v915
  %v1193 = vpack.c.b16 %v918, %v917
  %v1194 = vpack.c.b16 %v920, %v919
  %v1195 = vpack.c.b16 %v922, %v921
  %v1196 = vpack.c.b16 %v924, %v923
  %v1197 = vpack.c.b16 %v926, %v925
  %v1198 = vpack.c.b16 %v928, %v927
  %v1199 = vpack.c.b16 %v930, %v929
  %v1200 = vpack.c.b16 %v932, %v931
  %v1201 = vpack.c.b16 %v934, %v933
  %v1202 = vpack.c.b16 %v936, %v935
  %v1203 = vpack.c.b16 %v938, %v937
  %v1204 = vpack.c.b16 %v940, %v939
  %v1205 = vpack.c.b16 %v942, %v941
  %v1206 = vpack.c.b16 %v944, %v943
  %v1207 = vpack.c.b16 %v946, %v945
  %v1208 = vpack.c.b16 %v948, %v947
  %v1209 = vpack.c.b16 %v950, %v949
  %v1210 = vpack.c.b16 %v952, %v951
  %v1211 = vpack.c.b16 %v954, %v953
  %v1212 = vpack.c.b16 %v956, %v955
  %v1213 = vpack.c.b16 %v958, %v957
  %v1214 = vpack.c.b16 %v960, %v959
  %v1215 = vpack.c.b16 %v962, %v961
  %v1216 = vpack.c.b16 %v964, %v963
  %v1217 = vpack.c.b16 %v966, %v965
  %v1218 = vpack.c.b16 %v968, %v967
  %v1219 = vpack.c.b16 %v970, %v969
  %v1220 = vpack.c.b16 %v972, %v971
  %v1221 = vpack.c.b16 %v974, %v973
  %v1222 = vpack.c.b16 %v976, %v975
  %v1223 = vpack.c.b16 %v978, %v977
  %v1224 = vpack.c.b16 %v980, %v979
  %v1225 = vpack.c.b16 %v982, %v981
  %v1226 = vpack.c.b16 %v984, %v983
  %v1227 = vpack.c.b16 %v986, %v985
  %v1228 = vpack.c.b16 %v988, %v987
  %v1229 = vpack.c.b16 %v990, %v989
  %v1230 = vpack.c.b16 %v992, %v991
  %v1231 = vpack.c.b16 %v994, %v993
  %v1232 = vpack.c.b16 %v996, %v995
  %v1233 = vpack.c.b16 %v998, %v997
  %v1234 = vpack.c.b16 %v1000, %v999
  %v1235 = vpack.c.b16 %v1002, %v1001
  %v1236 = vpack.c.b16 %v1004, %v1003
  %v1237 = vpack.c.b16 %v1006, %v1005
  %v1238 = vpack.c.b16 %v1008, %v1007
  %v1239 = vpack.c.b16 %v1010, %v1009
  %v1240 = vpack.c.b16 %v1012, %v1011
  %v1241 = vpack.c.b16 %v1014, %v1013
  %v1242 = vpack.c.b16 %v1016, %v1015
  %v1243 = vpack.c.b16 %v1018, %v1017
  %v1244 = vpack.c.b16 %v1020, %v1019
  %v1245 = vpack.c.b16 %v1022, %v1021
  %v1246 = vpack.c.b16 %v1024, %v1023
  %v1247 = vpack.c.b16 %v1026, %v1025
  %v1248 = vpack.c.b16 %v1028, %v1027
  %v1249 = vpack.c.b16 %v1030, %v1029
  %v1250 = vpack.c.b16 %v1032, %v1031
  %v1251 = vpack.c.b16 %v1034, %v1033
  %v1252 = vpack.c.b16 %v1036, %v1035
  %v1253 = vpack.c.b16 %v1038, %v1037
  %v1254 = vpack.c.b16 %v1040, %v1039
  %v1255 = vpack.c.b16 %v1042, %v1041
  %v1256 = vpack.c.b16 %v1044, %v1043
  %v1257 = vpack.c.b16 %v1046, %v1045
  %v1258 = vpack.c.b16 %v1048, %v1047
  %v1259 = vpack.c.b16 %v1050, %v1049
  %v1260 = vpack.c.b16 %v1052, %v1051
  %v1261 = vpack.c.b16 %v1054, %v1053
  %v1262 = vpack.c.b16 %v1056, %v1055
  %v1263 = vpack.c.b16 %v1058, %v1057
  %v1264 = vpack.c.b16 %v1060, %v1059
  %v1265 = vpack.c.b16 %v1062, %v1061
  %v1266 = vpack.c.b16 %v1064, %v1063
  %v1267 = vpack.c.b16 %v1066, %v1065
  %v1268 = vpack.c.b16 %v1068, %v1067
  %v1269 = vpack.c.b16 %v1070, %v1069
  %v1270 = vpack.c.b16 %v1072, %v1071
  %v1271 = vpack.c.b16 %v1074, %v1073
  %v1272 = vpack.c.b16 %v1076, %v1075
  %v1273 = vpack.c.b16 %v1078, %v1077
  %v1274 = vpack.c.b16 %v1080, %v1079
  %v1275 = vpack.c.b16 %v1082, %v1081
  %v1276 = vpack.c.b16 %v1084, %v1083
  %v1277 = vpack.c.b16 %v1086, %v1085
  %v1278 = vpack.c.b16 %v1088, %v1087
  %v1279 = vpack.c.b16 %v1090, %v1089
  %v1280 = vpack.c.b16 %v1092, %v1091
  %v1281 = vpack.c.b16 %v1094, %v1093
  %v1282 = vpack.c.b16 %v1096, %v1095
  %v1283 = vpack.c.b16 %v1098, %v1097
  %v1284 = vpack.c.b16 %v1100, %v1099
  %v1285 = vpack.c.b16 %v1102, %v1101
  %v1286 = vpack.c.b16 %v1104, %v1103
  %v1287 = vpack.c.b16 %v1106, %v1105
  %v1288 = vpack.c.b16 %v1108, %v1107
  %v1289 = vpack.c.b16 %v1110, %v1109
  %v1290 = vpack.c.b16 %v1112, %v1111
  %v1291 = vpack.c.b16 %v1114, %v1113
  %v1292 = vpack.c.b16 %v1116, %v1115
  %v1293 = vpack.c.b16 %v1118, %v1117
  %v1294 = vpack.c.b16 %v1120, %v1119
  %v1295 = vpack.c.b16 %v1122, %v1121
  %v1296 = vpack.c.b16 %v1124, %v1123
  %v1297 = vpack.c.b16 %v1126, %v1125
  %v1298 = vpack.c.b16 %v1128, %v1127
  %v1299 = vpack.c.b16 %v1130, %v1129
  %v1300 = vpack.c.b16 %v1132, %v1131
  %v1301 = vpack.c.b16 %v1134, %v1133
  %v1302 = vpack.c.b16 %v1136, %v1135
  %v1303 = vpack.c.b16 %v1138, %v1137
  %v1304 = vpack.c.b16 %v1140, %v1139
  %v1305 = vpack.c.b16 %v1142, %v1141
  %v1306 = vpack.c.b16 %v1144, %v1143
  %v1307 = vpack.c.b16 %v1146, %v1145
  %v1308 = vpack.c.b16 %v1148, %v1147
  %v1309 = vpack.c.b16 %v1150, %v1149
  %v1310 = vpack.c.b16 %v1152, %v1151
  %v1311 = vpack.c.b16 %v1154, %v1153
  %v1312 = vpack.c.b16 %v1156, %v1155
  %v1313 = vpack.c.b16 %v1158, %v1157
  %v1314 = vpack.c.b16 %v1160, %v1159
  %v1315 = vpack.c.b16 %v1162, %v1161
  %v1316 = vpack.c.b16 %v1164, %v1163
  %v1317 = vpack.c.b16 %v1166, %v1165
  %v1318 = vpack.c.b16 %v1168, %v1167
  %vm1469 = vcmask 785408
  %v1471 = vsel %vm1469, %v513, 0
  %v1474 = vsel %vm1469, %v532, 0
  %1476 = vmatprep.subr.bf16.mxu0 0
  %1477 = vmatpush1.bf16.msra.mxu0 %v1176
  %1478 = vmatprep.subr.bf16.mxu0 0
  %1479 = vmatpush1.bf16.msra.mxu0 %v1175
  %1480 = vmatprep.subr.bf16.mxu0 0
  %1481 = vmatpush1.bf16.msra.mxu0 %v1174
  %1482 = vmatprep.subr.bf16.mxu0 0
  %1483 = vmatpush1.bf16.msra.mxu0 %v1173
  %1484 = vmatprep.subr.bf16.mxu0 0
  %1485 = vmatpush1.bf16.msra.mxu0 %v1172
  %1486 = vmatprep.subr.bf16.mxu0 0
  %1487 = vmatpush1.bf16.msra.mxu0 %v1171
  %1488 = vmatprep.subr.bf16.mxu0 0
  %1489 = vmatpush1.bf16.msra.mxu0 %v1170
  %1490 = vmatprep.subr.bf16.mxu0 0
  %1491 = vmatpush1.bf16.msra.mxu0 %v1169
  %1492 = vmatprep.subr.bf16.mxu0 0
  %1493 = vmatpush2.bf16.msra.mxu0 %v1184
  %1494 = vmatprep.subr.bf16.mxu0 0
  %1495 = vmatpush2.bf16.msra.mxu0 %v1183
  %1496 = vmatprep.subr.bf16.mxu0 0
  %1497 = vmatpush2.bf16.msra.mxu0 %v1182
  %1498 = vmatprep.subr.bf16.mxu0 0
  %1499 = vmatpush2.bf16.msra.mxu0 %v1181
  %1500 = vmatprep.subr.bf16.mxu0 0
  %1501 = vmatpush2.bf16.msra.mxu0 %v1180
  %1502 = vmatprep.subr.bf16.mxu0 0
  %1503 = vmatpush2.bf16.msra.mxu0 %v1179
  %1504 = vmatprep.subr.bf16.mxu0 0
  %1505 = vmatpush2.bf16.msra.mxu0 %v1178
  %1506 = vmatprep.subr.bf16.mxu0 0
  %1507 = vmatpush2.bf16.msra.mxu0 %v1177
  %1508 = vmatprep.mubr.bf16.mxu0 %v496
  %1509 = vmatmul.mubr.bf16.gmra.mxu0 %v495
  %v1510 = vpop.f32.mrf.mxu0
  %v1511 = vadd.f32 %v362, %v1510
  %v1512 = vpop.f32.mrf.mxu0
  %v1513 = vpop.f32.mrf.mxu0
  %v1514 = vadd.f32 %v367, %v1513
  %v1515 = vpop.f32.mrf.mxu0
  %1516 = vmatprep.mubr.bf16.mxu0 %v515
  %1517 = vmatmul.mubr.bf16.gmra.mxu0 %v514
  %v1518 = vpop.f32.mrf.mxu0
  %v1519 = vadd.f32 %v372, %v1518
  %v1520 = vpop.f32.mrf.mxu0
  %v1521 = vpop.f32.mrf.mxu0
  %v1522 = vadd.f32 %v377, %v1521
  %v1523 = vpop.f32.mrf.mxu0
  %1524 = vdwg.mxu0
  %1525 = vmatprep.subr.bf16.mxu0 0
  %1526 = vmatpush1.bf16.msra.mxu0 %v1192
  %1527 = vmatprep.subr.bf16.mxu0 0
  %1528 = vmatpush1.bf16.msra.mxu0 %v1191
  %1529 = vmatprep.subr.bf16.mxu0 0
  %1530 = vmatpush1.bf16.msra.mxu0 %v1190
  %1531 = vmatprep.subr.bf16.mxu0 0
  %1532 = vmatpush1.bf16.msra.mxu0 %v1189
  %1533 = vmatprep.subr.bf16.mxu0 0
  %1534 = vmatpush1.bf16.msra.mxu0 %v1188
  %1535 = vmatprep.subr.bf16.mxu0 0
  %1536 = vmatpush1.bf16.msra.mxu0 %v1187
  %1537 = vmatprep.subr.bf16.mxu0 0
  %1538 = vmatpush1.bf16.msra.mxu0 %v1186
  %1539 = vmatprep.subr.bf16.mxu0 0
  %1540 = vmatpush1.bf16.msra.mxu0 %v1185
  %1541 = vmatprep.subr.bf16.mxu0 0
  %1542 = vmatpush2.bf16.msra.mxu0 %v1200
  %1543 = vmatprep.subr.bf16.mxu0 0
  %1544 = vmatpush2.bf16.msra.mxu0 %v1199
  %1545 = vmatprep.subr.bf16.mxu0 0
  %1546 = vmatpush2.bf16.msra.mxu0 %v1198
  %1547 = vmatprep.subr.bf16.mxu0 0
  %1548 = vmatpush2.bf16.msra.mxu0 %v1197
  %1549 = vmatprep.subr.bf16.mxu0 0
  %1550 = vmatpush2.bf16.msra.mxu0 %v1196
  %1551 = vmatprep.subr.bf16.mxu0 0
  %1552 = vmatpush2.bf16.msra.mxu0 %v1195
  %1553 = vmatprep.subr.bf16.mxu0 0
  %1554 = vmatpush2.bf16.msra.mxu0 %v1194
  %1555 = vmatprep.subr.bf16.mxu0 0
  %1556 = vmatpush2.bf16.msra.mxu0 %v1193
  %1557 = vmatprep.mubr.bf16.mxu0 %v498
  %1558 = vmatmul.mubr.bf16.gmra.mxu0 %v497
  %v1559 = vpop.f32.mrf.mxu0
  %v1560 = vadd.f32 %v1511, %v1559
  %v1561 = vpop.f32.mrf.mxu0
  %v1562 = vpop.f32.mrf.mxu0
  %v1563 = vadd.f32 %v1514, %v1562
  %v1564 = vpop.f32.mrf.mxu0
  %1565 = vmatprep.mubr.bf16.mxu0 %v517
  %1566 = vmatmul.mubr.bf16.gmra.mxu0 %v516
  %v1567 = vpop.f32.mrf.mxu0
  %v1568 = vadd.f32 %v1519, %v1567
  %v1569 = vpop.f32.mrf.mxu0
  %v1570 = vpop.f32.mrf.mxu0
  %v1571 = vadd.f32 %v1522, %v1570
  %v1572 = vpop.f32.mrf.mxu0
  %1573 = vdwg.mxu0
  %1574 = vmatprep.subr.bf16.mxu0 0
  %1575 = vmatpush1.bf16.msra.mxu0 %v1208
  %1576 = vmatprep.subr.bf16.mxu0 0
  %1577 = vmatpush1.bf16.msra.mxu0 %v1207
  %1578 = vmatprep.subr.bf16.mxu0 0
  %1579 = vmatpush1.bf16.msra.mxu0 %v1206
  %1580 = vmatprep.subr.bf16.mxu0 0
  %1581 = vmatpush1.bf16.msra.mxu0 %v1205
  %1582 = vmatprep.subr.bf16.mxu0 0
  %1583 = vmatpush1.bf16.msra.mxu0 %v1204
  %1584 = vmatprep.subr.bf16.mxu0 0
  %1585 = vmatpush1.bf16.msra.mxu0 %v1203
  %1586 = vmatprep.subr.bf16.mxu0 0
  %1587 = vmatpush1.bf16.msra.mxu0 %v1202
  %1588 = vmatprep.subr.bf16.mxu0 0
  %1589 = vmatpush1.bf16.msra.mxu0 %v1201
  %1590 = vmatprep.subr.bf16.mxu0 0
  %1591 = vmatpush2.bf16.msra.mxu0 %v1216
  %1592 = vmatprep.subr.bf16.mxu0 0
  %1593 = vmatpush2.bf16.msra.mxu0 %v1215
  %1594 = vmatprep.subr.bf16.mxu0 0
  %1595 = vmatpush2.bf16.msra.mxu0 %v1214
  %1596 = vmatprep.subr.bf16.mxu0 0
  %1597 = vmatpush2.bf16.msra.mxu0 %v1213
  %1598 = vmatprep.subr.bf16.mxu0 0
  %1599 = vmatpush2.bf16.msra.mxu0 %v1212
  %1600 = vmatprep.subr.bf16.mxu0 0
  %1601 = vmatpush2.bf16.msra.mxu0 %v1211
  %1602 = vmatprep.subr.bf16.mxu0 0
  %1603 = vmatpush2.bf16.msra.mxu0 %v1210
  %1604 = vmatprep.subr.bf16.mxu0 0
  %1605 = vmatpush2.bf16.msra.mxu0 %v1209
  %1606 = vmatprep.mubr.bf16.mxu0 %v500
  %1607 = vmatmul.mubr.bf16.gmra.mxu0 %v499
  %v1608 = vpop.f32.mrf.mxu0
  %v1609 = vadd.f32 %v1560, %v1608
  %v1610 = vpop.f32.mrf.mxu0
  %v1611 = vpop.f32.mrf.mxu0
  %v1612 = vadd.f32 %v1563, %v1611
  %v1613 = vpop.f32.mrf.mxu0
  %1614 = vmatprep.mubr.bf16.mxu0 %v519
  %1615 = vmatmul.mubr.bf16.gmra.mxu0 %v518
  %v1616 = vpop.f32.mrf.mxu0
  %v1617 = vadd.f32 %v1568, %v1616
  %v1618 = vpop.f32.mrf.mxu0
  %v1619 = vpop.f32.mrf.mxu0
  %v1620 = vadd.f32 %v1571, %v1619
  %v1621 = vpop.f32.mrf.mxu0
  %1622 = vdwg.mxu0
  %1623 = vmatprep.subr.bf16.mxu0 0
  %1624 = vmatpush1.bf16.msra.mxu0 %v1224
  %1625 = vmatprep.subr.bf16.mxu0 0
  %1626 = vmatpush1.bf16.msra.mxu0 %v1223
  %1627 = vmatprep.subr.bf16.mxu0 0
  %1628 = vmatpush1.bf16.msra.mxu0 %v1222
  %1629 = vmatprep.subr.bf16.mxu0 0
  %1630 = vmatpush1.bf16.msra.mxu0 %v1221
  %1631 = vmatprep.subr.bf16.mxu0 0
  %1632 = vmatpush1.bf16.msra.mxu0 %v1220
  %1633 = vmatprep.subr.bf16.mxu0 0
  %1634 = vmatpush1.bf16.msra.mxu0 %v1219
  %1635 = vmatprep.subr.bf16.mxu0 0
  %1636 = vmatpush1.bf16.msra.mxu0 %v1218
  %1637 = vmatprep.subr.bf16.mxu0 0
  %1638 = vmatpush1.bf16.msra.mxu0 %v1217
  %1639 = vmatprep.subr.bf16.mxu0 0
  %1640 = vmatpush2.bf16.msra.mxu0 %v1232
  %1641 = vmatprep.subr.bf16.mxu0 0
  %1642 = vmatpush2.bf16.msra.mxu0 %v1231
  %1643 = vmatprep.subr.bf16.mxu0 0
  %1644 = vmatpush2.bf16.msra.mxu0 %v1230
  %1645 = vmatprep.subr.bf16.mxu0 0
  %1646 = vmatpush2.bf16.msra.mxu0 %v1229
  %1647 = vmatprep.subr.bf16.mxu0 0
  %1648 = vmatpush2.bf16.msra.mxu0 %v1228
  %1649 = vmatprep.subr.bf16.mxu0 0
  %1650 = vmatpush2.bf16.msra.mxu0 %v1227
  %1651 = vmatprep.subr.bf16.mxu0 0
  %1652 = vmatpush2.bf16.msra.mxu0 %v1226
  %1653 = vmatprep.subr.bf16.mxu0 0
  %1654 = vmatpush2.bf16.msra.mxu0 %v1225
  %1655 = vmatprep.mubr.bf16.mxu0 %v502
  %1656 = vmatmul.mubr.bf16.gmra.mxu0 %v501
  %v1657 = vpop.f32.mrf.mxu0
  %v1658 = vadd.f32 %v1609, %v1657
  %v1659 = vpop.f32.mrf.mxu0
  %v1660 = vpop.f32.mrf.mxu0
  %v1661 = vadd.f32 %v1612, %v1660
  %v1662 = vpop.f32.mrf.mxu0
  %1663 = vmatprep.mubr.bf16.mxu0 %v521
  %1664 = vmatmul.mubr.bf16.gmra.mxu0 %v520
  %v1665 = vpop.f32.mrf.mxu0
  %v1666 = vadd.f32 %v1617, %v1665
  %v1667 = vpop.f32.mrf.mxu0
  %v1668 = vpop.f32.mrf.mxu0
  %v1669 = vadd.f32 %v1620, %v1668
  %v1670 = vpop.f32.mrf.mxu0
  %1671 = vdwg.mxu0
  %1672 = vmatprep.subr.bf16.mxu0 0
  %1673 = vmatpush1.bf16.msra.mxu0 %v1240
  %1674 = vmatprep.subr.bf16.mxu0 0
  %1675 = vmatpush1.bf16.msra.mxu0 %v1239
  %1676 = vmatprep.subr.bf16.mxu0 0
  %1677 = vmatpush1.bf16.msra.mxu0 %v1238
  %1678 = vmatprep.subr.bf16.mxu0 0
  %1679 = vmatpush1.bf16.msra.mxu0 %v1237
  %1680 = vmatprep.subr.bf16.mxu0 0
  %1681 = vmatpush1.bf16.msra.mxu0 %v1236
  %1682 = vmatprep.subr.bf16.mxu0 0
  %1683 = vmatpush1.bf16.msra.mxu0 %v1235
  %1684 = vmatprep.subr.bf16.mxu0 0
  %1685 = vmatpush1.bf16.msra.mxu0 %v1234
  %1686 = vmatprep.subr.bf16.mxu0 0
  %1687 = vmatpush1.bf16.msra.mxu0 %v1233
  %1688 = vmatprep.subr.bf16.mxu0 0
  %1689 = vmatpush2.bf16.msra.mxu0 %v1248
  %1690 = vmatprep.subr.bf16.mxu0 0
  %1691 = vmatpush2.bf16.msra.mxu0 %v1247
  %1692 = vmatprep.subr.bf16.mxu0 0
  %1693 = vmatpush2.bf16.msra.mxu0 %v1246
  %1694 = vmatprep.subr.bf16.mxu0 0
  %1695 = vmatpush2.bf16.msra.mxu0 %v1245
  %1696 = vmatprep.subr.bf16.mxu0 0
  %1697 = vmatpush2.bf16.msra.mxu0 %v1244
  %1698 = vmatprep.subr.bf16.mxu0 0
  %1699 = vmatpush2.bf16.msra.mxu0 %v1243
  %1700 = vmatprep.subr.bf16.mxu0 0
  %1701 = vmatpush2.bf16.msra.mxu0 %v1242
  %1702 = vmatprep.subr.bf16.mxu0 0
  %1703 = vmatpush2.bf16.msra.mxu0 %v1241
  %1704 = vmatprep.mubr.bf16.mxu0 %v504
  %1705 = vmatmul.mubr.bf16.gmra.mxu0 %v503
  %v1706 = vpop.f32.mrf.mxu0
  %v1707 = vadd.f32 %v1658, %v1706
  %v1708 = vpop.f32.mrf.mxu0
  %v1709 = vpop.f32.mrf.mxu0
  %v1710 = vadd.f32 %v1661, %v1709
  %v1711 = vpop.f32.mrf.mxu0
  %1712 = vmatprep.mubr.bf16.mxu0 %v523
  %1713 = vmatmul.mubr.bf16.gmra.mxu0 %v522
  %v1714 = vpop.f32.mrf.mxu0
  %v1715 = vadd.f32 %v1666, %v1714
  %v1716 = vpop.f32.mrf.mxu0
  %v1717 = vpop.f32.mrf.mxu0
  %v1718 = vadd.f32 %v1669, %v1717
  %v1719 = vpop.f32.mrf.mxu0
  %1720 = vdwg.mxu0
  %1721 = vmatprep.subr.bf16.mxu0 0
  %1722 = vmatpush1.bf16.msra.mxu0 %v1256
  %1723 = vmatprep.subr.bf16.mxu0 0
  %1724 = vmatpush1.bf16.msra.mxu0 %v1255
  %1725 = vmatprep.subr.bf16.mxu0 0
  %1726 = vmatpush1.bf16.msra.mxu0 %v1254
  %1727 = vmatprep.subr.bf16.mxu0 0
  %1728 = vmatpush1.bf16.msra.mxu0 %v1253
  %1729 = vmatprep.subr.bf16.mxu0 0
  %1730 = vmatpush1.bf16.msra.mxu0 %v1252
  %1731 = vmatprep.subr.bf16.mxu0 0
  %1732 = vmatpush1.bf16.msra.mxu0 %v1251
  %1733 = vmatprep.subr.bf16.mxu0 0
  %1734 = vmatpush1.bf16.msra.mxu0 %v1250
  %1735 = vmatprep.subr.bf16.mxu0 0
  %1736 = vmatpush1.bf16.msra.mxu0 %v1249
  %1737 = vmatprep.subr.bf16.mxu0 0
  %1738 = vmatpush2.bf16.msra.mxu0 %v1264
  %1739 = vmatprep.subr.bf16.mxu0 0
  %1740 = vmatpush2.bf16.msra.mxu0 %v1263
  %1741 = vmatprep.subr.bf16.mxu0 0
  %1742 = vmatpush2.bf16.msra.mxu0 %v1262
  %1743 = vmatprep.subr.bf16.mxu0 0
  %1744 = vmatpush2.bf16.msra.mxu0 %v1261
  %1745 = vmatprep.subr.bf16.mxu0 0
  %1746 = vmatpush2.bf16.msra.mxu0 %v1260
  %1747 = vmatprep.subr.bf16.mxu0 0
  %1748 = vmatpush2.bf16.msra.mxu0 %v1259
  %1749 = vmatprep.subr.bf16.mxu0 0
  %1750 = vmatpush2.bf16.msra.mxu0 %v1258
  %1751 = vmatprep.subr.bf16.mxu0 0
  %1752 = vmatpush2.bf16.msra.mxu0 %v1257
  %1753 = vmatprep.mubr.bf16.mxu0 %v506
  %1754 = vmatmul.mubr.bf16.gmra.mxu0 %v505
  %v1755 = vpop.f32.mrf.mxu0
  %v1756 = vadd.f32 %v1707, %v1755
  %v1757 = vpop.f32.mrf.mxu0
  %v1758 = vpop.f32.mrf.mxu0
  %v1759 = vadd.f32 %v1710, %v1758
  %v1760 = vpop.f32.mrf.mxu0
  %1761 = vmatprep.mubr.bf16.mxu0 %v525
  %1762 = vmatmul.mubr.bf16.gmra.mxu0 %v524
  %v1763 = vpop.f32.mrf.mxu0
  %v1764 = vadd.f32 %v1715, %v1763
  %v1765 = vpop.f32.mrf.mxu0
  %v1766 = vpop.f32.mrf.mxu0
  %v1767 = vadd.f32 %v1718, %v1766
  %v1768 = vpop.f32.mrf.mxu0
  %1769 = vdwg.mxu0
  %1770 = vmatprep.subr.bf16.mxu0 0
  %1771 = vmatpush1.bf16.msra.mxu0 %v1272
  %1772 = vmatprep.subr.bf16.mxu0 0
  %1773 = vmatpush1.bf16.msra.mxu0 %v1271
  %1774 = vmatprep.subr.bf16.mxu0 0
  %1775 = vmatpush1.bf16.msra.mxu0 %v1270
  %1776 = vmatprep.subr.bf16.mxu0 0
  %1777 = vmatpush1.bf16.msra.mxu0 %v1269
  %1778 = vmatprep.subr.bf16.mxu0 0
  %1779 = vmatpush1.bf16.msra.mxu0 %v1268
  %1780 = vmatprep.subr.bf16.mxu0 0
  %1781 = vmatpush1.bf16.msra.mxu0 %v1267
  %1782 = vmatprep.subr.bf16.mxu0 0
  %1783 = vmatpush1.bf16.msra.mxu0 %v1266
  %1784 = vmatprep.subr.bf16.mxu0 0
  %1785 = vmatpush1.bf16.msra.mxu0 %v1265
  %1786 = vmatprep.subr.bf16.mxu0 0
  %1787 = vmatpush2.bf16.msra.mxu0 %v1280
  %1788 = vmatprep.subr.bf16.mxu0 0
  %1789 = vmatpush2.bf16.msra.mxu0 %v1279
  %1790 = vmatprep.subr.bf16.mxu0 0
  %1791 = vmatpush2.bf16.msra.mxu0 %v1278
  %1792 = vmatprep.subr.bf16.mxu0 0
  %1793 = vmatpush2.bf16.msra.mxu0 %v1277
  %1794 = vmatprep.subr.bf16.mxu0 0
  %1795 = vmatpush2.bf16.msra.mxu0 %v1276
  %1796 = vmatprep.subr.bf16.mxu0 0
  %1797 = vmatpush2.bf16.msra.mxu0 %v1275
  %1798 = vmatprep.subr.bf16.mxu0 0
  %1799 = vmatpush2.bf16.msra.mxu0 %v1274
  %1800 = vmatprep.subr.bf16.mxu0 0
  %1801 = vmatpush2.bf16.msra.mxu0 %v1273
  %1802 = vmatprep.mubr.bf16.mxu0 %v508
  %1803 = vmatmul.mubr.bf16.gmra.mxu0 %v507
  %v1804 = vpop.f32.mrf.mxu0
  %v1805 = vadd.f32 %v1756, %v1804
  %v1806 = vpop.f32.mrf.mxu0
  %v1807 = vpop.f32.mrf.mxu0
  %v1808 = vadd.f32 %v1759, %v1807
  %v1809 = vpop.f32.mrf.mxu0
  %1810 = vmatprep.mubr.bf16.mxu0 %v527
  %1811 = vmatmul.mubr.bf16.gmra.mxu0 %v526
  %v1812 = vpop.f32.mrf.mxu0
  %v1813 = vadd.f32 %v1764, %v1812
  %v1814 = vpop.f32.mrf.mxu0
  %v1815 = vpop.f32.mrf.mxu0
  %v1816 = vadd.f32 %v1767, %v1815
  %v1817 = vpop.f32.mrf.mxu0
  %1818 = vdwg.mxu0
  %1819 = vmatprep.subr.bf16.mxu0 0
  %1820 = vmatpush1.bf16.msra.mxu0 %v1288
  %1821 = vmatprep.subr.bf16.mxu0 0
  %1822 = vmatpush1.bf16.msra.mxu0 %v1287
  %1823 = vmatprep.subr.bf16.mxu0 0
  %1824 = vmatpush1.bf16.msra.mxu0 %v1286
  %1825 = vmatprep.subr.bf16.mxu0 0
  %1826 = vmatpush1.bf16.msra.mxu0 %v1285
  %1827 = vmatprep.subr.bf16.mxu0 0
  %1828 = vmatpush1.bf16.msra.mxu0 %v1284
  %1829 = vmatprep.subr.bf16.mxu0 0
  %1830 = vmatpush1.bf16.msra.mxu0 %v1283
  %1831 = vmatprep.subr.bf16.mxu0 0
  %1832 = vmatpush1.bf16.msra.mxu0 %v1282
  %1833 = vmatprep.subr.bf16.mxu0 0
  %1834 = vmatpush1.bf16.msra.mxu0 %v1281
  %1835 = vmatprep.subr.bf16.mxu0 0
  %1836 = vmatpush2.bf16.msra.mxu0 %v1296
  %1837 = vmatprep.subr.bf16.mxu0 0
  %1838 = vmatpush2.bf16.msra.mxu0 %v1295
  %1839 = vmatprep.subr.bf16.mxu0 0
  %1840 = vmatpush2.bf16.msra.mxu0 %v1294
  %1841 = vmatprep.subr.bf16.mxu0 0
  %1842 = vmatpush2.bf16.msra.mxu0 %v1293
  %1843 = vmatprep.subr.bf16.mxu0 0
  %1844 = vmatpush2.bf16.msra.mxu0 %v1292
  %1845 = vmatprep.subr.bf16.mxu0 0
  %1846 = vmatpush2.bf16.msra.mxu0 %v1291
  %1847 = vmatprep.subr.bf16.mxu0 0
  %1848 = vmatpush2.bf16.msra.mxu0 %v1290
  %1849 = vmatprep.subr.bf16.mxu0 0
  %1850 = vmatpush2.bf16.msra.mxu0 %v1289
  %1851 = vmatprep.mubr.bf16.mxu0 %v510
  %1852 = vmatmul.mubr.bf16.gmra.mxu0 %v509
  %v1853 = vpop.f32.mrf.mxu0
  %v1854 = vadd.f32 %v1805, %v1853
  %v1855 = vpop.f32.mrf.mxu0
  %v1856 = vpop.f32.mrf.mxu0
  %v1857 = vadd.f32 %v1808, %v1856
  %v1858 = vpop.f32.mrf.mxu0
  %1859 = vmatprep.mubr.bf16.mxu0 %v529
  %1860 = vmatmul.mubr.bf16.gmra.mxu0 %v528
  %v1861 = vpop.f32.mrf.mxu0
  %v1862 = vadd.f32 %v1813, %v1861
  %v1863 = vpop.f32.mrf.mxu0
  %v1864 = vpop.f32.mrf.mxu0
  %v1865 = vadd.f32 %v1816, %v1864
  %v1866 = vpop.f32.mrf.mxu0
  %1867 = vdwg.mxu0
  %1868 = vmatprep.subr.bf16.mxu0 0
  %1869 = vmatpush1.bf16.msra.mxu0 %v1304
  %1870 = vmatprep.subr.bf16.mxu0 0
  %1871 = vmatpush1.bf16.msra.mxu0 %v1303
  %1872 = vmatprep.subr.bf16.mxu0 0
  %1873 = vmatpush1.bf16.msra.mxu0 %v1302
  %1874 = vmatprep.subr.bf16.mxu0 0
  %1875 = vmatpush1.bf16.msra.mxu0 %v1301
  %1876 = vmatprep.subr.bf16.mxu0 0
  %1877 = vmatpush1.bf16.msra.mxu0 %v1300
  %1878 = vmatprep.subr.bf16.mxu0 0
  %1879 = vmatpush1.bf16.msra.mxu0 %v1299
  %1880 = vmatprep.subr.bf16.mxu0 0
  %1881 = vmatpush1.bf16.msra.mxu0 %v1298
  %1882 = vmatprep.subr.bf16.mxu0 0
  %1883 = vmatpush1.bf16.msra.mxu0 %v1297
  %1884 = vmatprep.subr.bf16.mxu0 0
  %1885 = vmatpush2.bf16.msra.mxu0 %v1312
  %1886 = vmatprep.subr.bf16.mxu0 0
  %1887 = vmatpush2.bf16.msra.mxu0 %v1311
  %1888 = vmatprep.subr.bf16.mxu0 0
  %1889 = vmatpush2.bf16.msra.mxu0 %v1310
  %1890 = vmatprep.subr.bf16.mxu0 0
  %1891 = vmatpush2.bf16.msra.mxu0 %v1309
  %1892 = vmatprep.subr.bf16.mxu0 0
  %1893 = vmatpush2.bf16.msra.mxu0 %v1308
  %1894 = vmatprep.subr.bf16.mxu0 0
  %1895 = vmatpush2.bf16.msra.mxu0 %v1307
  %1896 = vmatprep.subr.bf16.mxu0 0
  %1897 = vmatpush2.bf16.msra.mxu0 %v1306
  %1898 = vmatprep.subr.bf16.mxu0 0
  %1899 = vmatpush2.bf16.msra.mxu0 %v1305
  %1900 = vmatprep.mubr.bf16.mxu0 %v512
  %1901 = vmatmul.mubr.bf16.gmra.mxu0 %v511
  %v1902 = vpop.f32.mrf.mxu0
  %v1903 = vadd.f32 %v1854, %v1902
  %v1904 = vpop.f32.mrf.mxu0
  %v1905 = vpop.f32.mrf.mxu0
  %v1906 = vadd.f32 %v1857, %v1905
  %v1907 = vpop.f32.mrf.mxu0
  %1908 = vmatprep.mubr.bf16.mxu0 %v531
  %1909 = vmatmul.mubr.bf16.gmra.mxu0 %v530
  %v1910 = vpop.f32.mrf.mxu0
  %v1911 = vadd.f32 %v1862, %v1910
  %v1912 = vpop.f32.mrf.mxu0
  %v1913 = vpop.f32.mrf.mxu0
  %v1914 = vadd.f32 %v1865, %v1913
  %v1915 = vpop.f32.mrf.mxu0
  %1916 = vdwg.mxu0
  %1917 = vmatprep.subr.bf16.mxu0 0
  %1918 = vmatpush1.bf16.msra.mxu0 0
  %1919 = vmatprep.subr.bf16.mxu0 0
  %1920 = vmatpush1.bf16.msra.mxu0 0
  %1921 = vmatprep.subr.bf16.mxu0 0
  %1922 = vmatpush1.bf16.msra.mxu0 %v1318
  %1923 = vmatprep.subr.bf16.mxu0 0
  %1924 = vmatpush1.bf16.msra.mxu0 %v1317
  %1925 = vmatprep.subr.bf16.mxu0 0
  %1926 = vmatpush1.bf16.msra.mxu0 %v1316
  %1927 = vmatprep.subr.bf16.mxu0 0
  %1928 = vmatpush1.bf16.msra.mxu0 %v1315
  %1929 = vmatprep.subr.bf16.mxu0 0
  %1930 = vmatpush1.bf16.msra.mxu0 %v1314
  %1931 = vmatprep.subr.bf16.mxu0 0
  %1932 = vmatpush1.bf16.msra.mxu0 %v1313
  %1933 = vmatprep.subr.bf16.mxu0 0
  %1934 = vmatpush2.bf16.msra.mxu0 0
  %1935 = vmatprep.subr.bf16.mxu0 0
  %1936 = vmatpush2.bf16.msra.mxu0 0
  %1937 = vmatprep.subr.bf16.mxu0 0
  %1938 = vmatpush2.bf16.msra.mxu0 0
  %1939 = vmatprep.subr.bf16.mxu0 0
  %1940 = vmatpush2.bf16.msra.mxu0 0
  %1941 = vmatprep.subr.bf16.mxu0 0
  %1942 = vmatpush2.bf16.msra.mxu0 0
  %1943 = vmatprep.subr.bf16.mxu0 0
  %1944 = vmatpush2.bf16.msra.mxu0 0
  %1945 = vmatprep.subr.bf16.mxu0 0
  %1946 = vmatpush2.bf16.msra.mxu0 0
  %1947 = vmatprep.subr.bf16.mxu0 0
  %1948 = vmatpush2.bf16.msra.mxu0 0
  %1949 = vmatprep.mubr.bf16.mxu0 0
  %1950 = vmatmul.mubr.bf16.gmra.mxu0 %v1471
  %v1951 = vpop.f32.mrf.mxu0
  %v1952 = vadd.f32 %v1903, %v1951
  %v1953 = vpop.f32.mrf.mxu0
  %v1954 = vpop.f32.mrf.mxu0
  %v1955 = vadd.f32 %v1906, %v1954
  %v1956 = vpop.f32.mrf.mxu0
  %1957 = vmatprep.mubr.bf16.mxu0 0
  %1958 = vmatmul.mubr.bf16.gmra.mxu0 %v1474
  %v1959 = vpop.f32.mrf.mxu0
  %v1960 = vadd.f32 %v1911, %v1959
  %v1961 = vpop.f32.mrf.mxu0
  %v1962 = vpop.f32.mrf.mxu0
  %v1963 = vadd.f32 %v1914, %v1962
  %v1964 = vpop.f32.mrf.mxu0
  %1965 = vdwg.mxu0
  %vm1966 = vcmp.ge.f32.partialorder %v1952, 0.0
  %vm1967 = vcmp.ge.f32.partialorder %v1955, 0.0
  %vm1968 = vcmp.ge.f32.partialorder %v1960, 0.0
  %vm1969 = vcmp.ge.f32.partialorder %v1963, 0.0
  %v1970 = vmul.f32 %v1952, 0.2
  %v1971 = vmul.f32 %v1955, 0.2
  %v1972 = vmul.f32 %v1960, 0.2
  %v1973 = vmul.f32 %v1963, 0.2
  %v1974 = vsel %vm1966, %v1952, %v1970
  %v1975 = vsel %vm1967, %v1955, %v1971
  %v1976 = vsel %vm1968, %v1960, %v1972
  %v1977 = vsel %vm1969, %v1963, %v1973
  %v1978 = vpack.c.bf16 %v1975, %v1974
  %v1979 = vpack.c.bf16 %v1977, %v1976
  %v1982 = vunpack.c.l.b16 %v1978
  %v1983 = vunpack.c.h.b16 %v1978
  %v1984 = vunpack.c.l.b16 %v1979
  %v1985 = vunpack.c.h.b16 %v1979
  %v1986 = vpack.c.b16 %v1982, %v1982
  %v1987 = vpack.c.b16 %v1983, %v1983
  %v1988 = vpack.c.b16 %v1984, %v1984
  %v1989 = vpack.c.b16 %v1985, %v1985
  %1994 = vst [vmem:[%s3] sm:$0xf] %v1986
  %1995 = vst [vmem:[%s3 + $0x4] sm:$0xf] %v1987
  %1996 = vst [vmem:[%s3 + $0x8] sm:$0xf] %v1988
  %1997 = vst [vmem:[%s3 + $0xc] sm:$0xf] %v1989
  // Predicated region
  $region14: #{video_inpainting_model_s.9} parent=0 // pred_check
    _
  $region15: #{video_inpainting_model_s.9} parent=0 // pred_check_branch
    %1999 = sbr.rel (0) target = $region17
  $region16: #{video_inpainting_model_s.9} parent=0 // pred_region
    _
  $region17: #{video_inpainting_model_s.9} parent=0 // pred_fallthru
    _
  // Predicated region
  $region18: #{video_inpainting_model_s.9} parent=0 // pred_check
    _
  $region19: #{video_inpainting_model_s.9} parent=0 // pred_check_branch
    %2001 = sbr.rel (0) target = $region21
  $region20: #{video_inpainting_model_s.9} parent=0 // pred_region
    _
  $region21: #{video_inpainting_model_s.9} parent=0 // pred_fallthru
    _

// kernel: video_inpainting_model_s.11
$region0: #{video_inpainting_model_s.11}
  #allocation0 [shape = 'u32[]', space=smem, size = 0x4, offset = 0x4, fixed_abs, tag = 'smem constant byte address 0x4 - core index']
  #allocation1 [shape = 'u32[144,128]{1,0:T(1,128)}', space=vmem, size = 0x12000, scoped, tag = 'internal scratch']
  %s0 = inlined_call_operand.vmem [shape: bf16[32,2400], index: 0, kind: input, shape index: {}]
  %s1 = inlined_call_operand.vmem [shape: bf16[2400,128], index: 1, kind: input, shape index: {}]
  %s2 = inlined_call_operand.vmem [shape: f32[32,1], index: 2, kind: input, shape index: {}]
  %s3 = inlined_call_operand.vmem [shape: f32[32,128], index: 3, kind: output, shape index: {}]
  %s4 = sld [smem:[#allocation0]]
  $region22: #{video_inpainting_model_s.11} parent=0
    _
  %s6 = ssub.s32 1, %s4
  %s7 = scalar_select 0, %s6, %s4
  // Predicated region
  $region2: #{video_inpainting_model_s.11} parent=0 // pred_check
    _
  $region3: #{video_inpainting_model_s.11} parent=0 // pred_check_branch
    %9 = sbr.rel (0) target = $region5
  $region4: #{video_inpainting_model_s.11} parent=0 // pred_region
    _
  $region5: #{video_inpainting_model_s.11} parent=0 // pred_fallthru
    _
  // Predicated region
  $region6: #{video_inpainting_model_s.11} parent=0 // pred_check
    _
  $region7: #{video_inpainting_model_s.11} parent=0 // pred_check_branch
    %11 = sbr.rel (0) target = $region9
  $region8: #{video_inpainting_model_s.11} parent=0 // pred_region
    _
  $region9: #{video_inpainting_model_s.11} parent=0 // pred_fallthru
    _
  // Predicated region
  $region10: #{video_inpainting_model_s.11} parent=0 // pred_check
    _
  $region11: #{video_inpainting_model_s.11} parent=0 // pred_check_branch
    %13 = sbr.rel (0) target = $region13
  $region12: #{video_inpainting_model_s.11} parent=0 // pred_region
    _
  $region13: #{video_inpainting_model_s.11} parent=0 // pred_fallthru
    _
  %v15 = vld [vmem:[%s0] sm:$0xff]
  %v16 = vld [vmem:[%s0 + $0x8] sm:$0xff]
  %v17 = vld [vmem:[%s0 + $0x10] sm:$0xff]
  %v18 = vld [vmem:[%s0 + $0x18] sm:$0xff]
  %v19 = vld [vmem:[%s0 + $0x20] sm:$0xff]
  %v20 = vld [vmem:[%s0 + $0x28] sm:$0xff]
  %v21 = vld [vmem:[%s0 + $0x30] sm:$0xff]
  %v22 = vld [vmem:[%s0 + $0x38] sm:$0xff]
  %v23 = vld [vmem:[%s0 + $0x40] sm:$0xff]
  %v24 = vld [vmem:[%s0 + $0x48] sm:$0xf]
  %v25 = vld [vmem:[%s0 + $0x4c] sm:$0xff]
  %v26 = vld [vmem:[%s0 + $0x54] sm:$0xff]
  %v27 = vld [vmem:[%s0 + $0x5c] sm:$0xff]
  %v28 = vld [vmem:[%s0 + $0x64] sm:$0xff]
  %v29 = vld [vmem:[%s0 + $0x6c] sm:$0xff]
  %v30 = vld [vmem:[%s0 + $0x74] sm:$0xff]
  %v31 = vld [vmem:[%s0 + $0x7c] sm:$0xff]
  %v32 = vld [vmem:[%s0 + $0x84] sm:$0xff]
  %v33 = vld [vmem:[%s0 + $0x8c] sm:$0xff]
  %v34 = vld [vmem:[%s0 + $0x94] sm:$0xf]
  %v35 = vld [vmem:[%s0 + $0x98] sm:$0xff]
  %v36 = vld [vmem:[%s0 + $0xa0] sm:$0xff]
  %v37 = vld [vmem:[%s0 + $0xa8] sm:$0xff]
  %v38 = vld [vmem:[%s0 + $0xb0] sm:$0xff]
  %v39 = vld [vmem:[%s0 + $0xb8] sm:$0xff]
  %v40 = vld [vmem:[%s0 + $0xc0] sm:$0xff]
  %v41 = vld [vmem:[%s0 + $0xc8] sm:$0xff]
  %v42 = vld [vmem:[%s0 + $0xd0] sm:$0xff]
  %v43 = vld [vmem:[%s0 + $0xd8] sm:$0xff]
  %v44 = vld [vmem:[%s0 + $0xe0] sm:$0xf]
  %v45 = vld [vmem:[%s0 + $0xe4] sm:$0xff]
  %v46 = vld [vmem:[%s0 + $0xec] sm:$0xff]
  %v47 = vld [vmem:[%s0 + $0xf4] sm:$0xff]
  %v48 = vld [vmem:[%s0 + $0xfc] sm:$0xff]
  %v49 = vld [vmem:[%s0 + $0x104] sm:$0xff]
  %v50 = vld [vmem:[%s0 + $0x10c] sm:$0xff]
  %v51 = vld [vmem:[%s0 + $0x114] sm:$0xff]
  %v52 = vld [vmem:[%s0 + $0x11c] sm:$0xff]
  %v53 = vld [vmem:[%s0 + $0x124] sm:$0xff]
  %v54 = vld [vmem:[%s0 + $0x12c] sm:$0xf]
  %v55 = vld [vmem:[%s1] sm:$0xf]
  %v56 = vld [vmem:[%s1 + $0x4] sm:$0xf]
  %v57 = vld [vmem:[%s1 + $0x8] sm:$0xf]
  %v58 = vld [vmem:[%s1 + $0xc] sm:$0xf]
  %v59 = vld [vmem:[%s1 + $0x10] sm:$0xf]
  %v60 = vld [vmem:[%s1 + $0x14] sm:$0xf]
  %v61 = vld [vmem:[%s1 + $0x18] sm:$0xf]
  %v62 = vld [vmem:[%s1 + $0x1c] sm:$0xf]
  %v63 = vld [vmem:[%s1 + $0x20] sm:$0xf]
  %v64 = vld [vmem:[%s1 + $0x24] sm:$0xf]
  %v65 = vld [vmem:[%s1 + $0x28] sm:$0xf]
  %v66 = vld [vmem:[%s1 + $0x2c] sm:$0xf]
  %v67 = vld [vmem:[%s1 + $0x30] sm:$0xf]
  %v68 = vld [vmem:[%s1 + $0x34] sm:$0xf]
  %v69 = vld [vmem:[%s1 + $0x38] sm:$0xf]
  %v70 = vld [vmem:[%s1 + $0x3c] sm:$0xf]
  %v71 = vld [vmem:[%s1 + $0x40] sm:$0xf]
  %v72 = vld [vmem:[%s1 + $0x44] sm:$0xf]
  %v73 = vld [vmem:[%s1 + $0x48] sm:$0xf]
  %v74 = vld [vmem:[%s1 + $0x4c] sm:$0xf]
  %v75 = vld [vmem:[%s1 + $0x50] sm:$0xf]
  %v76 = vld [vmem:[%s1 + $0x54] sm:$0xf]
  %v77 = vld [vmem:[%s1 + $0x58] sm:$0xf]
  %v78 = vld [vmem:[%s1 + $0x5c] sm:$0xf]
  %v79 = vld [vmem:[%s1 + $0x60] sm:$0xf]
  %v80 = vld [vmem:[%s1 + $0x64] sm:$0xf]
  %v81 = vld [vmem:[%s1 + $0x68] sm:$0xf]
  %v82 = vld [vmem:[%s1 + $0x6c] sm:$0xf]
  %v83 = vld [vmem:[%s1 + $0x70] sm:$0xf]
  %v84 = vld [vmem:[%s1 + $0x74] sm:$0xf]
  %v85 = vld [vmem:[%s1 + $0x78] sm:$0xf]
  %v86 = vld [vmem:[%s1 + $0x7c] sm:$0xf]
  %v87 = vld [vmem:[%s1 + $0x80] sm:$0xf]
  %v88 = vld [vmem:[%s1 + $0x84] sm:$0xf]
  %v89 = vld [vmem:[%s1 + $0x88] sm:$0xf]
  %v90 = vld [vmem:[%s1 + $0x8c] sm:$0xf]
  %v91 = vld [vmem:[%s1 + $0x90] sm:$0xf]
  %v92 = vld [vmem:[%s1 + $0x94] sm:$0xf]
  %v93 = vld [vmem:[%s1 + $0x98] sm:$0xf]
  %v94 = vld [vmem:[%s1 + $0x9c] sm:$0xf]
  %v95 = vld [vmem:[%s1 + $0xa0] sm:$0xf]
  %v96 = vld [vmem:[%s1 + $0xa4] sm:$0xf]
  %v97 = vld [vmem:[%s1 + $0xa8] sm:$0xf]
  %v98 = vld [vmem:[%s1 + $0xac] sm:$0xf]
  %v99 = vld [vmem:[%s1 + $0xb0] sm:$0xf]
  %v100 = vld [vmem:[%s1 + $0xb4] sm:$0xf]
  %v101 = vld [vmem:[%s1 + $0xb8] sm:$0xf]
  %v102 = vld [vmem:[%s1 + $0xbc] sm:$0xf]
  %v103 = vld [vmem:[%s1 + $0xc0] sm:$0xf]
  %v104 = vld [vmem:[%s1 + $0xc4] sm:$0xf]
  %v105 = vld [vmem:[%s1 + $0xc8] sm:$0xf]
  %v106 = vld [vmem:[%s1 + $0xcc] sm:$0xf]
  %v107 = vld [vmem:[%s1 + $0xd0] sm:$0xf]
  %v108 = vld [vmem:[%s1 + $0xd4] sm:$0xf]
  %v109 = vld [vmem:[%s1 + $0xd8] sm:$0xf]
  %v110 = vld [vmem:[%s1 + $0xdc] sm:$0xf]
  %v111 = vld [vmem:[%s1 + $0xe0] sm:$0xf]
  %v112 = vld [vmem:[%s1 + $0xe4] sm:$0xf]
  %v113 = vld [vmem:[%s1 + $0xe8] sm:$0xf]
  %v114 = vld [vmem:[%s1 + $0xec] sm:$0xf]
  %v115 = vld [vmem:[%s1 + $0xf0] sm:$0xf]
  %v116 = vld [vmem:[%s1 + $0xf4] sm:$0xf]
  %v117 = vld [vmem:[%s1 + $0xf8] sm:$0xf]
  %v118 = vld [vmem:[%s1 + $0xfc] sm:$0xf]
  %v119 = vld [vmem:[%s1 + $0x100] sm:$0xf]
  %v120 = vld [vmem:[%s1 + $0x104] sm:$0xf]
  %v121 = vld [vmem:[%s1 + $0x108] sm:$0xf]
  %v122 = vld [vmem:[%s1 + $0x10c] sm:$0xf]
  %v123 = vld [vmem:[%s1 + $0x110] sm:$0xf]
  %v124 = vld [vmem:[%s1 + $0x114] sm:$0xf]
  %v125 = vld [vmem:[%s1 + $0x118] sm:$0xf]
  %v126 = vld [vmem:[%s1 + $0x11c] sm:$0xf]
  %v127 = vld [vmem:[%s1 + $0x120] sm:$0xf]
  %v128 = vld [vmem:[%s1 + $0x124] sm:$0xf]
  %v129 = vld [vmem:[%s1 + $0x128] sm:$0xf]
  %v130 = vld [vmem:[%s1 + $0x12c] sm:$0xf]
  %v131 = vld [vmem:[%s1 + $0x130] sm:$0xf]
  %v132 = vld [vmem:[%s1 + $0x134] sm:$0xf]
  %v133 = vld [vmem:[%s1 + $0x138] sm:$0xf]
  %v134 = vld [vmem:[%s1 + $0x13c] sm:$0xf]
  %v135 = vld [vmem:[%s1 + $0x140] sm:$0xf]
  %v136 = vld [vmem:[%s1 + $0x144] sm:$0xf]
  %v137 = vld [vmem:[%s1 + $0x148] sm:$0xf]
  %v138 = vld [vmem:[%s1 + $0x14c] sm:$0xf]
  %v139 = vld [vmem:[%s1 + $0x150] sm:$0xf]
  %v140 = vld [vmem:[%s1 + $0x154] sm:$0xf]
  %v141 = vld [vmem:[%s1 + $0x158] sm:$0xf]
  %v142 = vld [vmem:[%s1 + $0x15c] sm:$0xf]
  %v143 = vld [vmem:[%s1 + $0x160] sm:$0xf]
  %v144 = vld [vmem:[%s1 + $0x164] sm:$0xf]
  %v145 = vld [vmem:[%s1 + $0x168] sm:$0xf]
  %v146 = vld [vmem:[%s1 + $0x16c] sm:$0xf]
  %v147 = vld [vmem:[%s1 + $0x170] sm:$0xf]
  %v148 = vld [vmem:[%s1 + $0x174] sm:$0xf]
  %v149 = vld [vmem:[%s1 + $0x178] sm:$0xf]
  %v150 = vld [vmem:[%s1 + $0x17c] sm:$0xf]
  %v151 = vld [vmem:[%s1 + $0x180] sm:$0xf]
  %v152 = vld [vmem:[%s1 + $0x184] sm:$0xf]
  %v153 = vld [vmem:[%s1 + $0x188] sm:$0xf]
  %v154 = vld [vmem:[%s1 + $0x18c] sm:$0xf]
  %v155 = vld [vmem:[%s1 + $0x190] sm:$0xf]
  %v156 = vld [vmem:[%s1 + $0x194] sm:$0xf]
  %v157 = vld [vmem:[%s1 + $0x198] sm:$0xf]
  %v158 = vld [vmem:[%s1 + $0x19c] sm:$0xf]
  %v159 = vld [vmem:[%s1 + $0x1a0] sm:$0xf]
  %v160 = vld [vmem:[%s1 + $0x1a4] sm:$0xf]
  %v161 = vld [vmem:[%s1 + $0x1a8] sm:$0xf]
  %v162 = vld [vmem:[%s1 + $0x1ac] sm:$0xf]
  %v163 = vld [vmem:[%s1 + $0x1b0] sm:$0xf]
  %v164 = vld [vmem:[%s1 + $0x1b4] sm:$0xf]
  %v165 = vld [vmem:[%s1 + $0x1b8] sm:$0xf]
  %v166 = vld [vmem:[%s1 + $0x1bc] sm:$0xf]
  %v167 = vld [vmem:[%s1 + $0x1c0] sm:$0xf]
  %v168 = vld [vmem:[%s1 + $0x1c4] sm:$0xf]
  %v169 = vld [vmem:[%s1 + $0x1c8] sm:$0xf]
  %v170 = vld [vmem:[%s1 + $0x1cc] sm:$0xf]
  %v171 = vld [vmem:[%s1 + $0x1d0] sm:$0xf]
  %v172 = vld [vmem:[%s1 + $0x1d4] sm:$0xf]
  %v173 = vld [vmem:[%s1 + $0x1d8] sm:$0xf]
  %v174 = vld [vmem:[%s1 + $0x1dc] sm:$0xf]
  %v175 = vld [vmem:[%s1 + $0x1e0] sm:$0xf]
  %v176 = vld [vmem:[%s1 + $0x1e4] sm:$0xf]
  %v177 = vld [vmem:[%s1 + $0x1e8] sm:$0xf]
  %v178 = vld [vmem:[%s1 + $0x1ec] sm:$0xf]
  %v179 = vld [vmem:[%s1 + $0x1f0] sm:$0xf]
  %v180 = vld [vmem:[%s1 + $0x1f4] sm:$0xf]
  %v181 = vld [vmem:[%s1 + $0x1f8] sm:$0xf]
  %v182 = vld [vmem:[%s1 + $0x1fc] sm:$0xf]
  %v183 = vld [vmem:[%s1 + $0x200] sm:$0xf]
  %v184 = vld [vmem:[%s1 + $0x204] sm:$0xf]
  %v185 = vld [vmem:[%s1 + $0x208] sm:$0xf]
  %v186 = vld [vmem:[%s1 + $0x20c] sm:$0xf]
  %v187 = vld [vmem:[%s1 + $0x210] sm:$0xf]
  %v188 = vld [vmem:[%s1 + $0x214] sm:$0xf]
  %v189 = vld [vmem:[%s1 + $0x218] sm:$0xf]
  %v190 = vld [vmem:[%s1 + $0x21c] sm:$0xf]
  %v191 = vld [vmem:[%s1 + $0x220] sm:$0xf]
  %v192 = vld [vmem:[%s1 + $0x224] sm:$0xf]
  %v193 = vld [vmem:[%s1 + $0x228] sm:$0xf]
  %v194 = vld [vmem:[%s1 + $0x22c] sm:$0xf]
  %v195 = vld [vmem:[%s1 + $0x230] sm:$0xf]
  %v196 = vld [vmem:[%s1 + $0x234] sm:$0xf]
  %v197 = vld [vmem:[%s1 + $0x238] sm:$0xf]
  %v198 = vld [vmem:[%s1 + $0x23c] sm:$0xf]
  %v199 = vld [vmem:[%s1 + $0x240] sm:$0xf]
  %v200 = vld [vmem:[%s1 + $0x244] sm:$0xf]
  %v201 = vld [vmem:[%s1 + $0x248] sm:$0xf]
  %v202 = vld [vmem:[%s1 + $0x24c] sm:$0xf]
  %v203 = vld [vmem:[%s1 + $0x250] sm:$0xf]
  %v204 = vld [vmem:[%s1 + $0x254] sm:$0xf]
  %v205 = vld [vmem:[%s1 + $0x258] sm:$0xf]
  %v206 = vld [vmem:[%s1 + $0x25c] sm:$0xf]
  %v207 = vld [vmem:[%s1 + $0x260] sm:$0xf]
  %v208 = vld [vmem:[%s1 + $0x264] sm:$0xf]
  %v209 = vld [vmem:[%s1 + $0x268] sm:$0xf]
  %v210 = vld [vmem:[%s1 + $0x26c] sm:$0xf]
  %v211 = vld [vmem:[%s1 + $0x270] sm:$0xf]
  %v212 = vld [vmem:[%s1 + $0x274] sm:$0xf]
  %v213 = vld [vmem:[%s1 + $0x278] sm:$0xf]
  %v214 = vld [vmem:[%s1 + $0x27c] sm:$0xf]
  %v215 = vld [vmem:[%s1 + $0x280] sm:$0xf]
  %v216 = vld [vmem:[%s1 + $0x284] sm:$0xf]
  %v217 = vld [vmem:[%s1 + $0x288] sm:$0xf]
  %v218 = vld [vmem:[%s1 + $0x28c] sm:$0xf]
  %v219 = vld [vmem:[%s1 + $0x290] sm:$0xf]
  %v220 = vld [vmem:[%s1 + $0x294] sm:$0xf]
  %v221 = vld [vmem:[%s1 + $0x298] sm:$0xf]
  %v222 = vld [vmem:[%s1 + $0x29c] sm:$0xf]
  %v223 = vld [vmem:[%s1 + $0x2a0] sm:$0xf]
  %v224 = vld [vmem:[%s1 + $0x2a4] sm:$0xf]
  %v225 = vld [vmem:[%s1 + $0x2a8] sm:$0xf]
  %v226 = vld [vmem:[%s1 + $0x2ac] sm:$0xf]
  %v227 = vld [vmem:[%s1 + $0x2b0] sm:$0xf]
  %v228 = vld [vmem:[%s1 + $0x2b4] sm:$0xf]
  %v229 = vld [vmem:[%s1 + $0x2b8] sm:$0xf]
  %v230 = vld [vmem:[%s1 + $0x2bc] sm:$0xf]
  %v231 = vld [vmem:[%s1 + $0x2c0] sm:$0xf]
  %v232 = vld [vmem:[%s1 + $0x2c4] sm:$0xf]
  %v233 = vld [vmem:[%s1 + $0x2c8] sm:$0xf]
  %v234 = vld [vmem:[%s1 + $0x2cc] sm:$0xf]
  %v235 = vld [vmem:[%s1 + $0x2d0] sm:$0xf]
  %v236 = vld [vmem:[%s1 + $0x2d4] sm:$0xf]
  %v237 = vld [vmem:[%s1 + $0x2d8] sm:$0xf]
  %v238 = vld [vmem:[%s1 + $0x2dc] sm:$0xf]
  %v239 = vld [vmem:[%s1 + $0x2e0] sm:$0xf]
  %v240 = vld [vmem:[%s1 + $0x2e4] sm:$0xf]
  %v241 = vld [vmem:[%s1 + $0x2e8] sm:$0xf]
  %v242 = vld [vmem:[%s1 + $0x2ec] sm:$0xf]
  %v243 = vld [vmem:[%s1 + $0x2f0] sm:$0xf]
  %v244 = vld [vmem:[%s1 + $0x2f4] sm:$0xf]
  %v245 = vld [vmem:[%s1 + $0x2f8] sm:$0xf]
  %v246 = vld [vmem:[%s1 + $0x2fc] sm:$0xf]
  %v247 = vld [vmem:[%s1 + $0x300] sm:$0xf]
  %v248 = vld [vmem:[%s1 + $0x304] sm:$0xf]
  %v249 = vld [vmem:[%s1 + $0x308] sm:$0xf]
  %v250 = vld [vmem:[%s1 + $0x30c] sm:$0xf]
  %v251 = vld [vmem:[%s1 + $0x310] sm:$0xf]
  %v252 = vld [vmem:[%s1 + $0x314] sm:$0xf]
  %v253 = vld [vmem:[%s1 + $0x318] sm:$0xf]
  %v254 = vld [vmem:[%s1 + $0x31c] sm:$0xf]
  %v255 = vld [vmem:[%s1 + $0x320] sm:$0xf]
  %v256 = vld [vmem:[%s1 + $0x324] sm:$0xf]
  %v257 = vld [vmem:[%s1 + $0x328] sm:$0xf]
  %v258 = vld [vmem:[%s1 + $0x32c] sm:$0xf]
  %v259 = vld [vmem:[%s1 + $0x330] sm:$0xf]
  %v260 = vld [vmem:[%s1 + $0x334] sm:$0xf]
  %v261 = vld [vmem:[%s1 + $0x338] sm:$0xf]
  %v262 = vld [vmem:[%s1 + $0x33c] sm:$0xf]
  %v263 = vld [vmem:[%s1 + $0x340] sm:$0xf]
  %v264 = vld [vmem:[%s1 + $0x344] sm:$0xf]
  %v265 = vld [vmem:[%s1 + $0x348] sm:$0xf]
  %v266 = vld [vmem:[%s1 + $0x34c] sm:$0xf]
  %v267 = vld [vmem:[%s1 + $0x350] sm:$0xf]
  %v268 = vld [vmem:[%s1 + $0x354] sm:$0xf]
  %v269 = vld [vmem:[%s1 + $0x358] sm:$0xf]
  %v270 = vld [vmem:[%s1 + $0x35c] sm:$0xf]
  %v271 = vld [vmem:[%s1 + $0x360] sm:$0xf]
  %v272 = vld [vmem:[%s1 + $0x364] sm:$0xf]
  %v273 = vld [vmem:[%s1 + $0x368] sm:$0xf]
  %v274 = vld [vmem:[%s1 + $0x36c] sm:$0xf]
  %v275 = vld [vmem:[%s1 + $0x370] sm:$0xf]
  %v276 = vld [vmem:[%s1 + $0x374] sm:$0xf]
  %v277 = vld [vmem:[%s1 + $0x378] sm:$0xf]
  %v278 = vld [vmem:[%s1 + $0x37c] sm:$0xf]
  %v279 = vld [vmem:[%s1 + $0x380] sm:$0xf]
  %v280 = vld [vmem:[%s1 + $0x384] sm:$0xf]
  %v281 = vld [vmem:[%s1 + $0x388] sm:$0xf]
  %v282 = vld [vmem:[%s1 + $0x38c] sm:$0xf]
  %v283 = vld [vmem:[%s1 + $0x390] sm:$0xf]
  %v284 = vld [vmem:[%s1 + $0x394] sm:$0xf]
  %v285 = vld [vmem:[%s1 + $0x398] sm:$0xf]
  %v286 = vld [vmem:[%s1 + $0x39c] sm:$0xf]
  %v287 = vld [vmem:[%s1 + $0x3a0] sm:$0xf]
  %v288 = vld [vmem:[%s1 + $0x3a4] sm:$0xf]
  %v289 = vld [vmem:[%s1 + $0x3a8] sm:$0xf]
  %v290 = vld [vmem:[%s1 + $0x3ac] sm:$0xf]
  %v291 = vld [vmem:[%s1 + $0x3b0] sm:$0xf]
  %v292 = vld [vmem:[%s1 + $0x3b4] sm:$0xf]
  %v293 = vld [vmem:[%s1 + $0x3b8] sm:$0xf]
  %v294 = vld [vmem:[%s1 + $0x3bc] sm:$0xf]
  %v295 = vld [vmem:[%s1 + $0x3c0] sm:$0xf]
  %v296 = vld [vmem:[%s1 + $0x3c4] sm:$0xf]
  %v297 = vld [vmem:[%s1 + $0x3c8] sm:$0xf]
  %v298 = vld [vmem:[%s1 + $0x3cc] sm:$0xf]
  %v299 = vld [vmem:[%s1 + $0x3d0] sm:$0xf]
  %v300 = vld [vmem:[%s1 + $0x3d4] sm:$0xf]
  %v301 = vld [vmem:[%s1 + $0x3d8] sm:$0xf]
  %v302 = vld [vmem:[%s1 + $0x3dc] sm:$0xf]
  %v303 = vld [vmem:[%s1 + $0x3e0] sm:$0xf]
  %v304 = vld [vmem:[%s1 + $0x3e4] sm:$0xf]
  %v305 = vld [vmem:[%s1 + $0x3e8] sm:$0xf]
  %v306 = vld [vmem:[%s1 + $0x3ec] sm:$0xf]
  %v307 = vld [vmem:[%s1 + $0x3f0] sm:$0xf]
  %v308 = vld [vmem:[%s1 + $0x3f4] sm:$0xf]
  %v309 = vld [vmem:[%s1 + $0x3f8] sm:$0xf]
  %v310 = vld [vmem:[%s1 + $0x3fc] sm:$0xf]
  %v311 = vld [vmem:[%s1 + $0x400] sm:$0xf]
  %v312 = vld [vmem:[%s1 + $0x404] sm:$0xf]
  %v313 = vld [vmem:[%s1 + $0x408] sm:$0xf]
  %v314 = vld [vmem:[%s1 + $0x40c] sm:$0xf]
  %v315 = vld [vmem:[%s1 + $0x410] sm:$0xf]
  %v316 = vld [vmem:[%s1 + $0x414] sm:$0xf]
  %v317 = vld [vmem:[%s1 + $0x418] sm:$0xf]
  %v318 = vld [vmem:[%s1 + $0x41c] sm:$0xf]
  %v319 = vld [vmem:[%s1 + $0x420] sm:$0xf]
  %v320 = vld [vmem:[%s1 + $0x424] sm:$0xf]
  %v321 = vld [vmem:[%s1 + $0x428] sm:$0xf]
  %v322 = vld [vmem:[%s1 + $0x42c] sm:$0xf]
  %v323 = vld [vmem:[%s1 + $0x430] sm:$0xf]
  %v324 = vld [vmem:[%s1 + $0x434] sm:$0xf]
  %v325 = vld [vmem:[%s1 + $0x438] sm:$0xf]
  %v326 = vld [vmem:[%s1 + $0x43c] sm:$0xf]
  %v327 = vld [vmem:[%s1 + $0x440] sm:$0xf]
  %v328 = vld [vmem:[%s1 + $0x444] sm:$0xf]
  %v329 = vld [vmem:[%s1 + $0x448] sm:$0xf]
  %v330 = vld [vmem:[%s1 + $0x44c] sm:$0xf]
  %v331 = vld [vmem:[%s1 + $0x450] sm:$0xf]
  %v332 = vld [vmem:[%s1 + $0x454] sm:$0xf]
  %v333 = vld [vmem:[%s1 + $0x458] sm:$0xf]
  %v334 = vld [vmem:[%s1 + $0x45c] sm:$0xf]
  %v335 = vld [vmem:[%s1 + $0x460] sm:$0xf]
  %v336 = vld [vmem:[%s1 + $0x464] sm:$0xf]
  %v337 = vld [vmem:[%s1 + $0x468] sm:$0xf]
  %v338 = vld [vmem:[%s1 + $0x46c] sm:$0xf]
  %v339 = vld [vmem:[%s1 + $0x470] sm:$0xf]
  %v340 = vld [vmem:[%s1 + $0x474] sm:$0xf]
  %v341 = vld [vmem:[%s1 + $0x478] sm:$0xf]
  %v342 = vld [vmem:[%s1 + $0x47c] sm:$0xf]
  %v343 = vld [vmem:[%s1 + $0x480] sm:$0xf]
  %v344 = vld [vmem:[%s1 + $0x484] sm:$0xf]
  %v345 = vld [vmem:[%s1 + $0x488] sm:$0xf]
  %v346 = vld [vmem:[%s1 + $0x48c] sm:$0xf]
  %v347 = vld [vmem:[%s1 + $0x490] sm:$0xf]
  %v348 = vld [vmem:[%s1 + $0x494] sm:$0xf]
  %v349 = vld [vmem:[%s1 + $0x498] sm:$0xf]
  %v350 = vld [vmem:[%s1 + $0x49c] sm:$0xf]
  %v351 = vld [vmem:[%s1 + $0x4a0] sm:$0xf]
  %v352 = vld [vmem:[%s1 + $0x4a4] sm:$0xf]
  %v353 = vld [vmem:[%s1 + $0x4a8] sm:$0xf]
  %v354 = vld [vmem:[%s1 + $0x4ac] sm:$0xf]
  %v355 = vld [vmem:[%s2] sm:$0xff]
  %v356 = vld [vmem:[%s2 + $0x8] sm:$0xff]
  %v357 = vld [vmem:[%s2 + $0x10] sm:$0xff]
  %v358 = vld [vmem:[%s2 + $0x18] sm:$0xff]
  %360 = vset.pattern.permute.xlu0 0
  %361 = vperm.xlu0 %360, %v355
  %v362 = vpop.permute.xlu0 %361
  %365 = vset.pattern.permute.xlu0 0
  %366 = vperm.xlu0 %365, %v356
  %v367 = vpop.permute.xlu0 %366
  %370 = vset.pattern.permute.xlu0 0
  %371 = vperm.xlu0 %370, %v357
  %v372 = vpop.permute.xlu0 %371
  %375 = vset.pattern.permute.xlu0 0
  %376 = vperm.xlu0 %375, %v358
  %v377 = vpop.permute.xlu0 %376
  %v419 = vunpack.c.l.b16 %v15
  %v420 = vunpack.c.h.b16 %v15
  %v421 = vunpack.c.l.b16 %v16
  %v422 = vunpack.c.h.b16 %v16
  %v423 = vunpack.c.l.b16 %v17
  %v424 = vunpack.c.h.b16 %v17
  %v425 = vunpack.c.l.b16 %v18
  %v426 = vunpack.c.h.b16 %v18
  %v427 = vunpack.c.l.b16 %v19
  %v428 = vunpack.c.h.b16 %v19
  %v429 = vunpack.c.l.b16 %v20
  %v430 = vunpack.c.h.b16 %v20
  %v431 = vunpack.c.l.b16 %v21
  %v432 = vunpack.c.h.b16 %v21
  %v433 = vunpack.c.l.b16 %v22
  %v434 = vunpack.c.h.b16 %v22
  %v435 = vunpack.c.l.b16 %v23
  %v436 = vunpack.c.h.b16 %v23
  %v437 = vunpack.c.l.b16 %v24
  %v438 = vunpack.c.l.b16 %v25
  %v439 = vunpack.c.h.b16 %v25
  %v440 = vunpack.c.l.b16 %v26
  %v441 = vunpack.c.h.b16 %v26
  %v442 = vunpack.c.l.b16 %v27
  %v443 = vunpack.c.h.b16 %v27
  %v444 = vunpack.c.l.b16 %v28
  %v445 = vunpack.c.h.b16 %v28
  %v446 = vunpack.c.l.b16 %v29
  %v447 = vunpack.c.h.b16 %v29
  %v448 = vunpack.c.l.b16 %v30
  %v449 = vunpack.c.h.b16 %v30
  %v450 = vunpack.c.l.b16 %v31
  %v451 = vunpack.c.h.b16 %v31
  %v452 = vunpack.c.l.b16 %v32
  %v453 = vunpack.c.h.b16 %v32
  %v454 = vunpack.c.l.b16 %v33
  %v455 = vunpack.c.h.b16 %v33
  %v456 = vunpack.c.l.b16 %v34
  %v457 = vunpack.c.l.b16 %v35
  %v458 = vunpack.c.h.b16 %v35
  %v459 = vunpack.c.l.b16 %v36
  %v460 = vunpack.c.h.b16 %v36
  %v461 = vunpack.c.l.b16 %v37
  %v462 = vunpack.c.h.b16 %v37
  %v463 = vunpack.c.l.b16 %v38
  %v464 = vunpack.c.h.b16 %v38
  %v465 = vunpack.c.l.b16 %v39
  %v466 = vunpack.c.h.b16 %v39
  %v467 = vunpack.c.l.b16 %v40
  %v468 = vunpack.c.h.b16 %v40
  %v469 = vunpack.c.l.b16 %v41
  %v470 = vunpack.c.h.b16 %v41
  %v471 = vunpack.c.l.b16 %v42
  %v472 = vunpack.c.h.b16 %v42
  %v473 = vunpack.c.l.b16 %v43
  %v474 = vunpack.c.h.b16 %v43
  %v475 = vunpack.c.l.b16 %v44
  %v476 = vunpack.c.l.b16 %v45
  %v477 = vunpack.c.h.b16 %v45
  %v478 = vunpack.c.l.b16 %v46
  %v479 = vunpack.c.h.b16 %v46
  %v480 = vunpack.c.l.b16 %v47
  %v481 = vunpack.c.h.b16 %v47
  %v482 = vunpack.c.l.b16 %v48
  %v483 = vunpack.c.h.b16 %v48
  %v484 = vunpack.c.l.b16 %v49
  %v485 = vunpack.c.h.b16 %v49
  %v486 = vunpack.c.l.b16 %v50
  %v487 = vunpack.c.h.b16 %v50
  %v488 = vunpack.c.l.b16 %v51
  %v489 = vunpack.c.h.b16 %v51
  %v490 = vunpack.c.l.b16 %v52
  %v491 = vunpack.c.h.b16 %v52
  %v492 = vunpack.c.l.b16 %v53
  %v493 = vunpack.c.h.b16 %v53
  %v494 = vunpack.c.l.b16 %v54
  %v495 = vpack.c.b16 %v438, %v419
  %v496 = vpack.c.b16 %v439, %v420
  %v497 = vpack.c.b16 %v440, %v421
  %v498 = vpack.c.b16 %v441, %v422
  %v499 = vpack.c.b16 %v442, %v423
  %v500 = vpack.c.b16 %v443, %v424
  %v501 = vpack.c.b16 %v444, %v425
  %v502 = vpack.c.b16 %v445, %v426
  %v503 = vpack.c.b16 %v446, %v427
  %v504 = vpack.c.b16 %v447, %v428
  %v505 = vpack.c.b16 %v448, %v429
  %v506 = vpack.c.b16 %v449, %v430
  %v507 = vpack.c.b16 %v450, %v431
  %v508 = vpack.c.b16 %v451, %v432
  %v509 = vpack.c.b16 %v452, %v433
  %v510 = vpack.c.b16 %v453, %v434
  %v511 = vpack.c.b16 %v454, %v435
  %v512 = vpack.c.b16 %v455, %v436
  %v513 = vpack.c.b16 %v456, %v437
  %v514 = vpack.c.b16 %v476, %v457
  %v515 = vpack.c.b16 %v477, %v458
  %v516 = vpack.c.b16 %v478, %v459
  %v517 = vpack.c.b16 %v479, %v460
  %v518 = vpack.c.b16 %v480, %v461
  %v519 = vpack.c.b16 %v481, %v462
  %v520 = vpack.c.b16 %v482, %v463
  %v521 = vpack.c.b16 %v483, %v464
  %v522 = vpack.c.b16 %v484, %v465
  %v523 = vpack.c.b16 %v485, %v466
  %v524 = vpack.c.b16 %v486, %v467
  %v525 = vpack.c.b16 %v487, %v468
  %v526 = vpack.c.b16 %v488, %v469
  %v527 = vpack.c.b16 %v489, %v470
  %v528 = vpack.c.b16 %v490, %v471
  %v529 = vpack.c.b16 %v491, %v472
  %v530 = vpack.c.b16 %v492, %v473
  %v531 = vpack.c.b16 %v493, %v474
  %v532 = vpack.c.b16 %v494, %v475
  %v869 = vunpack.c.l.b16 %v55
  %v870 = vunpack.c.l.b16 %v56
  %v871 = vunpack.c.l.b16 %v57
  %v872 = vunpack.c.l.b16 %v58
  %v873 = vunpack.c.l.b16 %v59
  %v874 = vunpack.c.l.b16 %v60
  %v875 = vunpack.c.l.b16 %v61
  %v876 = vunpack.c.l.b16 %v62
  %v877 = vunpack.c.l.b16 %v63
  %v878 = vunpack.c.l.b16 %v64
  %v879 = vunpack.c.l.b16 %v65
  %v880 = vunpack.c.l.b16 %v66
  %v881 = vunpack.c.l.b16 %v67
  %v882 = vunpack.c.l.b16 %v68
  %v883 = vunpack.c.l.b16 %v69
  %v884 = vunpack.c.l.b16 %v70
  %v885 = vunpack.c.l.b16 %v71
  %v886 = vunpack.c.l.b16 %v72
  %v887 = vunpack.c.l.b16 %v73
  %v888 = vunpack.c.l.b16 %v74
  %v889 = vunpack.c.l.b16 %v75
  %v890 = vunpack.c.l.b16 %v76
  %v891 = vunpack.c.l.b16 %v77
  %v892 = vunpack.c.l.b16 %v78
  %v893 = vunpack.c.l.b16 %v79
  %v894 = vunpack.c.l.b16 %v80
  %v895 = vunpack.c.l.b16 %v81
  %v896 = vunpack.c.l.b16 %v82
  %v897 = vunpack.c.l.b16 %v83
  %v898 = vunpack.c.l.b16 %v84
  %v899 = vunpack.c.l.b16 %v85
  %v900 = vunpack.c.l.b16 %v86
  %v901 = vunpack.c.l.b16 %v87
  %v902 = vunpack.c.l.b16 %v88
  %v903 = vunpack.c.l.b16 %v89
  %v904 = vunpack.c.l.b16 %v90
  %v905 = vunpack.c.l.b16 %v91
  %v906 = vunpack.c.l.b16 %v92
  %v907 = vunpack.c.l.b16 %v93
  %v908 = vunpack.c.l.b16 %v94
  %v909 = vunpack.c.l.b16 %v95
  %v910 = vunpack.c.l.b16 %v96
  %v911 = vunpack.c.l.b16 %v97
  %v912 = vunpack.c.l.b16 %v98
  %v913 = vunpack.c.l.b16 %v99
  %v914 = vunpack.c.l.b16 %v100
  %v915 = vunpack.c.l.b16 %v101
  %v916 = vunpack.c.l.b16 %v102
  %v917 = vunpack.c.l.b16 %v103
  %v918 = vunpack.c.l.b16 %v104
  %v919 = vunpack.c.l.b16 %v105
  %v920 = vunpack.c.l.b16 %v106
  %v921 = vunpack.c.l.b16 %v107
  %v922 = vunpack.c.l.b16 %v108
  %v923 = vunpack.c.l.b16 %v109
  %v924 = vunpack.c.l.b16 %v110
  %v925 = vunpack.c.l.b16 %v111
  %v926 = vunpack.c.l.b16 %v112
  %v927 = vunpack.c.l.b16 %v113
  %v928 = vunpack.c.l.b16 %v114
  %v929 = vunpack.c.l.b16 %v115
  %v930 = vunpack.c.l.b16 %v116
  %v931 = vunpack.c.l.b16 %v117
  %v932 = vunpack.c.l.b16 %v118
  %v933 = vunpack.c.l.b16 %v119
  %v934 = vunpack.c.l.b16 %v120
  %v935 = vunpack.c.l.b16 %v121
  %v936 = vunpack.c.l.b16 %v122
  %v937 = vunpack.c.l.b16 %v123
  %v938 = vunpack.c.l.b16 %v124
  %v939 = vunpack.c.l.b16 %v125
  %v940 = vunpack.c.l.b16 %v126
  %v941 = vunpack.c.l.b16 %v127
  %v942 = vunpack.c.l.b16 %v128
  %v943 = vunpack.c.l.b16 %v129
  %v944 = vunpack.c.l.b16 %v130
  %v945 = vunpack.c.l.b16 %v131
  %v946 = vunpack.c.l.b16 %v132
  %v947 = vunpack.c.l.b16 %v133
  %v948 = vunpack.c.l.b16 %v134
  %v949 = vunpack.c.l.b16 %v135
  %v950 = vunpack.c.l.b16 %v136
  %v951 = vunpack.c.l.b16 %v137
  %v952 = vunpack.c.l.b16 %v138
  %v953 = vunpack.c.l.b16 %v139
  %v954 = vunpack.c.l.b16 %v140
  %v955 = vunpack.c.l.b16 %v141
  %v956 = vunpack.c.l.b16 %v142
  %v957 = vunpack.c.l.b16 %v143
  %v958 = vunpack.c.l.b16 %v144
  %v959 = vunpack.c.l.b16 %v145
  %v960 = vunpack.c.l.b16 %v146
  %v961 = vunpack.c.l.b16 %v147
  %v962 = vunpack.c.l.b16 %v148
  %v963 = vunpack.c.l.b16 %v149
  %v964 = vunpack.c.l.b16 %v150
  %v965 = vunpack.c.l.b16 %v151
  %v966 = vunpack.c.l.b16 %v152
  %v967 = vunpack.c.l.b16 %v153
  %v968 = vunpack.c.l.b16 %v154
  %v969 = vunpack.c.l.b16 %v155
  %v970 = vunpack.c.l.b16 %v156
  %v971 = vunpack.c.l.b16 %v157
  %v972 = vunpack.c.l.b16 %v158
  %v973 = vunpack.c.l.b16 %v159
  %v974 = vunpack.c.l.b16 %v160
  %v975 = vunpack.c.l.b16 %v161
  %v976 = vunpack.c.l.b16 %v162
  %v977 = vunpack.c.l.b16 %v163
  %v978 = vunpack.c.l.b16 %v164
  %v979 = vunpack.c.l.b16 %v165
  %v980 = vunpack.c.l.b16 %v166
  %v981 = vunpack.c.l.b16 %v167
  %v982 = vunpack.c.l.b16 %v168
  %v983 = vunpack.c.l.b16 %v169
  %v984 = vunpack.c.l.b16 %v170
  %v985 = vunpack.c.l.b16 %v171
  %v986 = vunpack.c.l.b16 %v172
  %v987 = vunpack.c.l.b16 %v173
  %v988 = vunpack.c.l.b16 %v174
  %v989 = vunpack.c.l.b16 %v175
  %v990 = vunpack.c.l.b16 %v176
  %v991 = vunpack.c.l.b16 %v177
  %v992 = vunpack.c.l.b16 %v178
  %v993 = vunpack.c.l.b16 %v179
  %v994 = vunpack.c.l.b16 %v180
  %v995 = vunpack.c.l.b16 %v181
  %v996 = vunpack.c.l.b16 %v182
  %v997 = vunpack.c.l.b16 %v183
  %v998 = vunpack.c.l.b16 %v184
  %v999 = vunpack.c.l.b16 %v185
  %v1000 = vunpack.c.l.b16 %v186
  %v1001 = vunpack.c.l.b16 %v187
  %v1002 = vunpack.c.l.b16 %v188
  %v1003 = vunpack.c.l.b16 %v189
  %v1004 = vunpack.c.l.b16 %v190
  %v1005 = vunpack.c.l.b16 %v191
  %v1006 = vunpack.c.l.b16 %v192
  %v1007 = vunpack.c.l.b16 %v193
  %v1008 = vunpack.c.l.b16 %v194
  %v1009 = vunpack.c.l.b16 %v195
  %v1010 = vunpack.c.l.b16 %v196
  %v1011 = vunpack.c.l.b16 %v197
  %v1012 = vunpack.c.l.b16 %v198
  %v1013 = vunpack.c.l.b16 %v199
  %v1014 = vunpack.c.l.b16 %v200
  %v1015 = vunpack.c.l.b16 %v201
  %v1016 = vunpack.c.l.b16 %v202
  %v1017 = vunpack.c.l.b16 %v203
  %v1018 = vunpack.c.l.b16 %v204
  %v1019 = vunpack.c.l.b16 %v205
  %v1020 = vunpack.c.l.b16 %v206
  %v1021 = vunpack.c.l.b16 %v207
  %v1022 = vunpack.c.l.b16 %v208
  %v1023 = vunpack.c.l.b16 %v209
  %v1024 = vunpack.c.l.b16 %v210
  %v1025 = vunpack.c.l.b16 %v211
  %v1026 = vunpack.c.l.b16 %v212
  %v1027 = vunpack.c.l.b16 %v213
  %v1028 = vunpack.c.l.b16 %v214
  %v1029 = vunpack.c.l.b16 %v215
  %v1030 = vunpack.c.l.b16 %v216
  %v1031 = vunpack.c.l.b16 %v217
  %v1032 = vunpack.c.l.b16 %v218
  %v1033 = vunpack.c.l.b16 %v219
  %v1034 = vunpack.c.l.b16 %v220
  %v1035 = vunpack.c.l.b16 %v221
  %v1036 = vunpack.c.l.b16 %v222
  %v1037 = vunpack.c.l.b16 %v223
  %v1038 = vunpack.c.l.b16 %v224
  %v1039 = vunpack.c.l.b16 %v225
  %v1040 = vunpack.c.l.b16 %v226
  %v1041 = vunpack.c.l.b16 %v227
  %v1042 = vunpack.c.l.b16 %v228
  %v1043 = vunpack.c.l.b16 %v229
  %v1044 = vunpack.c.l.b16 %v230
  %v1045 = vunpack.c.l.b16 %v231
  %v1046 = vunpack.c.l.b16 %v232
  %v1047 = vunpack.c.l.b16 %v233
  %v1048 = vunpack.c.l.b16 %v234
  %v1049 = vunpack.c.l.b16 %v235
  %v1050 = vunpack.c.l.b16 %v236
  %v1051 = vunpack.c.l.b16 %v237
  %v1052 = vunpack.c.l.b16 %v238
  %v1053 = vunpack.c.l.b16 %v239
  %v1054 = vunpack.c.l.b16 %v240
  %v1055 = vunpack.c.l.b16 %v241
  %v1056 = vunpack.c.l.b16 %v242
  %v1057 = vunpack.c.l.b16 %v243
  %v1058 = vunpack.c.l.b16 %v244
  %v1059 = vunpack.c.l.b16 %v245
  %v1060 = vunpack.c.l.b16 %v246
  %v1061 = vunpack.c.l.b16 %v247
  %v1062 = vunpack.c.l.b16 %v248
  %v1063 = vunpack.c.l.b16 %v249
  %v1064 = vunpack.c.l.b16 %v250
  %v1065 = vunpack.c.l.b16 %v251
  %v1066 = vunpack.c.l.b16 %v252
  %v1067 = vunpack.c.l.b16 %v253
  %v1068 = vunpack.c.l.b16 %v254
  %v1069 = vunpack.c.l.b16 %v255
  %v1070 = vunpack.c.l.b16 %v256
  %v1071 = vunpack.c.l.b16 %v257
  %v1072 = vunpack.c.l.b16 %v258
  %v1073 = vunpack.c.l.b16 %v259
  %v1074 = vunpack.c.l.b16 %v260
  %v1075 = vunpack.c.l.b16 %v261
  %v1076 = vunpack.c.l.b16 %v262
  %v1077 = vunpack.c.l.b16 %v263
  %v1078 = vunpack.c.l.b16 %v264
  %v1079 = vunpack.c.l.b16 %v265
  %v1080 = vunpack.c.l.b16 %v266
  %v1081 = vunpack.c.l.b16 %v267
  %v1082 = vunpack.c.l.b16 %v268
  %v1083 = vunpack.c.l.b16 %v269
  %v1084 = vunpack.c.l.b16 %v270
  %v1085 = vunpack.c.l.b16 %v271
  %v1086 = vunpack.c.l.b16 %v272
  %v1087 = vunpack.c.l.b16 %v273
  %v1088 = vunpack.c.l.b16 %v274
  %v1089 = vunpack.c.l.b16 %v275
  %v1090 = vunpack.c.l.b16 %v276
  %v1091 = vunpack.c.l.b16 %v277
  %v1092 = vunpack.c.l.b16 %v278
  %v1093 = vunpack.c.l.b16 %v279
  %v1094 = vunpack.c.l.b16 %v280
  %v1095 = vunpack.c.l.b16 %v281
  %v1096 = vunpack.c.l.b16 %v282
  %v1097 = vunpack.c.l.b16 %v283
  %v1098 = vunpack.c.l.b16 %v284
  %v1099 = vunpack.c.l.b16 %v285
  %v1100 = vunpack.c.l.b16 %v286
  %v1101 = vunpack.c.l.b16 %v287
  %v1102 = vunpack.c.l.b16 %v288
  %v1103 = vunpack.c.l.b16 %v289
  %v1104 = vunpack.c.l.b16 %v290
  %v1105 = vunpack.c.l.b16 %v291
  %v1106 = vunpack.c.l.b16 %v292
  %v1107 = vunpack.c.l.b16 %v293
  %v1108 = vunpack.c.l.b16 %v294
  %v1109 = vunpack.c.l.b16 %v295
  %v1110 = vunpack.c.l.b16 %v296
  %v1111 = vunpack.c.l.b16 %v297
  %v1112 = vunpack.c.l.b16 %v298
  %v1113 = vunpack.c.l.b16 %v299
  %v1114 = vunpack.c.l.b16 %v300
  %v1115 = vunpack.c.l.b16 %v301
  %v1116 = vunpack.c.l.b16 %v302
  %v1117 = vunpack.c.l.b16 %v303
  %v1118 = vunpack.c.l.b16 %v304
  %v1119 = vunpack.c.l.b16 %v305
  %v1120 = vunpack.c.l.b16 %v306
  %v1121 = vunpack.c.l.b16 %v307
  %v1122 = vunpack.c.l.b16 %v308
  %v1123 = vunpack.c.l.b16 %v309
  %v1124 = vunpack.c.l.b16 %v310
  %v1125 = vunpack.c.l.b16 %v311
  %v1126 = vunpack.c.l.b16 %v312
  %v1127 = vunpack.c.l.b16 %v313
  %v1128 = vunpack.c.l.b16 %v314
  %v1129 = vunpack.c.l.b16 %v315
  %v1130 = vunpack.c.l.b16 %v316
  %v1131 = vunpack.c.l.b16 %v317
  %v1132 = vunpack.c.l.b16 %v318
  %v1133 = vunpack.c.l.b16 %v319
  %v1134 = vunpack.c.l.b16 %v320
  %v1135 = vunpack.c.l.b16 %v321
  %v1136 = vunpack.c.l.b16 %v322
  %v1137 = vunpack.c.l.b16 %v323
  %v1138 = vunpack.c.l.b16 %v324
  %v1139 = vunpack.c.l.b16 %v325
  %v1140 = vunpack.c.l.b16 %v326
  %v1141 = vunpack.c.l.b16 %v327
  %v1142 = vunpack.c.l.b16 %v328
  %v1143 = vunpack.c.l.b16 %v329
  %v1144 = vunpack.c.l.b16 %v330
  %v1145 = vunpack.c.l.b16 %v331
  %v1146 = vunpack.c.l.b16 %v332
  %v1147 = vunpack.c.l.b16 %v333
  %v1148 = vunpack.c.l.b16 %v334
  %v1149 = vunpack.c.l.b16 %v335
  %v1150 = vunpack.c.l.b16 %v336
  %v1151 = vunpack.c.l.b16 %v337
  %v1152 = vunpack.c.l.b16 %v338
  %v1153 = vunpack.c.l.b16 %v339
  %v1154 = vunpack.c.l.b16 %v340
  %v1155 = vunpack.c.l.b16 %v341
  %v1156 = vunpack.c.l.b16 %v342
  %v1157 = vunpack.c.l.b16 %v343
  %v1158 = vunpack.c.l.b16 %v344
  %v1159 = vunpack.c.l.b16 %v345
  %v1160 = vunpack.c.l.b16 %v346
  %v1161 = vunpack.c.l.b16 %v347
  %v1162 = vunpack.c.l.b16 %v348
  %v1163 = vunpack.c.l.b16 %v349
  %v1164 = vunpack.c.l.b16 %v350
  %v1165 = vunpack.c.l.b16 %v351
  %v1166 = vunpack.c.l.b16 %v352
  %v1167 = vunpack.c.l.b16 %v353
  %v1168 = vunpack.c.l.b16 %v354
  %v1169 = vpack.c.b16 %v870, %v869
  %v1170 = vpack.c.b16 %v872, %v871
  %v1171 = vpack.c.b16 %v874, %v873
  %v1172 = vpack.c.b16 %v876, %v875
  %v1173 = vpack.c.b16 %v878, %v877
  %v1174 = vpack.c.b16 %v880, %v879
  %v1175 = vpack.c.b16 %v882, %v881
  %v1176 = vpack.c.b16 %v884, %v883
  %v1177 = vpack.c.b16 %v886, %v885
  %v1178 = vpack.c.b16 %v888, %v887
  %v1179 = vpack.c.b16 %v890, %v889
  %v1180 = vpack.c.b16 %v892, %v891
  %v1181 = vpack.c.b16 %v894, %v893
  %v1182 = vpack.c.b16 %v896, %v895
  %v1183 = vpack.c.b16 %v898, %v897
  %v1184 = vpack.c.b16 %v900, %v899
  %v1185 = vpack.c.b16 %v902, %v901
  %v1186 = vpack.c.b16 %v904, %v903
  %v1187 = vpack.c.b16 %v906, %v905
  %v1188 = vpack.c.b16 %v908, %v907
  %v1189 = vpack.c.b16 %v910, %v909
  %v1190 = vpack.c.b16 %v912, %v911
  %v1191 = vpack.c.b16 %v914, %v913
  %v1192 = vpack.c.b16 %v916, %v915
  %v1193 = vpack.c.b16 %v918, %v917
  %v1194 = vpack.c.b16 %v920, %v919
  %v1195 = vpack.c.b16 %v922, %v921
  %v1196 = vpack.c.b16 %v924, %v923
  %v1197 = vpack.c.b16 %v926, %v925
  %v1198 = vpack.c.b16 %v928, %v927
  %v1199 = vpack.c.b16 %v930, %v929
  %v1200 = vpack.c.b16 %v932, %v931
  %v1201 = vpack.c.b16 %v934, %v933
  %v1202 = vpack.c.b16 %v936, %v935
  %v1203 = vpack.c.b16 %v938, %v937
  %v1204 = vpack.c.b16 %v940, %v939
  %v1205 = vpack.c.b16 %v942, %v941
  %v1206 = vpack.c.b16 %v944, %v943
  %v1207 = vpack.c.b16 %v946, %v945
  %v1208 = vpack.c.b16 %v948, %v947
  %v1209 = vpack.c.b16 %v950, %v949
  %v1210 = vpack.c.b16 %v952, %v951
  %v1211 = vpack.c.b16 %v954, %v953
  %v1212 = vpack.c.b16 %v956, %v955
  %v1213 = vpack.c.b16 %v958, %v957
  %v1214 = vpack.c.b16 %v960, %v959
  %v1215 = vpack.c.b16 %v962, %v961
  %v1216 = vpack.c.b16 %v964, %v963
  %v1217 = vpack.c.b16 %v966, %v965
  %v1218 = vpack.c.b16 %v968, %v967
  %v1219 = vpack.c.b16 %v970, %v969
  %v1220 = vpack.c.b16 %v972, %v971
  %v1221 = vpack.c.b16 %v974, %v973
  %v1222 = vpack.c.b16 %v976, %v975
  %v1223 = vpack.c.b16 %v978, %v977
  %v1224 = vpack.c.b16 %v980, %v979
  %v1225 = vpack.c.b16 %v982, %v981
  %v1226 = vpack.c.b16 %v984, %v983
  %v1227 = vpack.c.b16 %v986, %v985
  %v1228 = vpack.c.b16 %v988, %v987
  %v1229 = vpack.c.b16 %v990, %v989
  %v1230 = vpack.c.b16 %v992, %v991
  %v1231 = vpack.c.b16 %v994, %v993
  %v1232 = vpack.c.b16 %v996, %v995
  %v1233 = vpack.c.b16 %v998, %v997
  %v1234 = vpack.c.b16 %v1000, %v999
  %v1235 = vpack.c.b16 %v1002, %v1001
  %v1236 = vpack.c.b16 %v1004, %v1003
  %v1237 = vpack.c.b16 %v1006, %v1005
  %v1238 = vpack.c.b16 %v1008, %v1007
  %v1239 = vpack.c.b16 %v1010, %v1009
  %v1240 = vpack.c.b16 %v1012, %v1011
  %v1241 = vpack.c.b16 %v1014, %v1013
  %v1242 = vpack.c.b16 %v1016, %v1015
  %v1243 = vpack.c.b16 %v1018, %v1017
  %v1244 = vpack.c.b16 %v1020, %v1019
  %v1245 = vpack.c.b16 %v1022, %v1021
  %v1246 = vpack.c.b16 %v1024, %v1023
  %v1247 = vpack.c.b16 %v1026, %v1025
  %v1248 = vpack.c.b16 %v1028, %v1027
  %v1249 = vpack.c.b16 %v1030, %v1029
  %v1250 = vpack.c.b16 %v1032, %v1031
  %v1251 = vpack.c.b16 %v1034, %v1033
  %v1252 = vpack.c.b16 %v1036, %v1035
  %v1253 = vpack.c.b16 %v1038, %v1037
  %v1254 = vpack.c.b16 %v1040, %v1039
  %v1255 = vpack.c.b16 %v1042, %v1041
  %v1256 = vpack.c.b16 %v1044, %v1043
  %v1257 = vpack.c.b16 %v1046, %v1045
  %v1258 = vpack.c.b16 %v1048, %v1047
  %v1259 = vpack.c.b16 %v1050, %v1049
  %v1260 = vpack.c.b16 %v1052, %v1051
  %v1261 = vpack.c.b16 %v1054, %v1053
  %v1262 = vpack.c.b16 %v1056, %v1055
  %v1263 = vpack.c.b16 %v1058, %v1057
  %v1264 = vpack.c.b16 %v1060, %v1059
  %v1265 = vpack.c.b16 %v1062, %v1061
  %v1266 = vpack.c.b16 %v1064, %v1063
  %v1267 = vpack.c.b16 %v1066, %v1065
  %v1268 = vpack.c.b16 %v1068, %v1067
  %v1269 = vpack.c.b16 %v1070, %v1069
  %v1270 = vpack.c.b16 %v1072, %v1071
  %v1271 = vpack.c.b16 %v1074, %v1073
  %v1272 = vpack.c.b16 %v1076, %v1075
  %v1273 = vpack.c.b16 %v1078, %v1077
  %v1274 = vpack.c.b16 %v1080, %v1079
  %v1275 = vpack.c.b16 %v1082, %v1081
  %v1276 = vpack.c.b16 %v1084, %v1083
  %v1277 = vpack.c.b16 %v1086, %v1085
  %v1278 = vpack.c.b16 %v1088, %v1087
  %v1279 = vpack.c.b16 %v1090, %v1089
  %v1280 = vpack.c.b16 %v1092, %v1091
  %v1281 = vpack.c.b16 %v1094, %v1093
  %v1282 = vpack.c.b16 %v1096, %v1095
  %v1283 = vpack.c.b16 %v1098, %v1097
  %v1284 = vpack.c.b16 %v1100, %v1099
  %v1285 = vpack.c.b16 %v1102, %v1101
  %v1286 = vpack.c.b16 %v1104, %v1103
  %v1287 = vpack.c.b16 %v1106, %v1105
  %v1288 = vpack.c.b16 %v1108, %v1107
  %v1289 = vpack.c.b16 %v1110, %v1109
  %v1290 = vpack.c.b16 %v1112, %v1111
  %v1291 = vpack.c.b16 %v1114, %v1113
  %v1292 = vpack.c.b16 %v1116, %v1115
  %v1293 = vpack.c.b16 %v1118, %v1117
  %v1294 = vpack.c.b16 %v1120, %v1119
  %v1295 = vpack.c.b16 %v1122, %v1121
  %v1296 = vpack.c.b16 %v1124, %v1123
  %v1297 = vpack.c.b16 %v1126, %v1125
  %v1298 = vpack.c.b16 %v1128, %v1127
  %v1299 = vpack.c.b16 %v1130, %v1129
  %v1300 = vpack.c.b16 %v1132, %v1131
  %v1301 = vpack.c.b16 %v1134, %v1133
  %v1302 = vpack.c.b16 %v1136, %v1135
  %v1303 = vpack.c.b16 %v1138, %v1137
  %v1304 = vpack.c.b16 %v1140, %v1139
  %v1305 = vpack.c.b16 %v1142, %v1141
  %v1306 = vpack.c.b16 %v1144, %v1143
  %v1307 = vpack.c.b16 %v1146, %v1145
  %v1308 = vpack.c.b16 %v1148, %v1147
  %v1309 = vpack.c.b16 %v1150, %v1149
  %v1310 = vpack.c.b16 %v1152, %v1151
  %v1311 = vpack.c.b16 %v1154, %v1153
  %v1312 = vpack.c.b16 %v1156, %v1155
  %v1313 = vpack.c.b16 %v1158, %v1157
  %v1314 = vpack.c.b16 %v1160, %v1159
  %v1315 = vpack.c.b16 %v1162, %v1161
  %v1316 = vpack.c.b16 %v1164, %v1163
  %v1317 = vpack.c.b16 %v1166, %v1165
  %v1318 = vpack.c.b16 %v1168, %v1167
  %vm1469 = vcmask 785408
  %v1471 = vsel %vm1469, %v513, 0
  %v1474 = vsel %vm1469, %v532, 0
  %1476 = vmatprep.subr.bf16.mxu0 0
  %1477 = vmatpush1.bf16.msra.mxu0 %v1176
  %1478 = vmatprep.subr.bf16.mxu0 0
  %1479 = vmatpush1.bf16.msra.mxu0 %v1175
  %1480 = vmatprep.subr.bf16.mxu0 0
  %1481 = vmatpush1.bf16.msra.mxu0 %v1174
  %1482 = vmatprep.subr.bf16.mxu0 0
  %1483 = vmatpush1.bf16.msra.mxu0 %v1173
  %1484 = vmatprep.subr.bf16.mxu0 0
  %1485 = vmatpush1.bf16.msra.mxu0 %v1172
  %1486 = vmatprep.subr.bf16.mxu0 0
  %1487 = vmatpush1.bf16.msra.mxu0 %v1171
  %1488 = vmatprep.subr.bf16.mxu0 0
  %1489 = vmatpush1.bf16.msra.mxu0 %v1170
  %1490 = vmatprep.subr.bf16.mxu0 0
  %1491 = vmatpush1.bf16.msra.mxu0 %v1169
  %1492 = vmatprep.subr.bf16.mxu0 0
  %1493 = vmatpush2.bf16.msra.mxu0 %v1184
  %1494 = vmatprep.subr.bf16.mxu0 0
  %1495 = vmatpush2.bf16.msra.mxu0 %v1183
  %1496 = vmatprep.subr.bf16.mxu0 0
  %1497 = vmatpush2.bf16.msra.mxu0 %v1182
  %1498 = vmatprep.subr.bf16.mxu0 0
  %1499 = vmatpush2.bf16.msra.mxu0 %v1181
  %1500 = vmatprep.subr.bf16.mxu0 0
  %1501 = vmatpush2.bf16.msra.mxu0 %v1180
  %1502 = vmatprep.subr.bf16.mxu0 0
  %1503 = vmatpush2.bf16.msra.mxu0 %v1179
  %1504 = vmatprep.subr.bf16.mxu0 0
  %1505 = vmatpush2.bf16.msra.mxu0 %v1178
  %1506 = vmatprep.subr.bf16.mxu0 0
  %1507 = vmatpush2.bf16.msra.mxu0 %v1177
  %1508 = vmatprep.mubr.bf16.mxu0 %v496
  %1509 = vmatmul.mubr.bf16.gmra.mxu0 %v495
  %v1510 = vpop.f32.mrf.mxu0
  %v1511 = vadd.f32 %v362, %v1510
  %v1512 = vpop.f32.mrf.mxu0
  %v1513 = vpop.f32.mrf.mxu0
  %v1514 = vadd.f32 %v367, %v1513
  %v1515 = vpop.f32.mrf.mxu0
  %1516 = vmatprep.mubr.bf16.mxu0 %v515
  %1517 = vmatmul.mubr.bf16.gmra.mxu0 %v514
  %v1518 = vpop.f32.mrf.mxu0
  %v1519 = vadd.f32 %v372, %v1518
  %v1520 = vpop.f32.mrf.mxu0
  %v1521 = vpop.f32.mrf.mxu0
  %v1522 = vadd.f32 %v377, %v1521
  %v1523 = vpop.f32.mrf.mxu0
  %1524 = vdwg.mxu0
  %1525 = vmatprep.subr.bf16.mxu0 0
  %1526 = vmatpush1.bf16.msra.mxu0 %v1192
  %1527 = vmatprep.subr.bf16.mxu0 0
  %1528 = vmatpush1.bf16.msra.mxu0 %v1191
  %1529 = vmatprep.subr.bf16.mxu0 0
  %1530 = vmatpush1.bf16.msra.mxu0 %v1190
  %1531 = vmatprep.subr.bf16.mxu0 0
  %1532 = vmatpush1.bf16.msra.mxu0 %v1189
  %1533 = vmatprep.subr.bf16.mxu0 0
  %1534 = vmatpush1.bf16.msra.mxu0 %v1188
  %1535 = vmatprep.subr.bf16.mxu0 0
  %1536 = vmatpush1.bf16.msra.mxu0 %v1187
  %1537 = vmatprep.subr.bf16.mxu0 0
  %1538 = vmatpush1.bf16.msra.mxu0 %v1186
  %1539 = vmatprep.subr.bf16.mxu0 0
  %1540 = vmatpush1.bf16.msra.mxu0 %v1185
  %1541 = vmatprep.subr.bf16.mxu0 0
  %1542 = vmatpush2.bf16.msra.mxu0 %v1200
  %1543 = vmatprep.subr.bf16.mxu0 0
  %1544 = vmatpush2.bf16.msra.mxu0 %v1199
  %1545 = vmatprep.subr.bf16.mxu0 0
  %1546 = vmatpush2.bf16.msra.mxu0 %v1198
  %1547 = vmatprep.subr.bf16.mxu0 0
  %1548 = vmatpush2.bf16.msra.mxu0 %v1197
  %1549 = vmatprep.subr.bf16.mxu0 0
  %1550 = vmatpush2.bf16.msra.mxu0 %v1196
  %1551 = vmatprep.subr.bf16.mxu0 0
  %1552 = vmatpush2.bf16.msra.mxu0 %v1195
  %1553 = vmatprep.subr.bf16.mxu0 0
  %1554 = vmatpush2.bf16.msra.mxu0 %v1194
  %1555 = vmatprep.subr.bf16.mxu0 0
  %1556 = vmatpush2.bf16.msra.mxu0 %v1193
  %1557 = vmatprep.mubr.bf16.mxu0 %v498
  %1558 = vmatmul.mubr.bf16.gmra.mxu0 %v497
  %v1559 = vpop.f32.mrf.mxu0
  %v1560 = vadd.f32 %v1511, %v1559
  %v1561 = vpop.f32.mrf.mxu0
  %v1562 = vpop.f32.mrf.mxu0
  %v1563 = vadd.f32 %v1514, %v1562
  %v1564 = vpop.f32.mrf.mxu0
  %1565 = vmatprep.mubr.bf16.mxu0 %v517
  %1566 = vmatmul.mubr.bf16.gmra.mxu0 %v516
  %v1567 = vpop.f32.mrf.mxu0
  %v1568 = vadd.f32 %v1519, %v1567
  %v1569 = vpop.f32.mrf.mxu0
  %v1570 = vpop.f32.mrf.mxu0
  %v1571 = vadd.f32 %v1522, %v1570
  %v1572 = vpop.f32.mrf.mxu0
  %1573 = vdwg.mxu0
  %1574 = vmatprep.subr.bf16.mxu0 0
  %1575 = vmatpush1.bf16.msra.mxu0 %v1208
  %1576 = vmatprep.subr.bf16.mxu0 0
  %1577 = vmatpush1.bf16.msra.mxu0 %v1207
  %1578 = vmatprep.subr.bf16.mxu0 0
  %1579 = vmatpush1.bf16.msra.mxu0 %v1206
  %1580 = vmatprep.subr.bf16.mxu0 0
  %1581 = vmatpush1.bf16.msra.mxu0 %v1205
  %1582 = vmatprep.subr.bf16.mxu0 0
  %1583 = vmatpush1.bf16.msra.mxu0 %v1204
  %1584 = vmatprep.subr.bf16.mxu0 0
  %1585 = vmatpush1.bf16.msra.mxu0 %v1203
  %1586 = vmatprep.subr.bf16.mxu0 0
  %1587 = vmatpush1.bf16.msra.mxu0 %v1202
  %1588 = vmatprep.subr.bf16.mxu0 0
  %1589 = vmatpush1.bf16.msra.mxu0 %v1201
  %1590 = vmatprep.subr.bf16.mxu0 0
  %1591 = vmatpush2.bf16.msra.mxu0 %v1216
  %1592 = vmatprep.subr.bf16.mxu0 0
  %1593 = vmatpush2.bf16.msra.mxu0 %v1215
  %1594 = vmatprep.subr.bf16.mxu0 0
  %1595 = vmatpush2.bf16.msra.mxu0 %v1214
  %1596 = vmatprep.subr.bf16.mxu0 0
  %1597 = vmatpush2.bf16.msra.mxu0 %v1213
  %1598 = vmatprep.subr.bf16.mxu0 0
  %1599 = vmatpush2.bf16.msra.mxu0 %v1212
  %1600 = vmatprep.subr.bf16.mxu0 0
  %1601 = vmatpush2.bf16.msra.mxu0 %v1211
  %1602 = vmatprep.subr.bf16.mxu0 0
  %1603 = vmatpush2.bf16.msra.mxu0 %v1210
  %1604 = vmatprep.subr.bf16.mxu0 0
  %1605 = vmatpush2.bf16.msra.mxu0 %v1209
  %1606 = vmatprep.mubr.bf16.mxu0 %v500
  %1607 = vmatmul.mubr.bf16.gmra.mxu0 %v499
  %v1608 = vpop.f32.mrf.mxu0
  %v1609 = vadd.f32 %v1560, %v1608
  %v1610 = vpop.f32.mrf.mxu0
  %v1611 = vpop.f32.mrf.mxu0
  %v1612 = vadd.f32 %v1563, %v1611
  %v1613 = vpop.f32.mrf.mxu0
  %1614 = vmatprep.mubr.bf16.mxu0 %v519
  %1615 = vmatmul.mubr.bf16.gmra.mxu0 %v518
  %v1616 = vpop.f32.mrf.mxu0
  %v1617 = vadd.f32 %v1568, %v1616
  %v1618 = vpop.f32.mrf.mxu0
  %v1619 = vpop.f32.mrf.mxu0
  %v1620 = vadd.f32 %v1571, %v1619
  %v1621 = vpop.f32.mrf.mxu0
  %1622 = vdwg.mxu0
  %1623 = vmatprep.subr.bf16.mxu0 0
  %1624 = vmatpush1.bf16.msra.mxu0 %v1224
  %1625 = vmatprep.subr.bf16.mxu0 0
  %1626 = vmatpush1.bf16.msra.mxu0 %v1223
  %1627 = vmatprep.subr.bf16.mxu0 0
  %1628 = vmatpush1.bf16.msra.mxu0 %v1222
  %1629 = vmatprep.subr.bf16.mxu0 0
  %1630 = vmatpush1.bf16.msra.mxu0 %v1221
  %1631 = vmatprep.subr.bf16.mxu0 0
  %1632 = vmatpush1.bf16.msra.mxu0 %v1220
  %1633 = vmatprep.subr.bf16.mxu0 0
  %1634 = vmatpush1.bf16.msra.mxu0 %v1219
  %1635 = vmatprep.subr.bf16.mxu0 0
  %1636 = vmatpush1.bf16.msra.mxu0 %v1218
  %1637 = vmatprep.subr.bf16.mxu0 0
  %1638 = vmatpush1.bf16.msra.mxu0 %v1217
  %1639 = vmatprep.subr.bf16.mxu0 0
  %1640 = vmatpush2.bf16.msra.mxu0 %v1232
  %1641 = vmatprep.subr.bf16.mxu0 0
  %1642 = vmatpush2.bf16.msra.mxu0 %v1231
  %1643 = vmatprep.subr.bf16.mxu0 0
  %1644 = vmatpush2.bf16.msra.mxu0 %v1230
  %1645 = vmatprep.subr.bf16.mxu0 0
  %1646 = vmatpush2.bf16.msra.mxu0 %v1229
  %1647 = vmatprep.subr.bf16.mxu0 0
  %1648 = vmatpush2.bf16.msra.mxu0 %v1228
  %1649 = vmatprep.subr.bf16.mxu0 0
  %1650 = vmatpush2.bf16.msra.mxu0 %v1227
  %1651 = vmatprep.subr.bf16.mxu0 0
  %1652 = vmatpush2.bf16.msra.mxu0 %v1226
  %1653 = vmatprep.subr.bf16.mxu0 0
  %1654 = vmatpush2.bf16.msra.mxu0 %v1225
  %1655 = vmatprep.mubr.bf16.mxu0 %v502
  %1656 = vmatmul.mubr.bf16.gmra.mxu0 %v501
  %v1657 = vpop.f32.mrf.mxu0
  %v1658 = vadd.f32 %v1609, %v1657
  %v1659 = vpop.f32.mrf.mxu0
  %v1660 = vpop.f32.mrf.mxu0
  %v1661 = vadd.f32 %v1612, %v1660
  %v1662 = vpop.f32.mrf.mxu0
  %1663 = vmatprep.mubr.bf16.mxu0 %v521
  %1664 = vmatmul.mubr.bf16.gmra.mxu0 %v520
  %v1665 = vpop.f32.mrf.mxu0
  %v1666 = vadd.f32 %v1617, %v1665
  %v1667 = vpop.f32.mrf.mxu0
  %v1668 = vpop.f32.mrf.mxu0
  %v1669 = vadd.f32 %v1620, %v1668
  %v1670 = vpop.f32.mrf.mxu0
  %1671 = vdwg.mxu0
  %1672 = vmatprep.subr.bf16.mxu0 0
  %1673 = vmatpush1.bf16.msra.mxu0 %v1240
  %1674 = vmatprep.subr.bf16.mxu0 0
  %1675 = vmatpush1.bf16.msra.mxu0 %v1239
  %1676 = vmatprep.subr.bf16.mxu0 0
  %1677 = vmatpush1.bf16.msra.mxu0 %v1238
  %1678 = vmatprep.subr.bf16.mxu0 0
  %1679 = vmatpush1.bf16.msra.mxu0 %v1237
  %1680 = vmatprep.subr.bf16.mxu0 0
  %1681 = vmatpush1.bf16.msra.mxu0 %v1236
  %1682 = vmatprep.subr.bf16.mxu0 0
  %1683 = vmatpush1.bf16.msra.mxu0 %v1235
  %1684 = vmatprep.subr.bf16.mxu0 0
  %1685 = vmatpush1.bf16.msra.mxu0 %v1234
  %1686 = vmatprep.subr.bf16.mxu0 0
  %1687 = vmatpush1.bf16.msra.mxu0 %v1233
  %1688 = vmatprep.subr.bf16.mxu0 0
  %1689 = vmatpush2.bf16.msra.mxu0 %v1248
  %1690 = vmatprep.subr.bf16.mxu0 0
  %1691 = vmatpush2.bf16.msra.mxu0 %v1247
  %1692 = vmatprep.subr.bf16.mxu0 0
  %1693 = vmatpush2.bf16.msra.mxu0 %v1246
  %1694 = vmatprep.subr.bf16.mxu0 0
  %1695 = vmatpush2.bf16.msra.mxu0 %v1245
  %1696 = vmatprep.subr.bf16.mxu0 0
  %1697 = vmatpush2.bf16.msra.mxu0 %v1244
  %1698 = vmatprep.subr.bf16.mxu0 0
  %1699 = vmatpush2.bf16.msra.mxu0 %v1243
  %1700 = vmatprep.subr.bf16.mxu0 0
  %1701 = vmatpush2.bf16.msra.mxu0 %v1242
  %1702 = vmatprep.subr.bf16.mxu0 0
  %1703 = vmatpush2.bf16.msra.mxu0 %v1241
  %1704 = vmatprep.mubr.bf16.mxu0 %v504
  %1705 = vmatmul.mubr.bf16.gmra.mxu0 %v503
  %v1706 = vpop.f32.mrf.mxu0
  %v1707 = vadd.f32 %v1658, %v1706
  %v1708 = vpop.f32.mrf.mxu0
  %v1709 = vpop.f32.mrf.mxu0
  %v1710 = vadd.f32 %v1661, %v1709
  %v1711 = vpop.f32.mrf.mxu0
  %1712 = vmatprep.mubr.bf16.mxu0 %v523
  %1713 = vmatmul.mubr.bf16.gmra.mxu0 %v522
  %v1714 = vpop.f32.mrf.mxu0
  %v1715 = vadd.f32 %v1666, %v1714
  %v1716 = vpop.f32.mrf.mxu0
  %v1717 = vpop.f32.mrf.mxu0
  %v1718 = vadd.f32 %v1669, %v1717
  %v1719 = vpop.f32.mrf.mxu0
  %1720 = vdwg.mxu0
  %1721 = vmatprep.subr.bf16.mxu0 0
  %1722 = vmatpush1.bf16.msra.mxu0 %v1256
  %1723 = vmatprep.subr.bf16.mxu0 0
  %1724 = vmatpush1.bf16.msra.mxu0 %v1255
  %1725 = vmatprep.subr.bf16.mxu0 0
  %1726 = vmatpush1.bf16.msra.mxu0 %v1254
  %1727 = vmatprep.subr.bf16.mxu0 0
  %1728 = vmatpush1.bf16.msra.mxu0 %v1253
  %1729 = vmatprep.subr.bf16.mxu0 0
  %1730 = vmatpush1.bf16.msra.mxu0 %v1252
  %1731 = vmatprep.subr.bf16.mxu0 0
  %1732 = vmatpush1.bf16.msra.mxu0 %v1251
  %1733 = vmatprep.subr.bf16.mxu0 0
  %1734 = vmatpush1.bf16.msra.mxu0 %v1250
  %1735 = vmatprep.subr.bf16.mxu0 0
  %1736 = vmatpush1.bf16.msra.mxu0 %v1249
  %1737 = vmatprep.subr.bf16.mxu0 0
  %1738 = vmatpush2.bf16.msra.mxu0 %v1264
  %1739 = vmatprep.subr.bf16.mxu0 0
  %1740 = vmatpush2.bf16.msra.mxu0 %v1263
  %1741 = vmatprep.subr.bf16.mxu0 0
  %1742 = vmatpush2.bf16.msra.mxu0 %v1262
  %1743 = vmatprep.subr.bf16.mxu0 0
  %1744 = vmatpush2.bf16.msra.mxu0 %v1261
  %1745 = vmatprep.subr.bf16.mxu0 0
  %1746 = vmatpush2.bf16.msra.mxu0 %v1260
  %1747 = vmatprep.subr.bf16.mxu0 0
  %1748 = vmatpush2.bf16.msra.mxu0 %v1259
  %1749 = vmatprep.subr.bf16.mxu0 0
  %1750 = vmatpush2.bf16.msra.mxu0 %v1258
  %1751 = vmatprep.subr.bf16.mxu0 0
  %1752 = vmatpush2.bf16.msra.mxu0 %v1257
  %1753 = vmatprep.mubr.bf16.mxu0 %v506
  %1754 = vmatmul.mubr.bf16.gmra.mxu0 %v505
  %v1755 = vpop.f32.mrf.mxu0
  %v1756 = vadd.f32 %v1707, %v1755
  %v1757 = vpop.f32.mrf.mxu0
  %v1758 = vpop.f32.mrf.mxu0
  %v1759 = vadd.f32 %v1710, %v1758
  %v1760 = vpop.f32.mrf.mxu0
  %1761 = vmatprep.mubr.bf16.mxu0 %v525
  %1762 = vmatmul.mubr.bf16.gmra.mxu0 %v524
  %v1763 = vpop.f32.mrf.mxu0
  %v1764 = vadd.f32 %v1715, %v1763
  %v1765 = vpop.f32.mrf.mxu0
  %v1766 = vpop.f32.mrf.mxu0
  %v1767 = vadd.f32 %v1718, %v1766
  %v1768 = vpop.f32.mrf.mxu0
  %1769 = vdwg.mxu0
  %1770 = vmatprep.subr.bf16.mxu0 0
  %1771 = vmatpush1.bf16.msra.mxu0 %v1272
  %1772 = vmatprep.subr.bf16.mxu0 0
  %1773 = vmatpush1.bf16.msra.mxu0 %v1271
  %1774 = vmatprep.subr.bf16.mxu0 0
  %1775 = vmatpush1.bf16.msra.mxu0 %v1270
  %1776 = vmatprep.subr.bf16.mxu0 0
  %1777 = vmatpush1.bf16.msra.mxu0 %v1269
  %1778 = vmatprep.subr.bf16.mxu0 0
  %1779 = vmatpush1.bf16.msra.mxu0 %v1268
  %1780 = vmatprep.subr.bf16.mxu0 0
  %1781 = vmatpush1.bf16.msra.mxu0 %v1267
  %1782 = vmatprep.subr.bf16.mxu0 0
  %1783 = vmatpush1.bf16.msra.mxu0 %v1266
  %1784 = vmatprep.subr.bf16.mxu0 0
  %1785 = vmatpush1.bf16.msra.mxu0 %v1265
  %1786 = vmatprep.subr.bf16.mxu0 0
  %1787 = vmatpush2.bf16.msra.mxu0 %v1280
  %1788 = vmatprep.subr.bf16.mxu0 0
  %1789 = vmatpush2.bf16.msra.mxu0 %v1279
  %1790 = vmatprep.subr.bf16.mxu0 0
  %1791 = vmatpush2.bf16.msra.mxu0 %v1278
  %1792 = vmatprep.subr.bf16.mxu0 0
  %1793 = vmatpush2.bf16.msra.mxu0 %v1277
  %1794 = vmatprep.subr.bf16.mxu0 0
  %1795 = vmatpush2.bf16.msra.mxu0 %v1276
  %1796 = vmatprep.subr.bf16.mxu0 0
  %1797 = vmatpush2.bf16.msra.mxu0 %v1275
  %1798 = vmatprep.subr.bf16.mxu0 0
  %1799 = vmatpush2.bf16.msra.mxu0 %v1274
  %1800 = vmatprep.subr.bf16.mxu0 0
  %1801 = vmatpush2.bf16.msra.mxu0 %v1273
  %1802 = vmatprep.mubr.bf16.mxu0 %v508
  %1803 = vmatmul.mubr.bf16.gmra.mxu0 %v507
  %v1804 = vpop.f32.mrf.mxu0
  %v1805 = vadd.f32 %v1756, %v1804
  %v1806 = vpop.f32.mrf.mxu0
  %v1807 = vpop.f32.mrf.mxu0
  %v1808 = vadd.f32 %v1759, %v1807
  %v1809 = vpop.f32.mrf.mxu0
  %1810 = vmatprep.mubr.bf16.mxu0 %v527
  %1811 = vmatmul.mubr.bf16.gmra.mxu0 %v526
  %v1812 = vpop.f32.mrf.mxu0
  %v1813 = vadd.f32 %v1764, %v1812
  %v1814 = vpop.f32.mrf.mxu0
  %v1815 = vpop.f32.mrf.mxu0
  %v1816 = vadd.f32 %v1767, %v1815
  %v1817 = vpop.f32.mrf.mxu0
  %1818 = vdwg.mxu0
  %1819 = vmatprep.subr.bf16.mxu0 0
  %1820 = vmatpush1.bf16.msra.mxu0 %v1288
  %1821 = vmatprep.subr.bf16.mxu0 0
  %1822 = vmatpush1.bf16.msra.mxu0 %v1287
  %1823 = vmatprep.subr.bf16.mxu0 0
  %1824 = vmatpush1.bf16.msra.mxu0 %v1286
  %1825 = vmatprep.subr.bf16.mxu0 0
  %1826 = vmatpush1.bf16.msra.mxu0 %v1285
  %1827 = vmatprep.subr.bf16.mxu0 0
  %1828 = vmatpush1.bf16.msra.mxu0 %v1284
  %1829 = vmatprep.subr.bf16.mxu0 0
  %1830 = vmatpush1.bf16.msra.mxu0 %v1283
  %1831 = vmatprep.subr.bf16.mxu0 0
  %1832 = vmatpush1.bf16.msra.mxu0 %v1282
  %1833 = vmatprep.subr.bf16.mxu0 0
  %1834 = vmatpush1.bf16.msra.mxu0 %v1281
  %1835 = vmatprep.subr.bf16.mxu0 0
  %1836 = vmatpush2.bf16.msra.mxu0 %v1296
  %1837 = vmatprep.subr.bf16.mxu0 0
  %1838 = vmatpush2.bf16.msra.mxu0 %v1295
  %1839 = vmatprep.subr.bf16.mxu0 0
  %1840 = vmatpush2.bf16.msra.mxu0 %v1294
  %1841 = vmatprep.subr.bf16.mxu0 0
  %1842 = vmatpush2.bf16.msra.mxu0 %v1293
  %1843 = vmatprep.subr.bf16.mxu0 0
  %1844 = vmatpush2.bf16.msra.mxu0 %v1292
  %1845 = vmatprep.subr.bf16.mxu0 0
  %1846 = vmatpush2.bf16.msra.mxu0 %v1291
  %1847 = vmatprep.subr.bf16.mxu0 0
  %1848 = vmatpush2.bf16.msra.mxu0 %v1290
  %1849 = vmatprep.subr.bf16.mxu0 0
  %1850 = vmatpush2.bf16.msra.mxu0 %v1289
  %1851 = vmatprep.mubr.bf16.mxu0 %v510
  %1852 = vmatmul.mubr.bf16.gmra.mxu0 %v509
  %v1853 = vpop.f32.mrf.mxu0
  %v1854 = vadd.f32 %v1805, %v1853
  %v1855 = vpop.f32.mrf.mxu0
  %v1856 = vpop.f32.mrf.mxu0
  %v1857 = vadd.f32 %v1808, %v1856
  %v1858 = vpop.f32.mrf.mxu0
  %1859 = vmatprep.mubr.bf16.mxu0 %v529
  %1860 = vmatmul.mubr.bf16.gmra.mxu0 %v528
  %v1861 = vpop.f32.mrf.mxu0
  %v1862 = vadd.f32 %v1813, %v1861
  %v1863 = vpop.f32.mrf.mxu0
  %v1864 = vpop.f32.mrf.mxu0
  %v1865 = vadd.f32 %v1816, %v1864
  %v1866 = vpop.f32.mrf.mxu0
  %1867 = vdwg.mxu0
  %1868 = vmatprep.subr.bf16.mxu0 0
  %1869 = vmatpush1.bf16.msra.mxu0 %v1304
  %1870 = vmatprep.subr.bf16.mxu0 0
  %1871 = vmatpush1.bf16.msra.mxu0 %v1303
  %1872 = vmatprep.subr.bf16.mxu0 0
  %1873 = vmatpush1.bf16.msra.mxu0 %v1302
  %1874 = vmatprep.subr.bf16.mxu0 0
  %1875 = vmatpush1.bf16.msra.mxu0 %v1301
  %1876 = vmatprep.subr.bf16.mxu0 0
  %1877 = vmatpush1.bf16.msra.mxu0 %v1300
  %1878 = vmatprep.subr.bf16.mxu0 0
  %1879 = vmatpush1.bf16.msra.mxu0 %v1299
  %1880 = vmatprep.subr.bf16.mxu0 0
  %1881 = vmatpush1.bf16.msra.mxu0 %v1298
  %1882 = vmatprep.subr.bf16.mxu0 0
  %1883 = vmatpush1.bf16.msra.mxu0 %v1297
  %1884 = vmatprep.subr.bf16.mxu0 0
  %1885 = vmatpush2.bf16.msra.mxu0 %v1312
  %1886 = vmatprep.subr.bf16.mxu0 0
  %1887 = vmatpush2.bf16.msra.mxu0 %v1311
  %1888 = vmatprep.subr.bf16.mxu0 0
  %1889 = vmatpush2.bf16.msra.mxu0 %v1310
  %1890 = vmatprep.subr.bf16.mxu0 0
  %1891 = vmatpush2.bf16.msra.mxu0 %v1309
  %1892 = vmatprep.subr.bf16.mxu0 0
  %1893 = vmatpush2.bf16.msra.mxu0 %v1308
  %1894 = vmatprep.subr.bf16.mxu0 0
  %1895 = vmatpush2.bf16.msra.mxu0 %v1307
  %1896 = vmatprep.subr.bf16.mxu0 0
  %1897 = vmatpush2.bf16.msra.mxu0 %v1306
  %1898 = vmatprep.subr.bf16.mxu0 0
  %1899 = vmatpush2.bf16.msra.mxu0 %v1305
  %1900 = vmatprep.mubr.bf16.mxu0 %v512
  %1901 = vmatmul.mubr.bf16.gmra.mxu0 %v511
  %v1902 = vpop.f32.mrf.mxu0
  %v1903 = vadd.f32 %v1854, %v1902
  %v1904 = vpop.f32.mrf.mxu0
  %v1905 = vpop.f32.mrf.mxu0
  %v1906 = vadd.f32 %v1857, %v1905
  %v1907 = vpop.f32.mrf.mxu0
  %1908 = vmatprep.mubr.bf16.mxu0 %v531
  %1909 = vmatmul.mubr.bf16.gmra.mxu0 %v530
  %v1910 = vpop.f32.mrf.mxu0
  %v1911 = vadd.f32 %v1862, %v1910
  %v1912 = vpop.f32.mrf.mxu0
  %v1913 = vpop.f32.mrf.mxu0
  %v1914 = vadd.f32 %v1865, %v1913
  %v1915 = vpop.f32.mrf.mxu0
  %1916 = vdwg.mxu0
  %1917 = vmatprep.subr.bf16.mxu0 0
  %1918 = vmatpush1.bf16.msra.mxu0 0
  %1919 = vmatprep.subr.bf16.mxu0 0
  %1920 = vmatpush1.bf16.msra.mxu0 0
  %1921 = vmatprep.subr.bf16.mxu0 0
  %1922 = vmatpush1.bf16.msra.mxu0 %v1318
  %1923 = vmatprep.subr.bf16.mxu0 0
  %1924 = vmatpush1.bf16.msra.mxu0 %v1317
  %1925 = vmatprep.subr.bf16.mxu0 0
  %1926 = vmatpush1.bf16.msra.mxu0 %v1316
  %1927 = vmatprep.subr.bf16.mxu0 0
  %1928 = vmatpush1.bf16.msra.mxu0 %v1315
  %1929 = vmatprep.subr.bf16.mxu0 0
  %1930 = vmatpush1.bf16.msra.mxu0 %v1314
  %1931 = vmatprep.subr.bf16.mxu0 0
  %1932 = vmatpush1.bf16.msra.mxu0 %v1313
  %1933 = vmatprep.subr.bf16.mxu0 0
  %1934 = vmatpush2.bf16.msra.mxu0 0
  %1935 = vmatprep.subr.bf16.mxu0 0
  %1936 = vmatpush2.bf16.msra.mxu0 0
  %1937 = vmatprep.subr.bf16.mxu0 0
  %1938 = vmatpush2.bf16.msra.mxu0 0
  %1939 = vmatprep.subr.bf16.mxu0 0
  %1940 = vmatpush2.bf16.msra.mxu0 0
  %1941 = vmatprep.subr.bf16.mxu0 0
  %1942 = vmatpush2.bf16.msra.mxu0 0
  %1943 = vmatprep.subr.bf16.mxu0 0
  %1944 = vmatpush2.bf16.msra.mxu0 0
  %1945 = vmatprep.subr.bf16.mxu0 0
  %1946 = vmatpush2.bf16.msra.mxu0 0
  %1947 = vmatprep.subr.bf16.mxu0 0
  %1948 = vmatpush2.bf16.msra.mxu0 0
  %1949 = vmatprep.mubr.bf16.mxu0 0
  %1950 = vmatmul.mubr.bf16.gmra.mxu0 %v1471
  %v1951 = vpop.f32.mrf.mxu0
  %v1952 = vadd.f32 %v1903, %v1951
  %v1953 = vpop.f32.mrf.mxu0
  %v1954 = vpop.f32.mrf.mxu0
  %v1955 = vadd.f32 %v1906, %v1954
  %v1956 = vpop.f32.mrf.mxu0
  %1957 = vmatprep.mubr.bf16.mxu0 0
  %1958 = vmatmul.mubr.bf16.gmra.mxu0 %v1474
  %v1959 = vpop.f32.mrf.mxu0
  %v1960 = vadd.f32 %v1911, %v1959
  %v1961 = vpop.f32.mrf.mxu0
  %v1962 = vpop.f32.mrf.mxu0
  %v1963 = vadd.f32 %v1914, %v1962
  %v1964 = vpop.f32.mrf.mxu0
  %1965 = vdwg.mxu0
  %v1966 = vxor.u32 %v1952, 2147483648
  %v1967 = vxor.u32 %v1955, 2147483648
  %v1968 = vxor.u32 %v1960, 2147483648
  %v1969 = vxor.u32 %v1963, 2147483648
  %v1970 = vmul.f32 %v1966, 1.442695
  %v1971 = vpow.pop %v1970
  %v1972 = vmul.f32 %v1967, 1.442695
  %v1973 = vpow.pop %v1972
  %v1974 = vmul.f32 %v1968, 1.442695
  %v1975 = vpow.pop %v1974
  %v1976 = vmul.f32 %v1969, 1.442695
  %v1977 = vpow.pop %v1976
  %v1978 = vadd.f32 %v1971, 1.0
  %v1979 = vadd.f32 %v1973, 1.0
  %v1980 = vadd.f32 %v1975, 1.0
  %v1981 = vadd.f32 %v1977, 1.0
  %v1982 = vrcp.pop %v1978
  %v1983 = vmul.f32 1.0, %v1982
  %v1984 = vrcp.pop %v1979
  %v1985 = vmul.f32 1.0, %v1984
  %v1986 = vrcp.pop %v1980
  %v1987 = vmul.f32 1.0, %v1986
  %v1988 = vrcp.pop %v1981
  %v1989 = vmul.f32 1.0, %v1988
  %1990 = vst [vmem:[%s3] sm:$0xff] %v1983
  %1991 = vst [vmem:[%s3 + $0x8] sm:$0xff] %v1985
  %1992 = vst [vmem:[%s3 + $0x10] sm:$0xff] %v1987
  %1993 = vst [vmem:[%s3 + $0x18] sm:$0xff] %v1989
  // Predicated region
  $region14: #{video_inpainting_model_s.11} parent=0 // pred_check
    _
  $region15: #{video_inpainting_model_s.11} parent=0 // pred_check_branch
    %1995 = sbr.rel (0) target = $region17
  $region16: #{video_inpainting_model_s.11} parent=0 // pred_region
    _
  $region17: #{video_inpainting_model_s.11} parent=0 // pred_fallthru
    _
  // Predicated region
  $region18: #{video_inpainting_model_s.11} parent=0 // pred_check
    _
  $region19: #{video_inpainting_model_s.11} parent=0 // pred_check_branch
    %1997 = sbr.rel (0) target = $region21
  $region20: #{video_inpainting_model_s.11} parent=0 // pred_region
    _
  $region21: #{video_inpainting_model_s.11} parent=0 // pred_fallthru
    _

</llo_original>
